<compile_context>
chip_gen: v6e
topology: v6e:2x2x1
jax: 0.10.0
libtpu: 0.0.40
codegen_flags: <defaults>
</compile_context>

<pallas_src>
import functools
import math

import jax
import jax.numpy as jnp
from jax.experimental import pallas as pl
from jax.experimental.pallas import tpu as pltpu


CONFIG = dict(vocab=100, max_pos=16, hidden=32, heads=2, intermediate=64,
              layers=2)


# ------------------------------ fused kernel -------------------------------

def _encoder_kernel(emb_ref, mask_ref,
                    eg_ref, eb_ref,
                    wq_ref, bq_ref, wk_ref, bk_ref, wv_ref, bv_ref,
                    wo_ref, bo_ref,
                    ln1g_ref, ln1b_ref,
                    w1_ref, b1_ref, w2_ref, b2_ref,
                    ln2g_ref, ln2b_ref,
                    out_ref, ctx_ref,
                    *, num_layers, hidden, heads, eps):
    """One grid step == one batch element (S tokens). Everything stays in VMEM."""
    dh = hidden // heads
    scale = 1.0 / math.sqrt(dh)
    inv_sqrt2 = 1.0 / math.sqrt(2.0)

    def layernorm(x, g, b):
        mean = jnp.mean(x, axis=-1, keepdims=True)
        xc = x - mean
        var = jnp.mean(xc * xc, axis=-1, keepdims=True)
        return xc * jax.lax.rsqrt(var + eps) * g + b

    # Per-batch key mask (1, S); additive bias built in-kernel (VPU select).
    mask_row = mask_ref[...]                                      # (1, S)
    bias = jnp.where(mask_row > 0.5, 0.0, -1e9)                   # (1, S)

    # Embedding LayerNorm.
    h = layernorm(emb_ref[...], eg_ref[...], eb_ref[...])         # (S, H)

    for li in range(num_layers):                                  # static unroll (L small)
        resid = h

        # ---- multi-head self-attention (head-major weights, no lane slices) ----
        for hd in range(heads):                                   # static unroll
            q = jnp.dot(h, wq_ref[li, hd],
                        preferred_element_type=jnp.float32) + bq_ref[li, hd]   # (S, dh)
            k = jnp.dot(h, wk_ref[li, hd],
                        preferred_element_type=jnp.float32) + bk_ref[li, hd]   # (S, dh)
            v = jnp.dot(h, wv_ref[li, hd],
                        preferred_element_type=jnp.float32) + bv_ref[li, hd]   # (S, dh)

            # q @ k^T without materializing a transpose.
            s = jax.lax.dot_general(q, k, (((1,), (1,)), ((), ())),
                                    preferred_element_type=jnp.float32)        # (S, S)
            s = s * scale + bias                                  # key mask broadcast
            s = s - jnp.max(s, axis=-1, keepdims=True)
            p = jnp.exp(s)
            p = p * pl.reciprocal(jnp.sum(p, axis=-1, keepdims=True),
                                  approx=True)                    # EUP reciprocal
            ho = jnp.dot(p, v, preferred_element_type=jnp.float32)             # (S, dh)

            # Write head output at its static lane offset (VMEM scratch).
            ctx_ref[:, hd * dh:(hd + 1) * dh] = ho

        # Single full-width output projection.
        attn = jnp.dot(ctx_ref[...], wo_ref[li],
                       preferred_element_type=jnp.float32) + bo_ref[li]        # (S, H)
        h = layernorm(attn + resid, ln1g_ref[li], ln1b_ref[li])

        # ---- FFN with fused erf-GELU epilogue ----
        inter = jnp.dot(h, w1_ref[li],
                        preferred_element_type=jnp.float32) + b1_ref[li]       # (S, I)
        inter = 0.5 * inter * (1.0 + jax.lax.erf(inter * inv_sqrt2))
        ffn = jnp.dot(inter, w2_ref[li],
                      preferred_element_type=jnp.float32) + b2_ref[li]         # (S, H)
        h = layernorm(ffn + h, ln2g_ref[li], ln2b_ref[li])

    # ---- masked mean pooling (one MXU matmul) + L2 normalize ----
    summed = jnp.dot(mask_row, h, preferred_element_type=jnp.float32)          # (1, H)
    denom = jnp.maximum(jnp.sum(mask_row, axis=-1, keepdims=True), 1e-9)
    pooled = summed * pl.reciprocal(denom, approx=True)           # scale cancels in L2 norm
    norm = jnp.maximum(jnp.sqrt(jnp.sum(pooled * pooled, axis=-1, keepdims=True)),
                       1e-12)
    out_ref[...] = pooled * pl.reciprocal(norm, approx=False)     # exact for final output
    # TODO(synk): 'cls' pooling branch (last_hidden[:, 0]) not exercised here.


# --------------------------- parameter creation ----------------------------

def init_params(key, cfg):
    H, I, L = cfg["hidden"], cfg["intermediate"], cfg["layers"]
    nh = cfg["heads"]
    assert H % nh == 0
    dh = H // nh
    std = 0.02

    def normal(k, shape):
        return std * jax.random.normal(k, shape, dtype=jnp.float32)

    keys = jax.random.split(key, 10)
    return {
        "word_emb": normal(keys[0], (cfg["vocab"], H)),
        "pos_emb": normal(keys[1], (cfg["max_pos"], H)),
        "type_emb": normal(keys[2], (2, H)),
        "emb_ln_g": jnp.ones((1, H), jnp.float32),
        "emb_ln_b": jnp.zeros((1, H), jnp.float32),
        # Head-major Q/K/V weights: (L, heads, H, dh) — each head's projection
        # is its own matmul inside the kernel (no lane slicing).
        "wq": normal(keys[3], (L, nh, H, dh)),
        "bq": jnp.zeros((L, nh, 1, dh), jnp.float32),
        "wk": normal(keys[4], (L, nh, H, dh)),
        "bk": jnp.zeros((L, nh, 1, dh), jnp.float32),
        "wv": normal(keys[5], (L, nh, H, dh)),
        "bv": jnp.zeros((L, nh, 1, dh), jnp.float32),
        "wo": normal(keys[6], (L, H, H)),
        "bo": jnp.zeros((L, 1, H), jnp.float32),
        "ln1_g": jnp.ones((L, 1, H), jnp.float32),
        "ln1_b": jnp.zeros((L, 1, H), jnp.float32),
        "w1": normal(keys[7], (L, H, I)),
        "b1": jnp.zeros((L, 1, I), jnp.float32),
        "w2": normal(keys[8], (L, I, H)),
        "b2": jnp.zeros((L, 1, H), jnp.float32),
        "ln2_g": jnp.ones((L, 1, H), jnp.float32),
        "ln2_b": jnp.zeros((L, 1, H), jnp.float32),
    }


# ------------------------------ forward pass -------------------------------

def dense_retriever_bert_forward(params, input_ids, attention_mask, cfg):
    B, S = input_ids.shape
    H, nh, L = cfg["hidden"], cfg["heads"], cfg["layers"]

    # Embedding lookups (data-dependent gathers) are glue -> plain JAX.
    we = params["word_emb"][input_ids]                   # (B, S, H)
    pe = params["pos_emb"][jnp.arange(S)][None]          # (1, S, H)
    te = params["type_emb"][0][None, None]               # (1, 1, H) token_type=0
    emb = (we + pe + te).astype(jnp.float32)             # (B, S, H)

    # Per-batch key mask, DMA'd as a tiny (1, S) row per grid step.
    mask = attention_mask.astype(jnp.float32).reshape(B, 1, S)

    weight_operands = [
        params["emb_ln_g"], params["emb_ln_b"],
        params["wq"], params["bq"], params["wk"], params["bk"],
        params["wv"], params["bv"], params["wo"], params["bo"],
        params["ln1_g"], params["ln1_b"],
        params["w1"], params["b1"], params["w2"], params["b2"],
        params["ln2_g"], params["ln2_b"],
    ]
    weight_specs = [
        pl.BlockSpec(w.shape, lambda b, n=w.ndim: (0,) * n) for w in weight_operands
    ]
    in_specs = [
        pl.BlockSpec((None, S, H), lambda b: (b, 0, 0)),   # per-batch embeddings
        pl.BlockSpec((None, 1, S), lambda b: (b, 0, 0)),   # per-batch mask row
    ] + weight_specs

    kernel = functools.partial(_encoder_kernel, num_layers=L, hidden=H,
                               heads=nh, eps=1e-12)

    out = pl.pallas_call(
        kernel,
        grid=(B,),
        out_shape=jax.ShapeDtypeStruct((B, 1, H), jnp.float32),
        in_specs=in_specs,
        out_specs=pl.BlockSpec((None, 1, H), lambda b: (b, 0, 0)),
        scratch_shapes=[pltpu.VMEM((S, H), jnp.float32)],   # head-concat buffer
        compiler_params=pltpu.CompilerParams(
            dimension_semantics=("parallel",)),              # shards batches over TCs (v7x)
    )(emb, mask, *weight_operands)
    return out.reshape(B, H)


# ---------------------------------- main -----------------------------------

if __name__ == "__main__":
    cfg = CONFIG
    B, S = 2, 8

    key = jax.random.PRNGKey(0)
    k_param, k_ids = jax.random.split(key)
    params = init_params(k_param, cfg)

    input_ids = jax.random.randint(k_ids, (B, S), 0, cfg["vocab"], dtype=jnp.int32)
    attention_mask = jnp.array(
        [[1, 1, 1, 1, 1, 1, 1, 1],
         [1, 1, 1, 1, 1, 0, 0, 0]], dtype=jnp.int32)

    fwd = jax.jit(functools.partial(dense_retriever_bert_forward, cfg=cfg))
    embeddings = fwd(params, input_ids, attention_mask)
    embeddings = jax.block_until_ready(embeddings)

    assert embeddings.shape == (B, cfg["hidden"])
    assert embeddings.dtype == jnp.float32
    assert bool(jnp.all(jnp.isfinite(embeddings)))
    print("KERNEL_OK")
</pallas_src>

<mosaic_0001>
module attributes {stable_mosaic.version = 11 : i64} {
  func.func @_encoder_kernel(%arg0: i32, %arg1: memref<1x8x32xf32, #tpu.memory_space<vmem>>, %arg2: memref<1x1x8xf32, #tpu.memory_space<vmem>>, %arg3: memref<1x32xf32, #tpu.memory_space<vmem>>, %arg4: memref<1x32xf32, #tpu.memory_space<vmem>>, %arg5: memref<2x2x32x16xf32, #tpu.memory_space<vmem>>, %arg6: memref<2x2x1x16xf32, #tpu.memory_space<vmem>>, %arg7: memref<2x2x32x16xf32, #tpu.memory_space<vmem>>, %arg8: memref<2x2x1x16xf32, #tpu.memory_space<vmem>>, %arg9: memref<2x2x32x16xf32, #tpu.memory_space<vmem>>, %arg10: memref<2x2x1x16xf32, #tpu.memory_space<vmem>>, %arg11: memref<2x32x32xf32, #tpu.memory_space<vmem>>, %arg12: memref<2x1x32xf32, #tpu.memory_space<vmem>>, %arg13: memref<2x1x32xf32, #tpu.memory_space<vmem>>, %arg14: memref<2x1x32xf32, #tpu.memory_space<vmem>>, %arg15: memref<2x32x64xf32, #tpu.memory_space<vmem>>, %arg16: memref<2x1x64xf32, #tpu.memory_space<vmem>>, %arg17: memref<2x64x32xf32, #tpu.memory_space<vmem>>, %arg18: memref<2x1x32xf32, #tpu.memory_space<vmem>>, %arg19: memref<2x1x32xf32, #tpu.memory_space<vmem>>, %arg20: memref<2x1x32xf32, #tpu.memory_space<vmem>>, %arg21: memref<1x1x32xf32, #tpu.memory_space<vmem>>, %arg22: memref<8x32xf32, #tpu.memory_space<vmem>>) attributes {dimension_semantics = [#tpu.dimension_semantics<parallel>], iteration_bounds = array<i64: 2>, scalar_prefetch = 0 : i64, scratch_operands = 1 : i64, tpu.core_type = #tpu.core_type<tc>, window_params = [{transform_indices = @transform_0, window_bounds = array<i64: 1, 8, 32>}, {transform_indices = @transform_1, window_bounds = array<i64: 1, 1, 8>}, {pipeline_mode = #tpu.pipeline_mode<synchronous>, transform_indices = @transform_2, window_bounds = array<i64: 1, 32>}, {pipeline_mode = #tpu.pipeline_mode<synchronous>, transform_indices = @transform_3, window_bounds = array<i64: 1, 32>}, {pipeline_mode = #tpu.pipeline_mode<synchronous>, transform_indices = @transform_4, window_bounds = array<i64: 2, 2, 32, 16>}, {pipeline_mode = #tpu.pipeline_mode<synchronous>, transform_indices = @transform_5, window_bounds = array<i64: 2, 2, 1, 16>}, {pipeline_mode = #tpu.pipeline_mode<synchronous>, transform_indices = @transform_6, window_bounds = array<i64: 2, 2, 32, 16>}, {pipeline_mode = #tpu.pipeline_mode<synchronous>, transform_indices = @transform_7, window_bounds = array<i64: 2, 2, 1, 16>}, {pipeline_mode = #tpu.pipeline_mode<synchronous>, transform_indices = @transform_8, window_bounds = array<i64: 2, 2, 32, 16>}, {pipeline_mode = #tpu.pipeline_mode<synchronous>, transform_indices = @transform_9, window_bounds = array<i64: 2, 2, 1, 16>}, {pipeline_mode = #tpu.pipeline_mode<synchronous>, transform_indices = @transform_10, window_bounds = array<i64: 2, 32, 32>}, {pipeline_mode = #tpu.pipeline_mode<synchronous>, transform_indices = @transform_11, window_bounds = array<i64: 2, 1, 32>}, {pipeline_mode = #tpu.pipeline_mode<synchronous>, transform_indices = @transform_12, window_bounds = array<i64: 2, 1, 32>}, {pipeline_mode = #tpu.pipeline_mode<synchronous>, transform_indices = @transform_13, window_bounds = array<i64: 2, 1, 32>}, {pipeline_mode = #tpu.pipeline_mode<synchronous>, transform_indices = @transform_14, window_bounds = array<i64: 2, 32, 64>}, {pipeline_mode = #tpu.pipeline_mode<synchronous>, transform_indices = @transform_15, window_bounds = array<i64: 2, 1, 64>}, {pipeline_mode = #tpu.pipeline_mode<synchronous>, transform_indices = @transform_16, window_bounds = array<i64: 2, 64, 32>}, {pipeline_mode = #tpu.pipeline_mode<synchronous>, transform_indices = @transform_17, window_bounds = array<i64: 2, 1, 32>}, {pipeline_mode = #tpu.pipeline_mode<synchronous>, transform_indices = @transform_18, window_bounds = array<i64: 2, 1, 32>}, {pipeline_mode = #tpu.pipeline_mode<synchronous>, transform_indices = @transform_19, window_bounds = array<i64: 2, 1, 32>}, {transform_indices = @transform_20, window_bounds = array<i64: 1, 1, 32>}]} {
    %c0 = arith.constant 0 : index
    %c0_0 = arith.constant 0 : index
    %c0_1 = arith.constant 0 : index
    %0 = vector.load %arg2[%c0, %c0_0, %c0_1] : memref<1x1x8xf32, #tpu.memory_space<vmem>>, vector<1x1x8xf32>
    %1 = vector.shape_cast %0 : vector<1x1x8xf32> to vector<1x8xf32>
    %cst = arith.constant 5.000000e-01 : f32
    %2 = vector.broadcast %cst : f32 to vector<1x8xf32>
    %3 = arith.cmpf ogt, %1, %2 : vector<1x8xf32>
    %cst_2 = arith.constant 0.000000e+00 : f32
    %cst_3 = arith.constant -1.000000e+09 : f32
    %4 = vector.broadcast %cst_2 : f32 to vector<1x8xf32>
    %5 = vector.broadcast %cst_3 : f32 to vector<1x8xf32>
    %6 = arith.select %3, %4, %5 : vector<1x8xi1>, vector<1x8xf32>
    %c0_4 = arith.constant 0 : index
    %c0_5 = arith.constant 0 : index
    %c0_6 = arith.constant 0 : index
    %7 = vector.load %arg1[%c0_4, %c0_5, %c0_6] : memref<1x8x32xf32, #tpu.memory_space<vmem>>, vector<1x8x32xf32>
    %8 = vector.shape_cast %7 : vector<1x8x32xf32> to vector<8x32xf32>
    %c0_7 = arith.constant 0 : index
    %c0_8 = arith.constant 0 : index
    %9 = vector.load %arg3[%c0_7, %c0_8] : memref<1x32xf32, #tpu.memory_space<vmem>>, vector<1x32xf32>
    %c0_9 = arith.constant 0 : index
    %c0_10 = arith.constant 0 : index
    %10 = vector.load %arg4[%c0_9, %c0_10] : memref<1x32xf32, #tpu.memory_space<vmem>>, vector<1x32xf32>
    %cst_11 = arith.constant dense<0.000000e+00> : vector<8xf32>
    %11 = vector.multi_reduction <add>, %8, %cst_11 [1] : vector<8x32xf32> to vector<8xf32>
    %12 = vector.shape_cast %11 : vector<8xf32> to vector<8x1xf32>
    %cst_12 = arith.constant 3.200000e+01 : f32
    %13 = vector.broadcast %cst_12 : f32 to vector<8x1xf32>
    %14 = arith.divf %12, %13 : vector<8x1xf32>
    %15 = vector.broadcast %14 : vector<8x1xf32> to vector<8x32xf32>
    %16 = arith.subf %8, %15 : vector<8x32xf32>
    %17 = arith.mulf %16, %16 : vector<8x32xf32>
    %cst_13 = arith.constant dense<0.000000e+00> : vector<8xf32>
    %18 = vector.multi_reduction <add>, %17, %cst_13 [1] : vector<8x32xf32> to vector<8xf32>
    %19 = vector.shape_cast %18 : vector<8xf32> to vector<8x1xf32>
    %cst_14 = arith.constant 3.200000e+01 : f32
    %20 = vector.broadcast %cst_14 : f32 to vector<8x1xf32>
    %21 = arith.divf %19, %20 : vector<8x1xf32>
    %cst_15 = arith.constant 9.99999996E-13 : f32
    %22 = vector.broadcast %cst_15 : f32 to vector<8x1xf32>
    %23 = arith.addf %21, %22 : vector<8x1xf32>
    %24 = math.rsqrt %23 : vector<8x1xf32>
    %25 = vector.broadcast %24 : vector<8x1xf32> to vector<8x32xf32>
    %26 = arith.mulf %16, %25 : vector<8x32xf32>
    %27 = vector.broadcast %9 : vector<1x32xf32> to vector<8x32xf32>
    %28 = arith.mulf %26, %27 : vector<8x32xf32>
    %29 = vector.broadcast %10 : vector<1x32xf32> to vector<8x32xf32>
    %30 = arith.addf %28, %29 : vector<8x32xf32>
    %c0_16 = arith.constant 0 : index
    %c0_17 = arith.constant 0 : index
    %c0_18 = arith.constant 0 : index
    %c0_19 = arith.constant 0 : index
    %31 = vector.load %arg5[%c0_16, %c0_17, %c0_18, %c0_19] : memref<2x2x32x16xf32, #tpu.memory_space<vmem>>, vector<1x1x32x16xf32>
    %32 = vector.shape_cast %31 : vector<1x1x32x16xf32> to vector<32x16xf32>
    %cst_20 = arith.constant dense<0.000000e+00> : vector<8x16xf32>
    %33 = tpu.matmul %30, %32, %cst_20 {dimension_numbers = #tpu.dot_dimension_numbers<[1], [0], [0], [1], [0, 0, 1, 1], [], []>} : vector<8x32xf32>, vector<32x16xf32>, vector<8x16xf32> -> vector<8x16xf32>
    %c0_21 = arith.constant 0 : index
    %c0_22 = arith.constant 0 : index
    %c0_23 = arith.constant 0 : index
    %c0_24 = arith.constant 0 : index
    %34 = vector.load %arg6[%c0_21, %c0_22, %c0_23, %c0_24] : memref<2x2x1x16xf32, #tpu.memory_space<vmem>>, vector<1x1x1x16xf32>
    %35 = vector.shape_cast %34 : vector<1x1x1x16xf32> to vector<1x16xf32>
    %36 = vector.broadcast %35 : vector<1x16xf32> to vector<8x16xf32>
    %37 = arith.addf %33, %36 : vector<8x16xf32>
    %c0_25 = arith.constant 0 : index
    %c0_26 = arith.constant 0 : index
    %c0_27 = arith.constant 0 : index
    %c0_28 = arith.constant 0 : index
    %38 = vector.load %arg7[%c0_25, %c0_26, %c0_27, %c0_28] : memref<2x2x32x16xf32, #tpu.memory_space<vmem>>, vector<1x1x32x16xf32>
    %39 = vector.shape_cast %38 : vector<1x1x32x16xf32> to vector<32x16xf32>
    %cst_29 = arith.constant dense<0.000000e+00> : vector<8x16xf32>
    %40 = tpu.matmul %30, %39, %cst_29 {dimension_numbers = #tpu.dot_dimension_numbers<[1], [0], [0], [1], [0, 0, 1, 1], [], []>} : vector<8x32xf32>, vector<32x16xf32>, vector<8x16xf32> -> vector<8x16xf32>
    %c0_30 = arith.constant 0 : index
    %c0_31 = arith.constant 0 : index
    %c0_32 = arith.constant 0 : index
    %c0_33 = arith.constant 0 : index
    %41 = vector.load %arg8[%c0_30, %c0_31, %c0_32, %c0_33] : memref<2x2x1x16xf32, #tpu.memory_space<vmem>>, vector<1x1x1x16xf32>
    %42 = vector.shape_cast %41 : vector<1x1x1x16xf32> to vector<1x16xf32>
    %43 = vector.broadcast %42 : vector<1x16xf32> to vector<8x16xf32>
    %44 = arith.addf %40, %43 : vector<8x16xf32>
    %c0_34 = arith.constant 0 : index
    %c0_35 = arith.constant 0 : index
    %c0_36 = arith.constant 0 : index
    %c0_37 = arith.constant 0 : index
    %45 = vector.load %arg9[%c0_34, %c0_35, %c0_36, %c0_37] : memref<2x2x32x16xf32, #tpu.memory_space<vmem>>, vector<1x1x32x16xf32>
    %46 = vector.shape_cast %45 : vector<1x1x32x16xf32> to vector<32x16xf32>
    %cst_38 = arith.constant dense<0.000000e+00> : vector<8x16xf32>
    %47 = tpu.matmul %30, %46, %cst_38 {dimension_numbers = #tpu.dot_dimension_numbers<[1], [0], [0], [1], [0, 0, 1, 1], [], []>} : vector<8x32xf32>, vector<32x16xf32>, vector<8x16xf32> -> vector<8x16xf32>
    %c0_39 = arith.constant 0 : index
    %c0_40 = arith.constant 0 : index
    %c0_41 = arith.constant 0 : index
    %c0_42 = arith.constant 0 : index
    %48 = vector.load %arg10[%c0_39, %c0_40, %c0_41, %c0_42] : memref<2x2x1x16xf32, #tpu.memory_space<vmem>>, vector<1x1x1x16xf32>
    %49 = vector.shape_cast %48 : vector<1x1x1x16xf32> to vector<1x16xf32>
    %50 = vector.broadcast %49 : vector<1x16xf32> to vector<8x16xf32>
    %51 = arith.addf %47, %50 : vector<8x16xf32>
    %cst_43 = arith.constant dense<0.000000e+00> : vector<8x8xf32>
    %52 = tpu.matmul %37, %44, %cst_43 {dimension_numbers = #tpu.dot_dimension_numbers<[1], [1], [0], [0], [0, 0, 1, 0], [], []>} : vector<8x16xf32>, vector<8x16xf32>, vector<8x8xf32> -> vector<8x8xf32>
    %cst_44 = arith.constant 2.500000e-01 : f32
    %53 = vector.broadcast %cst_44 : f32 to vector<8x8xf32>
    %54 = arith.mulf %52, %53 : vector<8x8xf32>
    %55 = vector.broadcast %6 : vector<1x8xf32> to vector<8x8xf32>
    %56 = arith.addf %54, %55 : vector<8x8xf32>
    %cst_45 = arith.constant dense<0xFF800000> : vector<8xf32>
    %57 = vector.multi_reduction <maximumf>, %56, %cst_45 [1] : vector<8x8xf32> to vector<8xf32>
    %58 = vector.shape_cast %57 : vector<8xf32> to vector<8x1xf32>
    %59 = vector.broadcast %58 : vector<8x1xf32> to vector<8x8xf32>
    %60 = arith.subf %56, %59 : vector<8x8xf32>
    %61 = math.exp %60 : vector<8x8xf32>
    %cst_46 = arith.constant dense<0.000000e+00> : vector<8xf32>
    %62 = vector.multi_reduction <add>, %61, %cst_46 [1] : vector<8x8xf32> to vector<8xf32>
    %63 = vector.shape_cast %62 : vector<8xf32> to vector<8x1xf32>
    %64 = tpu.reciprocal %63 {approx = true} : vector<8x1xf32> -> vector<8x1xf32>
    %65 = vector.broadcast %64 : vector<8x1xf32> to vector<8x8xf32>
    %66 = arith.mulf %61, %65 : vector<8x8xf32>
    %cst_47 = arith.constant dense<0.000000e+00> : vector<8x16xf32>
    %67 = tpu.matmul %66, %51, %cst_47 {dimension_numbers = #tpu.dot_dimension_numbers<[1], [0], [0], [1], [0, 0, 1, 1], [], []>} : vector<8x8xf32>, vector<8x16xf32>, vector<8x16xf32> -> vector<8x16xf32>
    %c0_48 = arith.constant 0 : index
    %c0_49 = arith.constant 0 : index
    %68 = vector.load %arg22[%c0_48, %c0_49] : memref<8x32xf32, #tpu.memory_space<vmem>>, vector<8x16xf32>
    tpu.vector_store %arg22[%c0_48, %c0_49], %67 {strides = array<i32>} : memref<8x32xf32, #tpu.memory_space<vmem>>, vector<8x16xf32>,
    %c0_50 = arith.constant 0 : index
    %c1 = arith.constant 1 : index
    %c0_51 = arith.constant 0 : index
    %c0_52 = arith.constant 0 : index
    %69 = vector.load %arg5[%c0_50, %c1, %c0_51, %c0_52] : memref<2x2x32x16xf32, #tpu.memory_space<vmem>>, vector<1x1x32x16xf32>
    %70 = vector.shape_cast %69 : vector<1x1x32x16xf32> to vector<32x16xf32>
    %cst_53 = arith.constant dense<0.000000e+00> : vector<8x16xf32>
    %71 = tpu.matmul %30, %70, %cst_53 {dimension_numbers = #tpu.dot_dimension_numbers<[1], [0], [0], [1], [0, 0, 1, 1], [], []>} : vector<8x32xf32>, vector<32x16xf32>, vector<8x16xf32> -> vector<8x16xf32>
    %c0_54 = arith.constant 0 : index
    %c1_55 = arith.constant 1 : index
    %c0_56 = arith.constant 0 : index
    %c0_57 = arith.constant 0 : index
    %72 = vector.load %arg6[%c0_54, %c1_55, %c0_56, %c0_57] : memref<2x2x1x16xf32, #tpu.memory_space<vmem>>, vector<1x1x1x16xf32>
    %73 = vector.shape_cast %72 : vector<1x1x1x16xf32> to vector<1x16xf32>
    %74 = vector.broadcast %73 : vector<1x16xf32> to vector<8x16xf32>
    %75 = arith.addf %71, %74 : vector<8x16xf32>
    %c0_58 = arith.constant 0 : index
    %c1_59 = arith.constant 1 : index
    %c0_60 = arith.constant 0 : index
    %c0_61 = arith.constant 0 : index
    %76 = vector.load %arg7[%c0_58, %c1_59, %c0_60, %c0_61] : memref<2x2x32x16xf32, #tpu.memory_space<vmem>>, vector<1x1x32x16xf32>
    %77 = vector.shape_cast %76 : vector<1x1x32x16xf32> to vector<32x16xf32>
    %cst_62 = arith.constant dense<0.000000e+00> : vector<8x16xf32>
    %78 = tpu.matmul %30, %77, %cst_62 {dimension_numbers = #tpu.dot_dimension_numbers<[1], [0], [0], [1], [0, 0, 1, 1], [], []>} : vector<8x32xf32>, vector<32x16xf32>, vector<8x16xf32> -> vector<8x16xf32>
    %c0_63 = arith.constant 0 : index
    %c1_64 = arith.constant 1 : index
    %c0_65 = arith.constant 0 : index
    %c0_66 = arith.constant 0 : index
    %79 = vector.load %arg8[%c0_63, %c1_64, %c0_65, %c0_66] : memref<2x2x1x16xf32, #tpu.memory_space<vmem>>, vector<1x1x1x16xf32>
    %80 = vector.shape_cast %79 : vector<1x1x1x16xf32> to vector<1x16xf32>
    %81 = vector.broadcast %80 : vector<1x16xf32> to vector<8x16xf32>
    %82 = arith.addf %78, %81 : vector<8x16xf32>
    %c0_67 = arith.constant 0 : index
    %c1_68 = arith.constant 1 : index
    %c0_69 = arith.constant 0 : index
    %c0_70 = arith.constant 0 : index
    %83 = vector.load %arg9[%c0_67, %c1_68, %c0_69, %c0_70] : memref<2x2x32x16xf32, #tpu.memory_space<vmem>>, vector<1x1x32x16xf32>
    %84 = vector.shape_cast %83 : vector<1x1x32x16xf32> to vector<32x16xf32>
    %cst_71 = arith.constant dense<0.000000e+00> : vector<8x16xf32>
    %85 = tpu.matmul %30, %84, %cst_71 {dimension_numbers = #tpu.dot_dimension_numbers<[1], [0], [0], [1], [0, 0, 1, 1], [], []>} : vector<8x32xf32>, vector<32x16xf32>, vector<8x16xf32> -> vector<8x16xf32>
    %c0_72 = arith.constant 0 : index
    %c1_73 = arith.constant 1 : index
    %c0_74 = arith.constant 0 : index
    %c0_75 = arith.constant 0 : index
    %86 = vector.load %arg10[%c0_72, %c1_73, %c0_74, %c0_75] : memref<2x2x1x16xf32, #tpu.memory_space<vmem>>, vector<1x1x1x16xf32>
    %87 = vector.shape_cast %86 : vector<1x1x1x16xf32> to vector<1x16xf32>
    %88 = vector.broadcast %87 : vector<1x16xf32> to vector<8x16xf32>
    %89 = arith.addf %85, %88 : vector<8x16xf32>
    %cst_76 = arith.constant dense<0.000000e+00> : vector<8x8xf32>
    %90 = tpu.matmul %75, %82, %cst_76 {dimension_numbers = #tpu.dot_dimension_numbers<[1], [1], [0], [0], [0, 0, 1, 0], [], []>} : vector<8x16xf32>, vector<8x16xf32>, vector<8x8xf32> -> vector<8x8xf32>
    %cst_77 = arith.constant 2.500000e-01 : f32
    %91 = vector.broadcast %cst_77 : f32 to vector<8x8xf32>
    %92 = arith.mulf %90, %91 : vector<8x8xf32>
    %93 = vector.broadcast %6 : vector<1x8xf32> to vector<8x8xf32>
    %94 = arith.addf %92, %93 : vector<8x8xf32>
    %cst_78 = arith.constant dense<0xFF800000> : vector<8xf32>
    %95 = vector.multi_reduction <maximumf>, %94, %cst_78 [1] : vector<8x8xf32> to vector<8xf32>
    %96 = vector.shape_cast %95 : vector<8xf32> to vector<8x1xf32>
    %97 = vector.broadcast %96 : vector<8x1xf32> to vector<8x8xf32>
    %98 = arith.subf %94, %97 : vector<8x8xf32>
    %99 = math.exp %98 : vector<8x8xf32>
    %cst_79 = arith.constant dense<0.000000e+00> : vector<8xf32>
    %100 = vector.multi_reduction <add>, %99, %cst_79 [1] : vector<8x8xf32> to vector<8xf32>
    %101 = vector.shape_cast %100 : vector<8xf32> to vector<8x1xf32>
    %102 = tpu.reciprocal %101 {approx = true} : vector<8x1xf32> -> vector<8x1xf32>
    %103 = vector.broadcast %102 : vector<8x1xf32> to vector<8x8xf32>
    %104 = arith.mulf %99, %103 : vector<8x8xf32>
    %cst_80 = arith.constant dense<0.000000e+00> : vector<8x16xf32>
    %105 = tpu.matmul %104, %89, %cst_80 {dimension_numbers = #tpu.dot_dimension_numbers<[1], [0], [0], [1], [0, 0, 1, 1], [], []>} : vector<8x8xf32>, vector<8x16xf32>, vector<8x16xf32> -> vector<8x16xf32>
    %c0_81 = arith.constant 0 : index
    %c16 = arith.constant 16 : index
    %106 = vector.load %arg22[%c0_81, %c16] : memref<8x32xf32, #tpu.memory_space<vmem>>, vector<8x16xf32>
    tpu.vector_store %arg22[%c0_81, %c16], %105 {strides = array<i32>} : memref<8x32xf32, #tpu.memory_space<vmem>>, vector<8x16xf32>,
    %c0_82 = arith.constant 0 : index
    %c0_83 = arith.constant 0 : index
    %107 = vector.load %arg22[%c0_82, %c0_83] : memref<8x32xf32, #tpu.memory_space<vmem>>, vector<8x32xf32>
    %c0_84 = arith.constant 0 : index
    %c0_85 = arith.constant 0 : index
    %c0_86 = arith.constant 0 : index
    %108 = vector.load %arg11[%c0_84, %c0_85, %c0_86] : memref<2x32x32xf32, #tpu.memory_space<vmem>>, vector<1x32x32xf32>
    %109 = vector.shape_cast %108 : vector<1x32x32xf32> to vector<32x32xf32>
    %cst_87 = arith.constant dense<0.000000e+00> : vector<8x32xf32>
    %110 = tpu.matmul %107, %109, %cst_87 {dimension_numbers = #tpu.dot_dimension_numbers<[1], [0], [0], [1], [0, 0, 1, 1], [], []>} : vector<8x32xf32>, vector<32x32xf32>, vector<8x32xf32> -> vector<8x32xf32>
    %c0_88 = arith.constant 0 : index
    %c0_89 = arith.constant 0 : index
    %c0_90 = arith.constant 0 : index
    %111 = vector.load %arg12[%c0_88, %c0_89, %c0_90] : memref<2x1x32xf32, #tpu.memory_space<vmem>>, vector<1x1x32xf32>
    %112 = vector.shape_cast %111 : vector<1x1x32xf32> to vector<1x32xf32>
    %113 = vector.broadcast %112 : vector<1x32xf32> to vector<8x32xf32>
    %114 = arith.addf %110, %113 : vector<8x32xf32>
    %115 = arith.addf %114, %30 : vector<8x32xf32>
    %c0_91 = arith.constant 0 : index
    %c0_92 = arith.constant 0 : index
    %c0_93 = arith.constant 0 : index
    %116 = vector.load %arg13[%c0_91, %c0_92, %c0_93] : memref<2x1x32xf32, #tpu.memory_space<vmem>>, vector<1x1x32xf32>
    %117 = vector.shape_cast %116 : vector<1x1x32xf32> to vector<1x32xf32>
    %c0_94 = arith.constant 0 : index
    %c0_95 = arith.constant 0 : index
    %c0_96 = arith.constant 0 : index
    %118 = vector.load %arg14[%c0_94, %c0_95, %c0_96] : memref<2x1x32xf32, #tpu.memory_space<vmem>>, vector<1x1x32xf32>
    %119 = vector.shape_cast %118 : vector<1x1x32xf32> to vector<1x32xf32>
    %cst_97 = arith.constant dense<0.000000e+00> : vector<8xf32>
    %120 = vector.multi_reduction <add>, %115, %cst_97 [1] : vector<8x32xf32> to vector<8xf32>
    %121 = vector.shape_cast %120 : vector<8xf32> to vector<8x1xf32>
    %cst_98 = arith.constant 3.200000e+01 : f32
    %122 = vector.broadcast %cst_98 : f32 to vector<8x1xf32>
    %123 = arith.divf %121, %122 : vector<8x1xf32>
    %124 = vector.broadcast %123 : vector<8x1xf32> to vector<8x32xf32>
    %125 = arith.subf %115, %124 : vector<8x32xf32>
    %126 = arith.mulf %125, %125 : vector<8x32xf32>
    %cst_99 = arith.constant dense<0.000000e+00> : vector<8xf32>
    %127 = vector.multi_reduction <add>, %126, %cst_99 [1] : vector<8x32xf32> to vector<8xf32>
    %128 = vector.shape_cast %127 : vector<8xf32> to vector<8x1xf32>
    %cst_100 = arith.constant 3.200000e+01 : f32
    %129 = vector.broadcast %cst_100 : f32 to vector<8x1xf32>
    %130 = arith.divf %128, %129 : vector<8x1xf32>
    %cst_101 = arith.constant 9.99999996E-13 : f32
    %131 = vector.broadcast %cst_101 : f32 to vector<8x1xf32>
    %132 = arith.addf %130, %131 : vector<8x1xf32>
    %133 = math.rsqrt %132 : vector<8x1xf32>
    %134 = vector.broadcast %133 : vector<8x1xf32> to vector<8x32xf32>
    %135 = arith.mulf %125, %134 : vector<8x32xf32>
    %136 = vector.broadcast %117 : vector<1x32xf32> to vector<8x32xf32>
    %137 = arith.mulf %135, %136 : vector<8x32xf32>
    %138 = vector.broadcast %119 : vector<1x32xf32> to vector<8x32xf32>
    %139 = arith.addf %137, %138 : vector<8x32xf32>
    %c0_102 = arith.constant 0 : index
    %c0_103 = arith.constant 0 : index
    %c0_104 = arith.constant 0 : index
    %140 = vector.load %arg15[%c0_102, %c0_103, %c0_104] : memref<2x32x64xf32, #tpu.memory_space<vmem>>, vector<1x32x64xf32>
    %141 = vector.shape_cast %140 : vector<1x32x64xf32> to vector<32x64xf32>
    %cst_105 = arith.constant dense<0.000000e+00> : vector<8x64xf32>
    %142 = tpu.matmul %139, %141, %cst_105 {dimension_numbers = #tpu.dot_dimension_numbers<[1], [0], [0], [1], [0, 0, 1, 1], [], []>} : vector<8x32xf32>, vector<32x64xf32>, vector<8x64xf32> -> vector<8x64xf32>
    %c0_106 = arith.constant 0 : index
    %c0_107 = arith.constant 0 : index
    %c0_108 = arith.constant 0 : index
    %143 = vector.load %arg16[%c0_106, %c0_107, %c0_108] : memref<2x1x64xf32, #tpu.memory_space<vmem>>, vector<1x1x64xf32>
    %144 = vector.shape_cast %143 : vector<1x1x64xf32> to vector<1x64xf32>
    %145 = vector.broadcast %144 : vector<1x64xf32> to vector<8x64xf32>
    %146 = arith.addf %142, %145 : vector<8x64xf32>
    %cst_109 = arith.constant 5.000000e-01 : f32
    %147 = vector.broadcast %cst_109 : f32 to vector<8x64xf32>
    %148 = arith.mulf %147, %146 : vector<8x64xf32>
    %cst_110 = arith.constant 0.707106769 : f32
    %149 = vector.broadcast %cst_110 : f32 to vector<8x64xf32>
    %150 = arith.mulf %146, %149 : vector<8x64xf32>
    %151 = math.erf %150 : vector<8x64xf32>
    %cst_111 = arith.constant 1.000000e+00 : f32
    %152 = vector.broadcast %cst_111 : f32 to vector<8x64xf32>
    %153 = arith.addf %152, %151 : vector<8x64xf32>
    %154 = arith.mulf %148, %153 : vector<8x64xf32>
    %c0_112 = arith.constant 0 : index
    %c0_113 = arith.constant 0 : index
    %c0_114 = arith.constant 0 : index
    %155 = vector.load %arg17[%c0_112, %c0_113, %c0_114] : memref<2x64x32xf32, #tpu.memory_space<vmem>>, vector<1x64x32xf32>
    %156 = vector.shape_cast %155 : vector<1x64x32xf32> to vector<64x32xf32>
    %cst_115 = arith.constant dense<0.000000e+00> : vector<8x32xf32>
    %157 = tpu.matmul %154, %156, %cst_115 {dimension_numbers = #tpu.dot_dimension_numbers<[1], [0], [0], [1], [0, 0, 1, 1], [], []>} : vector<8x64xf32>, vector<64x32xf32>, vector<8x32xf32> -> vector<8x32xf32>
    %c0_116 = arith.constant 0 : index
    %c0_117 = arith.constant 0 : index
    %c0_118 = arith.constant 0 : index
    %158 = vector.load %arg18[%c0_116, %c0_117, %c0_118] : memref<2x1x32xf32, #tpu.memory_space<vmem>>, vector<1x1x32xf32>
    %159 = vector.shape_cast %158 : vector<1x1x32xf32> to vector<1x32xf32>
    %160 = vector.broadcast %159 : vector<1x32xf32> to vector<8x32xf32>
    %161 = arith.addf %157, %160 : vector<8x32xf32>
    %162 = arith.addf %161, %139 : vector<8x32xf32>
    %c0_119 = arith.constant 0 : index
    %c0_120 = arith.constant 0 : index
    %c0_121 = arith.constant 0 : index
    %163 = vector.load %arg19[%c0_119, %c0_120, %c0_121] : memref<2x1x32xf32, #tpu.memory_space<vmem>>, vector<1x1x32xf32>
    %164 = vector.shape_cast %163 : vector<1x1x32xf32> to vector<1x32xf32>
    %c0_122 = arith.constant 0 : index
    %c0_123 = arith.constant 0 : index
    %c0_124 = arith.constant 0 : index
    %165 = vector.load %arg20[%c0_122, %c0_123, %c0_124] : memref<2x1x32xf32, #tpu.memory_space<vmem>>, vector<1x1x32xf32>
    %166 = vector.shape_cast %165 : vector<1x1x32xf32> to vector<1x32xf32>
    %cst_125 = arith.constant dense<0.000000e+00> : vector<8xf32>
    %167 = vector.multi_reduction <add>, %162, %cst_125 [1] : vector<8x32xf32> to vector<8xf32>
    %168 = vector.shape_cast %167 : vector<8xf32> to vector<8x1xf32>
    %cst_126 = arith.constant 3.200000e+01 : f32
    %169 = vector.broadcast %cst_126 : f32 to vector<8x1xf32>
    %170 = arith.divf %168, %169 : vector<8x1xf32>
    %171 = vector.broadcast %170 : vector<8x1xf32> to vector<8x32xf32>
    %172 = arith.subf %162, %171 : vector<8x32xf32>
    %173 = arith.mulf %172, %172 : vector<8x32xf32>
    %cst_127 = arith.constant dense<0.000000e+00> : vector<8xf32>
    %174 = vector.multi_reduction <add>, %173, %cst_127 [1] : vector<8x32xf32> to vector<8xf32>
    %175 = vector.shape_cast %174 : vector<8xf32> to vector<8x1xf32>
    %cst_128 = arith.constant 3.200000e+01 : f32
    %176 = vector.broadcast %cst_128 : f32 to vector<8x1xf32>
    %177 = arith.divf %175, %176 : vector<8x1xf32>
    %cst_129 = arith.constant 9.99999996E-13 : f32
    %178 = vector.broadcast %cst_129 : f32 to vector<8x1xf32>
    %179 = arith.addf %177, %178 : vector<8x1xf32>
    %180 = math.rsqrt %179 : vector<8x1xf32>
    %181 = vector.broadcast %180 : vector<8x1xf32> to vector<8x32xf32>
    %182 = arith.mulf %172, %181 : vector<8x32xf32>
    %183 = vector.broadcast %164 : vector<1x32xf32> to vector<8x32xf32>
    %184 = arith.mulf %182, %183 : vector<8x32xf32>
    %185 = vector.broadcast %166 : vector<1x32xf32> to vector<8x32xf32>
    %186 = arith.addf %184, %185 : vector<8x32xf32>
    %c1_130 = arith.constant 1 : index
    %c0_131 = arith.constant 0 : index
    %c0_132 = arith.constant 0 : index
    %c0_133 = arith.constant 0 : index
    %187 = vector.load %arg5[%c1_130, %c0_131, %c0_132, %c0_133] : memref<2x2x32x16xf32, #tpu.memory_space<vmem>>, vector<1x1x32x16xf32>
    %188 = vector.shape_cast %187 : vector<1x1x32x16xf32> to vector<32x16xf32>
    %cst_134 = arith.constant dense<0.000000e+00> : vector<8x16xf32>
    %189 = tpu.matmul %186, %188, %cst_134 {dimension_numbers = #tpu.dot_dimension_numbers<[1], [0], [0], [1], [0, 0, 1, 1], [], []>} : vector<8x32xf32>, vector<32x16xf32>, vector<8x16xf32> -> vector<8x16xf32>
    %c1_135 = arith.constant 1 : index
    %c0_136 = arith.constant 0 : index
    %c0_137 = arith.constant 0 : index
    %c0_138 = arith.constant 0 : index
    %190 = vector.load %arg6[%c1_135, %c0_136, %c0_137, %c0_138] : memref<2x2x1x16xf32, #tpu.memory_space<vmem>>, vector<1x1x1x16xf32>
    %191 = vector.shape_cast %190 : vector<1x1x1x16xf32> to vector<1x16xf32>
    %192 = vector.broadcast %191 : vector<1x16xf32> to vector<8x16xf32>
    %193 = arith.addf %189, %192 : vector<8x16xf32>
    %c1_139 = arith.constant 1 : index
    %c0_140 = arith.constant 0 : index
    %c0_141 = arith.constant 0 : index
    %c0_142 = arith.constant 0 : index
    %194 = vector.load %arg7[%c1_139, %c0_140, %c0_141, %c0_142] : memref<2x2x32x16xf32, #tpu.memory_space<vmem>>, vector<1x1x32x16xf32>
    %195 = vector.shape_cast %194 : vector<1x1x32x16xf32> to vector<32x16xf32>
    %cst_143 = arith.constant dense<0.000000e+00> : vector<8x16xf32>
    %196 = tpu.matmul %186, %195, %cst_143 {dimension_numbers = #tpu.dot_dimension_numbers<[1], [0], [0], [1], [0, 0, 1, 1], [], []>} : vector<8x32xf32>, vector<32x16xf32>, vector<8x16xf32> -> vector<8x16xf32>
    %c1_144 = arith.constant 1 : index
    %c0_145 = arith.constant 0 : index
    %c0_146 = arith.constant 0 : index
    %c0_147 = arith.constant 0 : index
    %197 = vector.load %arg8[%c1_144, %c0_145, %c0_146, %c0_147] : memref<2x2x1x16xf32, #tpu.memory_space<vmem>>, vector<1x1x1x16xf32>
    %198 = vector.shape_cast %197 : vector<1x1x1x16xf32> to vector<1x16xf32>
    %199 = vector.broadcast %198 : vector<1x16xf32> to vector<8x16xf32>
    %200 = arith.addf %196, %199 : vector<8x16xf32>
    %c1_148 = arith.constant 1 : index
    %c0_149 = arith.constant 0 : index
    %c0_150 = arith.constant 0 : index
    %c0_151 = arith.constant 0 : index
    %201 = vector.load %arg9[%c1_148, %c0_149, %c0_150, %c0_151] : memref<2x2x32x16xf32, #tpu.memory_space<vmem>>, vector<1x1x32x16xf32>
    %202 = vector.shape_cast %201 : vector<1x1x32x16xf32> to vector<32x16xf32>
    %cst_152 = arith.constant dense<0.000000e+00> : vector<8x16xf32>
    %203 = tpu.matmul %186, %202, %cst_152 {dimension_numbers = #tpu.dot_dimension_numbers<[1], [0], [0], [1], [0, 0, 1, 1], [], []>} : vector<8x32xf32>, vector<32x16xf32>, vector<8x16xf32> -> vector<8x16xf32>
    %c1_153 = arith.constant 1 : index
    %c0_154 = arith.constant 0 : index
    %c0_155 = arith.constant 0 : index
    %c0_156 = arith.constant 0 : index
    %204 = vector.load %arg10[%c1_153, %c0_154, %c0_155, %c0_156] : memref<2x2x1x16xf32, #tpu.memory_space<vmem>>, vector<1x1x1x16xf32>
    %205 = vector.shape_cast %204 : vector<1x1x1x16xf32> to vector<1x16xf32>
    %206 = vector.broadcast %205 : vector<1x16xf32> to vector<8x16xf32>
    %207 = arith.addf %203, %206 : vector<8x16xf32>
    %cst_157 = arith.constant dense<0.000000e+00> : vector<8x8xf32>
    %208 = tpu.matmul %193, %200, %cst_157 {dimension_numbers = #tpu.dot_dimension_numbers<[1], [1], [0], [0], [0, 0, 1, 0], [], []>} : vector<8x16xf32>, vector<8x16xf32>, vector<8x8xf32> -> vector<8x8xf32>
    %cst_158 = arith.constant 2.500000e-01 : f32
    %209 = vector.broadcast %cst_158 : f32 to vector<8x8xf32>
    %210 = arith.mulf %208, %209 : vector<8x8xf32>
    %211 = vector.broadcast %6 : vector<1x8xf32> to vector<8x8xf32>
    %212 = arith.addf %210, %211 : vector<8x8xf32>
    %cst_159 = arith.constant dense<0xFF800000> : vector<8xf32>
    %213 = vector.multi_reduction <maximumf>, %212, %cst_159 [1] : vector<8x8xf32> to vector<8xf32>
    %214 = vector.shape_cast %213 : vector<8xf32> to vector<8x1xf32>
    %215 = vector.broadcast %214 : vector<8x1xf32> to vector<8x8xf32>
    %216 = arith.subf %212, %215 : vector<8x8xf32>
    %217 = math.exp %216 : vector<8x8xf32>
    %cst_160 = arith.constant dense<0.000000e+00> : vector<8xf32>
    %218 = vector.multi_reduction <add>, %217, %cst_160 [1] : vector<8x8xf32> to vector<8xf32>
    %219 = vector.shape_cast %218 : vector<8xf32> to vector<8x1xf32>
    %220 = tpu.reciprocal %219 {approx = true} : vector<8x1xf32> -> vector<8x1xf32>
    %221 = vector.broadcast %220 : vector<8x1xf32> to vector<8x8xf32>
    %222 = arith.mulf %217, %221 : vector<8x8xf32>
    %cst_161 = arith.constant dense<0.000000e+00> : vector<8x16xf32>
    %223 = tpu.matmul %222, %207, %cst_161 {dimension_numbers = #tpu.dot_dimension_numbers<[1], [0], [0], [1], [0, 0, 1, 1], [], []>} : vector<8x8xf32>, vector<8x16xf32>, vector<8x16xf32> -> vector<8x16xf32>
    %c0_162 = arith.constant 0 : index
    %c0_163 = arith.constant 0 : index
    %224 = vector.load %arg22[%c0_162, %c0_163] : memref<8x32xf32, #tpu.memory_space<vmem>>, vector<8x16xf32>
    tpu.vector_store %arg22[%c0_162, %c0_163], %223 {strides = array<i32>} : memref<8x32xf32, #tpu.memory_space<vmem>>, vector<8x16xf32>,
    %c1_164 = arith.constant 1 : index
    %c1_165 = arith.constant 1 : index
    %c0_166 = arith.constant 0 : index
    %c0_167 = arith.constant 0 : index
    %225 = vector.load %arg5[%c1_164, %c1_165, %c0_166, %c0_167] : memref<2x2x32x16xf32, #tpu.memory_space<vmem>>, vector<1x1x32x16xf32>
    %226 = vector.shape_cast %225 : vector<1x1x32x16xf32> to vector<32x16xf32>
    %cst_168 = arith.constant dense<0.000000e+00> : vector<8x16xf32>
    %227 = tpu.matmul %186, %226, %cst_168 {dimension_numbers = #tpu.dot_dimension_numbers<[1], [0], [0], [1], [0, 0, 1, 1], [], []>} : vector<8x32xf32>, vector<32x16xf32>, vector<8x16xf32> -> vector<8x16xf32>
    %c1_169 = arith.constant 1 : index
    %c1_170 = arith.constant 1 : index
    %c0_171 = arith.constant 0 : index
    %c0_172 = arith.constant 0 : index
    %228 = vector.load %arg6[%c1_169, %c1_170, %c0_171, %c0_172] : memref<2x2x1x16xf32, #tpu.memory_space<vmem>>, vector<1x1x1x16xf32>
    %229 = vector.shape_cast %228 : vector<1x1x1x16xf32> to vector<1x16xf32>
    %230 = vector.broadcast %229 : vector<1x16xf32> to vector<8x16xf32>
    %231 = arith.addf %227, %230 : vector<8x16xf32>
    %c1_173 = arith.constant 1 : index
    %c1_174 = arith.constant 1 : index
    %c0_175 = arith.constant 0 : index
    %c0_176 = arith.constant 0 : index
    %232 = vector.load %arg7[%c1_173, %c1_174, %c0_175, %c0_176] : memref<2x2x32x16xf32, #tpu.memory_space<vmem>>, vector<1x1x32x16xf32>
    %233 = vector.shape_cast %232 : vector<1x1x32x16xf32> to vector<32x16xf32>
    %cst_177 = arith.constant dense<0.000000e+00> : vector<8x16xf32>
    %234 = tpu.matmul %186, %233, %cst_177 {dimension_numbers = #tpu.dot_dimension_numbers<[1], [0], [0], [1], [0, 0, 1, 1], [], []>} : vector<8x32xf32>, vector<32x16xf32>, vector<8x16xf32> -> vector<8x16xf32>
    %c1_178 = arith.constant 1 : index
    %c1_179 = arith.constant 1 : index
    %c0_180 = arith.constant 0 : index
    %c0_181 = arith.constant 0 : index
    %235 = vector.load %arg8[%c1_178, %c1_179, %c0_180, %c0_181] : memref<2x2x1x16xf32, #tpu.memory_space<vmem>>, vector<1x1x1x16xf32>
    %236 = vector.shape_cast %235 : vector<1x1x1x16xf32> to vector<1x16xf32>
    %237 = vector.broadcast %236 : vector<1x16xf32> to vector<8x16xf32>
    %238 = arith.addf %234, %237 : vector<8x16xf32>
    %c1_182 = arith.constant 1 : index
    %c1_183 = arith.constant 1 : index
    %c0_184 = arith.constant 0 : index
    %c0_185 = arith.constant 0 : index
    %239 = vector.load %arg9[%c1_182, %c1_183, %c0_184, %c0_185] : memref<2x2x32x16xf32, #tpu.memory_space<vmem>>, vector<1x1x32x16xf32>
    %240 = vector.shape_cast %239 : vector<1x1x32x16xf32> to vector<32x16xf32>
    %cst_186 = arith.constant dense<0.000000e+00> : vector<8x16xf32>
    %241 = tpu.matmul %186, %240, %cst_186 {dimension_numbers = #tpu.dot_dimension_numbers<[1], [0], [0], [1], [0, 0, 1, 1], [], []>} : vector<8x32xf32>, vector<32x16xf32>, vector<8x16xf32> -> vector<8x16xf32>
    %c1_187 = arith.constant 1 : index
    %c1_188 = arith.constant 1 : index
    %c0_189 = arith.constant 0 : index
    %c0_190 = arith.constant 0 : index
    %242 = vector.load %arg10[%c1_187, %c1_188, %c0_189, %c0_190] : memref<2x2x1x16xf32, #tpu.memory_space<vmem>>, vector<1x1x1x16xf32>
    %243 = vector.shape_cast %242 : vector<1x1x1x16xf32> to vector<1x16xf32>
    %244 = vector.broadcast %243 : vector<1x16xf32> to vector<8x16xf32>
    %245 = arith.addf %241, %244 : vector<8x16xf32>
    %cst_191 = arith.constant dense<0.000000e+00> : vector<8x8xf32>
    %246 = tpu.matmul %231, %238, %cst_191 {dimension_numbers = #tpu.dot_dimension_numbers<[1], [1], [0], [0], [0, 0, 1, 0], [], []>} : vector<8x16xf32>, vector<8x16xf32>, vector<8x8xf32> -> vector<8x8xf32>
    %cst_192 = arith.constant 2.500000e-01 : f32
    %247 = vector.broadcast %cst_192 : f32 to vector<8x8xf32>
    %248 = arith.mulf %246, %247 : vector<8x8xf32>
    %249 = vector.broadcast %6 : vector<1x8xf32> to vector<8x8xf32>
    %250 = arith.addf %248, %249 : vector<8x8xf32>
    %cst_193 = arith.constant dense<0xFF800000> : vector<8xf32>
    %251 = vector.multi_reduction <maximumf>, %250, %cst_193 [1] : vector<8x8xf32> to vector<8xf32>
    %252 = vector.shape_cast %251 : vector<8xf32> to vector<8x1xf32>
    %253 = vector.broadcast %252 : vector<8x1xf32> to vector<8x8xf32>
    %254 = arith.subf %250, %253 : vector<8x8xf32>
    %255 = math.exp %254 : vector<8x8xf32>
    %cst_194 = arith.constant dense<0.000000e+00> : vector<8xf32>
    %256 = vector.multi_reduction <add>, %255, %cst_194 [1] : vector<8x8xf32> to vector<8xf32>
    %257 = vector.shape_cast %256 : vector<8xf32> to vector<8x1xf32>
    %258 = tpu.reciprocal %257 {approx = true} : vector<8x1xf32> -> vector<8x1xf32>
    %259 = vector.broadcast %258 : vector<8x1xf32> to vector<8x8xf32>
    %260 = arith.mulf %255, %259 : vector<8x8xf32>
    %cst_195 = arith.constant dense<0.000000e+00> : vector<8x16xf32>
    %261 = tpu.matmul %260, %245, %cst_195 {dimension_numbers = #tpu.dot_dimension_numbers<[1], [0], [0], [1], [0, 0, 1, 1], [], []>} : vector<8x8xf32>, vector<8x16xf32>, vector<8x16xf32> -> vector<8x16xf32>
    %c0_196 = arith.constant 0 : index
    %c16_197 = arith.constant 16 : index
    %262 = vector.load %arg22[%c0_196, %c16_197] : memref<8x32xf32, #tpu.memory_space<vmem>>, vector<8x16xf32>
    tpu.vector_store %arg22[%c0_196, %c16_197], %261 {strides = array<i32>} : memref<8x32xf32, #tpu.memory_space<vmem>>, vector<8x16xf32>,
    %c0_198 = arith.constant 0 : index
    %c0_199 = arith.constant 0 : index
    %263 = vector.load %arg22[%c0_198, %c0_199] : memref<8x32xf32, #tpu.memory_space<vmem>>, vector<8x32xf32>
    %c1_200 = arith.constant 1 : index
    %c0_201 = arith.constant 0 : index
    %c0_202 = arith.constant 0 : index
    %264 = vector.load %arg11[%c1_200, %c0_201, %c0_202] : memref<2x32x32xf32, #tpu.memory_space<vmem>>, vector<1x32x32xf32>
    %265 = vector.shape_cast %264 : vector<1x32x32xf32> to vector<32x32xf32>
    %cst_203 = arith.constant dense<0.000000e+00> : vector<8x32xf32>
    %266 = tpu.matmul %263, %265, %cst_203 {dimension_numbers = #tpu.dot_dimension_numbers<[1], [0], [0], [1], [0, 0, 1, 1], [], []>} : vector<8x32xf32>, vector<32x32xf32>, vector<8x32xf32> -> vector<8x32xf32>
    %c1_204 = arith.constant 1 : index
    %c0_205 = arith.constant 0 : index
    %c0_206 = arith.constant 0 : index
    %267 = vector.load %arg12[%c1_204, %c0_205, %c0_206] : memref<2x1x32xf32, #tpu.memory_space<vmem>>, vector<1x1x32xf32>
    %268 = vector.shape_cast %267 : vector<1x1x32xf32> to vector<1x32xf32>
    %269 = vector.broadcast %268 : vector<1x32xf32> to vector<8x32xf32>
    %270 = arith.addf %266, %269 : vector<8x32xf32>
    %271 = arith.addf %270, %186 : vector<8x32xf32>
    %c1_207 = arith.constant 1 : index
    %c0_208 = arith.constant 0 : index
    %c0_209 = arith.constant 0 : index
    %272 = vector.load %arg13[%c1_207, %c0_208, %c0_209] : memref<2x1x32xf32, #tpu.memory_space<vmem>>, vector<1x1x32xf32>
    %273 = vector.shape_cast %272 : vector<1x1x32xf32> to vector<1x32xf32>
    %c1_210 = arith.constant 1 : index
    %c0_211 = arith.constant 0 : index
    %c0_212 = arith.constant 0 : index
    %274 = vector.load %arg14[%c1_210, %c0_211, %c0_212] : memref<2x1x32xf32, #tpu.memory_space<vmem>>, vector<1x1x32xf32>
    %275 = vector.shape_cast %274 : vector<1x1x32xf32> to vector<1x32xf32>
    %cst_213 = arith.constant dense<0.000000e+00> : vector<8xf32>
    %276 = vector.multi_reduction <add>, %271, %cst_213 [1] : vector<8x32xf32> to vector<8xf32>
    %277 = vector.shape_cast %276 : vector<8xf32> to vector<8x1xf32>
    %cst_214 = arith.constant 3.200000e+01 : f32
    %278 = vector.broadcast %cst_214 : f32 to vector<8x1xf32>
    %279 = arith.divf %277, %278 : vector<8x1xf32>
    %280 = vector.broadcast %279 : vector<8x1xf32> to vector<8x32xf32>
    %281 = arith.subf %271, %280 : vector<8x32xf32>
    %282 = arith.mulf %281, %281 : vector<8x32xf32>
    %cst_215 = arith.constant dense<0.000000e+00> : vector<8xf32>
    %283 = vector.multi_reduction <add>, %282, %cst_215 [1] : vector<8x32xf32> to vector<8xf32>
    %284 = vector.shape_cast %283 : vector<8xf32> to vector<8x1xf32>
    %cst_216 = arith.constant 3.200000e+01 : f32
    %285 = vector.broadcast %cst_216 : f32 to vector<8x1xf32>
    %286 = arith.divf %284, %285 : vector<8x1xf32>
    %cst_217 = arith.constant 9.99999996E-13 : f32
    %287 = vector.broadcast %cst_217 : f32 to vector<8x1xf32>
    %288 = arith.addf %286, %287 : vector<8x1xf32>
    %289 = math.rsqrt %288 : vector<8x1xf32>
    %290 = vector.broadcast %289 : vector<8x1xf32> to vector<8x32xf32>
    %291 = arith.mulf %281, %290 : vector<8x32xf32>
    %292 = vector.broadcast %273 : vector<1x32xf32> to vector<8x32xf32>
    %293 = arith.mulf %291, %292 : vector<8x32xf32>
    %294 = vector.broadcast %275 : vector<1x32xf32> to vector<8x32xf32>
    %295 = arith.addf %293, %294 : vector<8x32xf32>
    %c1_218 = arith.constant 1 : index
    %c0_219 = arith.constant 0 : index
    %c0_220 = arith.constant 0 : index
    %296 = vector.load %arg15[%c1_218, %c0_219, %c0_220] : memref<2x32x64xf32, #tpu.memory_space<vmem>>, vector<1x32x64xf32>
    %297 = vector.shape_cast %296 : vector<1x32x64xf32> to vector<32x64xf32>
    %cst_221 = arith.constant dense<0.000000e+00> : vector<8x64xf32>
    %298 = tpu.matmul %295, %297, %cst_221 {dimension_numbers = #tpu.dot_dimension_numbers<[1], [0], [0], [1], [0, 0, 1, 1], [], []>} : vector<8x32xf32>, vector<32x64xf32>, vector<8x64xf32> -> vector<8x64xf32>
    %c1_222 = arith.constant 1 : index
    %c0_223 = arith.constant 0 : index
    %c0_224 = arith.constant 0 : index
    %299 = vector.load %arg16[%c1_222, %c0_223, %c0_224] : memref<2x1x64xf32, #tpu.memory_space<vmem>>, vector<1x1x64xf32>
    %300 = vector.shape_cast %299 : vector<1x1x64xf32> to vector<1x64xf32>
    %301 = vector.broadcast %300 : vector<1x64xf32> to vector<8x64xf32>
    %302 = arith.addf %298, %301 : vector<8x64xf32>
    %cst_225 = arith.constant 5.000000e-01 : f32
    %303 = vector.broadcast %cst_225 : f32 to vector<8x64xf32>
    %304 = arith.mulf %303, %302 : vector<8x64xf32>
    %cst_226 = arith.constant 0.707106769 : f32
    %305 = vector.broadcast %cst_226 : f32 to vector<8x64xf32>
    %306 = arith.mulf %302, %305 : vector<8x64xf32>
    %307 = math.erf %306 : vector<8x64xf32>
    %cst_227 = arith.constant 1.000000e+00 : f32
    %308 = vector.broadcast %cst_227 : f32 to vector<8x64xf32>
    %309 = arith.addf %308, %307 : vector<8x64xf32>
    %310 = arith.mulf %304, %309 : vector<8x64xf32>
    %c1_228 = arith.constant 1 : index
    %c0_229 = arith.constant 0 : index
    %c0_230 = arith.constant 0 : index
    %311 = vector.load %arg17[%c1_228, %c0_229, %c0_230] : memref<2x64x32xf32, #tpu.memory_space<vmem>>, vector<1x64x32xf32>
    %312 = vector.shape_cast %311 : vector<1x64x32xf32> to vector<64x32xf32>
    %cst_231 = arith.constant dense<0.000000e+00> : vector<8x32xf32>
    %313 = tpu.matmul %310, %312, %cst_231 {dimension_numbers = #tpu.dot_dimension_numbers<[1], [0], [0], [1], [0, 0, 1, 1], [], []>} : vector<8x64xf32>, vector<64x32xf32>, vector<8x32xf32> -> vector<8x32xf32>
    %c1_232 = arith.constant 1 : index
    %c0_233 = arith.constant 0 : index
    %c0_234 = arith.constant 0 : index
    %314 = vector.load %arg18[%c1_232, %c0_233, %c0_234] : memref<2x1x32xf32, #tpu.memory_space<vmem>>, vector<1x1x32xf32>
    %315 = vector.shape_cast %314 : vector<1x1x32xf32> to vector<1x32xf32>
    %316 = vector.broadcast %315 : vector<1x32xf32> to vector<8x32xf32>
    %317 = arith.addf %313, %316 : vector<8x32xf32>
    %318 = arith.addf %317, %295 : vector<8x32xf32>
    %c1_235 = arith.constant 1 : index
    %c0_236 = arith.constant 0 : index
    %c0_237 = arith.constant 0 : index
    %319 = vector.load %arg19[%c1_235, %c0_236, %c0_237] : memref<2x1x32xf32, #tpu.memory_space<vmem>>, vector<1x1x32xf32>
    %320 = vector.shape_cast %319 : vector<1x1x32xf32> to vector<1x32xf32>
    %c1_238 = arith.constant 1 : index
    %c0_239 = arith.constant 0 : index
    %c0_240 = arith.constant 0 : index
    %321 = vector.load %arg20[%c1_238, %c0_239, %c0_240] : memref<2x1x32xf32, #tpu.memory_space<vmem>>, vector<1x1x32xf32>
    %322 = vector.shape_cast %321 : vector<1x1x32xf32> to vector<1x32xf32>
    %cst_241 = arith.constant dense<0.000000e+00> : vector<8xf32>
    %323 = vector.multi_reduction <add>, %318, %cst_241 [1] : vector<8x32xf32> to vector<8xf32>
    %324 = vector.shape_cast %323 : vector<8xf32> to vector<8x1xf32>
    %cst_242 = arith.constant 3.200000e+01 : f32
    %325 = vector.broadcast %cst_242 : f32 to vector<8x1xf32>
    %326 = arith.divf %324, %325 : vector<8x1xf32>
    %327 = vector.broadcast %326 : vector<8x1xf32> to vector<8x32xf32>
    %328 = arith.subf %318, %327 : vector<8x32xf32>
    %329 = arith.mulf %328, %328 : vector<8x32xf32>
    %cst_243 = arith.constant dense<0.000000e+00> : vector<8xf32>
    %330 = vector.multi_reduction <add>, %329, %cst_243 [1] : vector<8x32xf32> to vector<8xf32>
    %331 = vector.shape_cast %330 : vector<8xf32> to vector<8x1xf32>
    %cst_244 = arith.constant 3.200000e+01 : f32
    %332 = vector.broadcast %cst_244 : f32 to vector<8x1xf32>
    %333 = arith.divf %331, %332 : vector<8x1xf32>
    %cst_245 = arith.constant 9.99999996E-13 : f32
    %334 = vector.broadcast %cst_245 : f32 to vector<8x1xf32>
    %335 = arith.addf %333, %334 : vector<8x1xf32>
    %336 = math.rsqrt %335 : vector<8x1xf32>
    %337 = vector.broadcast %336 : vector<8x1xf32> to vector<8x32xf32>
    %338 = arith.mulf %328, %337 : vector<8x32xf32>
    %339 = vector.broadcast %320 : vector<1x32xf32> to vector<8x32xf32>
    %340 = arith.mulf %338, %339 : vector<8x32xf32>
    %341 = vector.broadcast %322 : vector<1x32xf32> to vector<8x32xf32>
    %342 = arith.addf %340, %341 : vector<8x32xf32>
    %cst_246 = arith.constant dense<0.000000e+00> : vector<1x32xf32>
    %343 = tpu.matmul %1, %342, %cst_246 {dimension_numbers = #tpu.dot_dimension_numbers<[1], [0], [0], [1], [0, 0, 1, 1], [], []>} : vector<1x8xf32>, vector<8x32xf32>, vector<1x32xf32> -> vector<1x32xf32>
    %cst_247 = arith.constant dense<0.000000e+00> : vector<1xf32>
    %344 = vector.multi_reduction <add>, %1, %cst_247 [1] : vector<1x8xf32> to vector<1xf32>
    %345 = vector.shape_cast %344 : vector<1xf32> to vector<1x1xf32>
    %cst_248 = arith.constant 9.99999971E-10 : f32
    %346 = vector.broadcast %cst_248 : f32 to vector<1x1xf32>
    %347 = arith.maximumf %345, %346 : vector<1x1xf32>
    %348 = tpu.reciprocal %347 {approx = true} : vector<1x1xf32> -> vector<1x1xf32>
    %349 = vector.broadcast %348 : vector<1x1xf32> to vector<1x32xf32>
    %350 = arith.mulf %343, %349 : vector<1x32xf32>
    %351 = arith.mulf %350, %350 : vector<1x32xf32>
    %cst_249 = arith.constant dense<0.000000e+00> : vector<1xf32>
    %352 = vector.multi_reduction <add>, %351, %cst_249 [1] : vector<1x32xf32> to vector<1xf32>
    %353 = vector.shape_cast %352 : vector<1xf32> to vector<1x1xf32>
    %354 = math.sqrt %353 : vector<1x1xf32>
    %cst_250 = arith.constant 9.99999996E-13 : f32
    %355 = vector.broadcast %cst_250 : f32 to vector<1x1xf32>
    %356 = arith.maximumf %354, %355 : vector<1x1xf32>
    %357 = tpu.reciprocal %356 : vector<1x1xf32> -> vector<1x1xf32>
    %358 = vector.broadcast %357 : vector<1x1xf32> to vector<1x32xf32>
    %359 = arith.mulf %350, %358 : vector<1x32xf32>
    %c0_251 = arith.constant 0 : index
    %c0_252 = arith.constant 0 : index
    %c0_253 = arith.constant 0 : index
    %360 = vector.load %arg21[%c0_251, %c0_252, %c0_253] : memref<1x1x32xf32, #tpu.memory_space<vmem>>, vector<1x1x32xf32>
    %361 = vector.shape_cast %360 : vector<1x1x32xf32> to vector<1x32xf32>
    %362 = vector.shape_cast %359 : vector<1x32xf32> to vector<1x1x32xf32>
    tpu.vector_store %arg21[%c0_251, %c0_252, %c0_253], %362 {strides = array<i32>} : memref<1x1x32xf32, #tpu.memory_space<vmem>>, vector<1x1x32xf32>,
    return
  }
  func.func @transform_0(%arg0: i32) -> (i32, i32, i32) {
    %c0_i32 = arith.constant 0 : i32
    %c0_i32_0 = arith.constant 0 : i32
    %c0_i32_1 = arith.constant 0 : i32
    return %arg0, %c0_i32, %c0_i32_0 : i32, i32, i32
  }
  func.func @transform_1(%arg0: i32) -> (i32, i32, i32) {
    %c0_i32 = arith.constant 0 : i32
    %c0_i32_0 = arith.constant 0 : i32
    %c0_i32_1 = arith.constant 0 : i32
    return %arg0, %c0_i32, %c0_i32_0 : i32, i32, i32
  }
  func.func @transform_2(%arg0: i32) -> (i32, i32) {
    %c0_i32 = arith.constant 0 : i32
    %c0_i32_0 = arith.constant 0 : i32
    %c0_i32_1 = arith.constant 0 : i32
    return %c0_i32, %c0_i32_0 : i32, i32
  }
  func.func @transform_3(%arg0: i32) -> (i32, i32) {
    %c0_i32 = arith.constant 0 : i32
    %c0_i32_0 = arith.constant 0 : i32
    %c0_i32_1 = arith.constant 0 : i32
    return %c0_i32, %c0_i32_0 : i32, i32
  }
  func.func @transform_4(%arg0: i32) -> (i32, i32, i32, i32) {
    %c0_i32 = arith.constant 0 : i32
    %c0_i32_0 = arith.constant 0 : i32
    %c0_i32_1 = arith.constant 0 : i32
    %c0_i32_2 = arith.constant 0 : i32
    %c0_i32_3 = arith.constant 0 : i32
    return %c0_i32, %c0_i32_0, %c0_i32_1, %c0_i32_2 : i32, i32, i32, i32
  }
  func.func @transform_5(%arg0: i32) -> (i32, i32, i32, i32) {
    %c0_i32 = arith.constant 0 : i32
    %c0_i32_0 = arith.constant 0 : i32
    %c0_i32_1 = arith.constant 0 : i32
    %c0_i32_2 = arith.constant 0 : i32
    %c0_i32_3 = arith.constant 0 : i32
    return %c0_i32, %c0_i32_0, %c0_i32_1, %c0_i32_2 : i32, i32, i32, i32
  }
  func.func @transform_6(%arg0: i32) -> (i32, i32, i32, i32) {
    %c0_i32 = arith.constant 0 : i32
    %c0_i32_0 = arith.constant 0 : i32
    %c0_i32_1 = arith.constant 0 : i32
    %c0_i32_2 = arith.constant 0 : i32
    %c0_i32_3 = arith.constant 0 : i32
    return %c0_i32, %c0_i32_0, %c0_i32_1, %c0_i32_2 : i32, i32, i32, i32
  }
  func.func @transform_7(%arg0: i32) -> (i32, i32, i32, i32) {
    %c0_i32 = arith.constant 0 : i32
    %c0_i32_0 = arith.constant 0 : i32
    %c0_i32_1 = arith.constant 0 : i32
    %c0_i32_2 = arith.constant 0 : i32
    %c0_i32_3 = arith.constant 0 : i32
    return %c0_i32, %c0_i32_0, %c0_i32_1, %c0_i32_2 : i32, i32, i32, i32
  }
  func.func @transform_8(%arg0: i32) -> (i32, i32, i32, i32) {
    %c0_i32 = arith.constant 0 : i32
    %c0_i32_0 = arith.constant 0 : i32
    %c0_i32_1 = arith.constant 0 : i32
    %c0_i32_2 = arith.constant 0 : i32
    %c0_i32_3 = arith.constant 0 : i32
    return %c0_i32, %c0_i32_0, %c0_i32_1, %c0_i32_2 : i32, i32, i32, i32
  }
  func.func @transform_9(%arg0: i32) -> (i32, i32, i32, i32) {
    %c0_i32 = arith.constant 0 : i32
    %c0_i32_0 = arith.constant 0 : i32
    %c0_i32_1 = arith.constant 0 : i32
    %c0_i32_2 = arith.constant 0 : i32
    %c0_i32_3 = arith.constant 0 : i32
    return %c0_i32, %c0_i32_0, %c0_i32_1, %c0_i32_2 : i32, i32, i32, i32
  }
  func.func @transform_10(%arg0: i32) -> (i32, i32, i32) {
    %c0_i32 = arith.constant 0 : i32
    %c0_i32_0 = arith.constant 0 : i32
    %c0_i32_1 = arith.constant 0 : i32
    %c0_i32_2 = arith.constant 0 : i32
    return %c0_i32, %c0_i32_0, %c0_i32_1 : i32, i32, i32
  }
  func.func @transform_11(%arg0: i32) -> (i32, i32, i32) {
    %c0_i32 = arith.constant 0 : i32
    %c0_i32_0 = arith.constant 0 : i32
    %c0_i32_1 = arith.constant 0 : i32
    %c0_i32_2 = arith.constant 0 : i32
    return %c0_i32, %c0_i32_0, %c0_i32_1 : i32, i32, i32
  }
  func.func @transform_12(%arg0: i32) -> (i32, i32, i32) {
    %c0_i32 = arith.constant 0 : i32
    %c0_i32_0 = arith.constant 0 : i32
    %c0_i32_1 = arith.constant 0 : i32
    %c0_i32_2 = arith.constant 0 : i32
    return %c0_i32, %c0_i32_0, %c0_i32_1 : i32, i32, i32
  }
  func.func @transform_13(%arg0: i32) -> (i32, i32, i32) {
    %c0_i32 = arith.constant 0 : i32
    %c0_i32_0 = arith.constant 0 : i32
    %c0_i32_1 = arith.constant 0 : i32
    %c0_i32_2 = arith.constant 0 : i32
    return %c0_i32, %c0_i32_0, %c0_i32_1 : i32, i32, i32
  }
  func.func @transform_14(%arg0: i32) -> (i32, i32, i32) {
    %c0_i32 = arith.constant 0 : i32
    %c0_i32_0 = arith.constant 0 : i32
    %c0_i32_1 = arith.constant 0 : i32
    %c0_i32_2 = arith.constant 0 : i32
    return %c0_i32, %c0_i32_0, %c0_i32_1 : i32, i32, i32
  }
  func.func @transform_15(%arg0: i32) -> (i32, i32, i32) {
    %c0_i32 = arith.constant 0 : i32
    %c0_i32_0 = arith.constant 0 : i32
    %c0_i32_1 = arith.constant 0 : i32
    %c0_i32_2 = arith.constant 0 : i32
    return %c0_i32, %c0_i32_0, %c0_i32_1 : i32, i32, i32
  }
  func.func @transform_16(%arg0: i32) -> (i32, i32, i32) {
    %c0_i32 = arith.constant 0 : i32
    %c0_i32_0 = arith.constant 0 : i32
    %c0_i32_1 = arith.constant 0 : i32
    %c0_i32_2 = arith.constant 0 : i32
    return %c0_i32, %c0_i32_0, %c0_i32_1 : i32, i32, i32
  }
  func.func @transform_17(%arg0: i32) -> (i32, i32, i32) {
    %c0_i32 = arith.constant 0 : i32
    %c0_i32_0 = arith.constant 0 : i32
    %c0_i32_1 = arith.constant 0 : i32
    %c0_i32_2 = arith.constant 0 : i32
    return %c0_i32, %c0_i32_0, %c0_i32_1 : i32, i32, i32
  }
  func.func @transform_18(%arg0: i32) -> (i32, i32, i32) {
    %c0_i32 = arith.constant 0 : i32
    %c0_i32_0 = arith.constant 0 : i32
    %c0_i32_1 = arith.constant 0 : i32
    %c0_i32_2 = arith.constant 0 : i32
    return %c0_i32, %c0_i32_0, %c0_i32_1 : i32, i32, i32
  }
  func.func @transform_19(%arg0: i32) -> (i32, i32, i32) {
    %c0_i32 = arith.constant 0 : i32
    %c0_i32_0 = arith.constant 0 : i32
    %c0_i32_1 = arith.constant 0 : i32
    %c0_i32_2 = arith.constant 0 : i32
    return %c0_i32, %c0_i32_0, %c0_i32_1 : i32, i32, i32
  }
  func.func @transform_20(%arg0: i32) -> (i32, i32, i32) {
    %c0_i32 = arith.constant 0 : i32
    %c0_i32_0 = arith.constant 0 : i32
    %c0_i32_1 = arith.constant 0 : i32
    return %arg0, %c0_i32, %c0_i32_0 : i32, i32, i32
  }
}

</mosaic_0001>

<llo_original>
// kernel: dense_retriever_bert_forward.1
$region0: #{dense_retriever_bert_forward.1}
  #allocation0 [shape = 'u32[]', space=smem, size = 0x4, offset = 0x4, fixed_abs, tag = 'smem constant byte address 0x4 - core index']
  #allocation1 [shape = 'u32[144,128]{1,0:T(1,128)}', space=vmem, size = 0x12000, scoped, tag = 'internal scratch']
  #allocation2 [shape = 'f32[8,32]{1,0:T(8,128)}', space=vmem, size = 0x1000, scoped, tag = 'scratch operand']
  %s0 = inlined_call_operand.vmem [shape: f32[2,8,32], index: 0, kind: input, shape index: {}]
  %s1 = inlined_call_operand.vmem [shape: f32[2,1,8], index: 1, kind: input, shape index: {}]
  %s2 = inlined_call_operand.vmem [shape: f32[1,32], index: 2, kind: input, shape index: {}]
  %s3 = inlined_call_operand.vmem [shape: f32[1,32], index: 3, kind: input, shape index: {}]
  %s4 = inlined_call_operand.vmem [shape: f32[2,2,32,16], index: 4, kind: input, shape index: {}]
  %s5 = inlined_call_operand.vmem [shape: f32[2,2,1,16], index: 5, kind: input, shape index: {}]
  %s6 = inlined_call_operand.vmem [shape: f32[2,2,32,16], index: 6, kind: input, shape index: {}]
  %s7 = inlined_call_operand.vmem [shape: f32[2,2,1,16], index: 7, kind: input, shape index: {}]
  %s8 = inlined_call_operand.vmem [shape: f32[2,2,32,16], index: 8, kind: input, shape index: {}]
  %s9 = inlined_call_operand.vmem [shape: f32[2,2,1,16], index: 9, kind: input, shape index: {}]
  %s10 = inlined_call_operand.vmem [shape: f32[2,32,32], index: 10, kind: input, shape index: {}]
  %s11 = inlined_call_operand.vmem [shape: f32[2,1,32], index: 11, kind: input, shape index: {}]
  %s12 = inlined_call_operand.vmem [shape: f32[2,1,32], index: 12, kind: input, shape index: {}]
  %s13 = inlined_call_operand.vmem [shape: f32[2,1,32], index: 13, kind: input, shape index: {}]
  %s14 = inlined_call_operand.vmem [shape: f32[2,32,64], index: 14, kind: input, shape index: {}]
  %s15 = inlined_call_operand.vmem [shape: f32[2,1,64], index: 15, kind: input, shape index: {}]
  %s16 = inlined_call_operand.vmem [shape: f32[2,64,32], index: 16, kind: input, shape index: {}]
  %s17 = inlined_call_operand.vmem [shape: f32[2,1,32], index: 17, kind: input, shape index: {}]
  %s18 = inlined_call_operand.vmem [shape: f32[2,1,32], index: 18, kind: input, shape index: {}]
  %s19 = inlined_call_operand.vmem [shape: f32[2,1,32], index: 19, kind: input, shape index: {}]
  %s20 = inlined_call_operand.hbm [shape: f32[2,1,32], index: 20, kind: output, shape index: {}]
  %s21 = sld [smem:[#allocation0]]
  $region113: #{dense_retriever_bert_forward.1} parent=0
    _
  %s23 = ssub.s32 1, %s21
  %s24 = scalar_select 0, %s23, %s21
  $region1: #{dense_retriever_bert_forward.1} parent=0
    #allocation3 [shape = 'u8[1024]{0}', space=vmem, size = 0x400, scoped, tag = 'output window, operand 0']
    #allocation4 [shape = 's32[2]{0}', space=sflag, size = 0x8, scoped, tag = 'scoped memory for dense_retriever_bert_forward.1']
    %25 = vsyncpa [#allocation4], 0
    %s26 = scalar_lea.sflag [#allocation4], 1
    %27 = vsyncpa %s26, 0
    loop: start=0, step=1, limit=4
    $region2: #{dense_retriever_bert_forward.1} parent=1 // loop_pre_header
      _
    $region3: #{dense_retriever_bert_forward.1} parent=1 // loop_header
      %s29 = sphi 0, %s33
      %p30 = scmp.ge.s32.totalorder %s29, 4
      %s39 = sphi 0, %s41
      %s42 = sphi 0, %s39
      %s43 = sphi 0, %s42
      %s59 = sphi 0, %s43
      %s65 = sphi 0, %s67
      %s68 = sphi 0, %s65
      %s69 = sphi 0, %s68
      %s85 = sphi 0, %s69
      %s89 = sphi 0, %s89
      %s91 = sphi 0, %s89
      %s92 = sphi 0, %s91
      %s106 = sphi 0, %s92
      %s110 = sphi 0, %s110
      %s112 = sphi 0, %s110
      %s113 = sphi 0, %s112
      %s127 = sphi 0, %s113
      %s131 = sphi 0, %s131
      %s133 = sphi 0, %s131
      %s134 = sphi 0, %s133
      %s148 = sphi 0, %s134
      %s152 = sphi 0, %s152
      %s154 = sphi 0, %s152
      %s155 = sphi 0, %s154
      %s169 = sphi 0, %s155
      %s173 = sphi 0, %s173
      %s175 = sphi 0, %s173
      %s176 = sphi 0, %s175
      %s190 = sphi 0, %s176
      %s194 = sphi 0, %s194
      %s196 = sphi 0, %s194
      %s197 = sphi 0, %s196
      %s211 = sphi 0, %s197
      %s215 = sphi 0, %s215
      %s217 = sphi 0, %s215
      %s218 = sphi 0, %s217
      %s232 = sphi 0, %s218
      %s236 = sphi 0, %s236
      %s238 = sphi 0, %s236
      %s239 = sphi 0, %s238
      %s253 = sphi 0, %s239
      %s257 = sphi 0, %s257
      %s259 = sphi 0, %s257
      %s260 = sphi 0, %s259
      %s274 = sphi 0, %s260
      %s278 = sphi 0, %s278
      %s280 = sphi 0, %s278
      %s281 = sphi 0, %s280
      %s295 = sphi 0, %s281
      %s299 = sphi 0, %s299
      %s301 = sphi 0, %s299
      %s302 = sphi 0, %s301
      %s316 = sphi 0, %s302
      %s320 = sphi 0, %s320
      %s322 = sphi 0, %s320
      %s323 = sphi 0, %s322
      %s337 = sphi 0, %s323
      %s341 = sphi 0, %s341
      %s343 = sphi 0, %s341
      %s344 = sphi 0, %s343
      %s358 = sphi 0, %s344
      %s362 = sphi 0, %s362
      %s364 = sphi 0, %s362
      %s365 = sphi 0, %s364
      %s379 = sphi 0, %s365
      %s383 = sphi 0, %s383
      %s385 = sphi 0, %s383
      %s386 = sphi 0, %s385
      %s400 = sphi 0, %s386
      %s404 = sphi 0, %s404
      %s406 = sphi 0, %s404
      %s407 = sphi 0, %s406
      %s421 = sphi 0, %s407
      %s425 = sphi 0, %s425
      %s427 = sphi 0, %s425
      %s428 = sphi 0, %s427
      %s442 = sphi 0, %s428
      %s446 = sphi 0, %s446
      %s448 = sphi 0, %s446
      %s449 = sphi 0, %s448
      %s463 = sphi 0, %s449
      %s469 = sphi 0, %s471
      %s472 = sphi 0, %s469
      %s473 = sphi 0, %s472
      %s489 = sphi 0, %s473
    $region4: #{dense_retriever_bert_forward.1} parent=1 // loop_header_branch
      %32 = sbr.rel (%p30) target = $region8
    $region5: #{dense_retriever_bert_forward.1} parent=1 // loop_body
      %s34 = ssub.s32 %s29, 1
      %s35 = ssub.s32 %s29, 2
      %s36 = sadd.s32 %s29, 1
      %s37 = ssub.s32 %s29, %s36
      %p38 = scmp.eq.s32.totalorder %s37, 0
      %s40 = sadd.s32 %s39, 1
      %s41 = scalar_select %p38, %s39, %s40
      %p44 = pneg %p38
      %p45 = scmp.eq.s32.totalorder %s29, 1
      %p46 = por %p44, %p45
      %p47 = scmp.ne.s32.totalorder %s39, %s42
      %p48 = scmp.eq.s32.totalorder %s29, 0
      %p49 = por %p47, %p48
      %p50 = scmp.ne.s32.totalorder %s39, %s42
      %p51 = scmp.eq.s32.totalorder %s34, 1
      %p52 = por %p50, %p51
      %p53 = scmp.ne.s32.totalorder %s42, %s43
      %p54 = scmp.eq.s32.totalorder %s34, 0
      %p55 = por %p53, %p54
      %p56 = scmp.ne.s32.totalorder %s42, %s43
      %p57 = scmp.eq.s32.totalorder %s35, 1
      %p58 = por %p56, %p57
      %p60 = scmp.ne.s32.totalorder %s43, %s59
      %p61 = scmp.eq.s32.totalorder %s35, 0
      %p62 = por %p60, %p61
      %s63 = ssub.s32 %s29, %s36
      %p64 = scmp.eq.s32.totalorder %s63, 0
      %s66 = sadd.s32 %s65, 1
      %s67 = scalar_select %p64, %s65, %s66
      %p70 = pneg %p64
      %p71 = scmp.eq.s32.totalorder %s29, 1
      %p72 = por %p70, %p71
      %p73 = scmp.ne.s32.totalorder %s65, %s68
      %p74 = scmp.eq.s32.totalorder %s29, 0
      %p75 = por %p73, %p74
      %p76 = scmp.ne.s32.totalorder %s65, %s68
      %p77 = scmp.eq.s32.totalorder %s34, 1
      %p78 = por %p76, %p77
      %p79 = scmp.ne.s32.totalorder %s68, %s69
      %p80 = scmp.eq.s32.totalorder %s34, 0
      %p81 = por %p79, %p80
      %p82 = scmp.ne.s32.totalorder %s68, %s69
      %p83 = scmp.eq.s32.totalorder %s35, 1
      %p84 = por %p82, %p83
      %p86 = scmp.ne.s32.totalorder %s69, %s85
      %p87 = scmp.eq.s32.totalorder %s35, 0
      %p88 = por %p86, %p87
      %s90 = sadd.s32 %s89, 1
      %p93 = scmp.eq.s32.totalorder %s29, 1
      %p94 = scmp.ne.s32.totalorder %s89, %s91
      %p95 = scmp.eq.s32.totalorder %s29, 0
      %p96 = por %p94, %p95
      %p97 = scmp.ne.s32.totalorder %s89, %s91
      %p98 = scmp.eq.s32.totalorder %s34, 1
      %p99 = por %p97, %p98
      %p100 = scmp.ne.s32.totalorder %s91, %s92
      %p101 = scmp.eq.s32.totalorder %s34, 0
      %p102 = por %p100, %p101
      %p103 = scmp.ne.s32.totalorder %s91, %s92
      %p104 = scmp.eq.s32.totalorder %s35, 1
      %p105 = por %p103, %p104
      %p107 = scmp.ne.s32.totalorder %s92, %s106
      %p108 = scmp.eq.s32.totalorder %s35, 0
      %p109 = por %p107, %p108
      %s111 = sadd.s32 %s110, 1
      %p114 = scmp.eq.s32.totalorder %s29, 1
      %p115 = scmp.ne.s32.totalorder %s110, %s112
      %p116 = scmp.eq.s32.totalorder %s29, 0
      %p117 = por %p115, %p116
      %p118 = scmp.ne.s32.totalorder %s110, %s112
      %p119 = scmp.eq.s32.totalorder %s34, 1
      %p120 = por %p118, %p119
      %p121 = scmp.ne.s32.totalorder %s112, %s113
      %p122 = scmp.eq.s32.totalorder %s34, 0
      %p123 = por %p121, %p122
      %p124 = scmp.ne.s32.totalorder %s112, %s113
      %p125 = scmp.eq.s32.totalorder %s35, 1
      %p126 = por %p124, %p125
      %p128 = scmp.ne.s32.totalorder %s113, %s127
      %p129 = scmp.eq.s32.totalorder %s35, 0
      %p130 = por %p128, %p129
      %s132 = sadd.s32 %s131, 1
      %p135 = scmp.eq.s32.totalorder %s29, 1
      %p136 = scmp.ne.s32.totalorder %s131, %s133
      %p137 = scmp.eq.s32.totalorder %s29, 0
      %p138 = por %p136, %p137
      %p139 = scmp.ne.s32.totalorder %s131, %s133
      %p140 = scmp.eq.s32.totalorder %s34, 1
      %p141 = por %p139, %p140
      %p142 = scmp.ne.s32.totalorder %s133, %s134
      %p143 = scmp.eq.s32.totalorder %s34, 0
      %p144 = por %p142, %p143
      %p145 = scmp.ne.s32.totalorder %s133, %s134
      %p146 = scmp.eq.s32.totalorder %s35, 1
      %p147 = por %p145, %p146
      %p149 = scmp.ne.s32.totalorder %s134, %s148
      %p150 = scmp.eq.s32.totalorder %s35, 0
      %p151 = por %p149, %p150
      %s153 = sadd.s32 %s152, 1
      %p156 = scmp.eq.s32.totalorder %s29, 1
      %p157 = scmp.ne.s32.totalorder %s152, %s154
      %p158 = scmp.eq.s32.totalorder %s29, 0
      %p159 = por %p157, %p158
      %p160 = scmp.ne.s32.totalorder %s152, %s154
      %p161 = scmp.eq.s32.totalorder %s34, 1
      %p162 = por %p160, %p161
      %p163 = scmp.ne.s32.totalorder %s154, %s155
      %p164 = scmp.eq.s32.totalorder %s34, 0
      %p165 = por %p163, %p164
      %p166 = scmp.ne.s32.totalorder %s154, %s155
      %p167 = scmp.eq.s32.totalorder %s35, 1
      %p168 = por %p166, %p167
      %p170 = scmp.ne.s32.totalorder %s155, %s169
      %p171 = scmp.eq.s32.totalorder %s35, 0
      %p172 = por %p170, %p171
      %s174 = sadd.s32 %s173, 1
      %p177 = scmp.eq.s32.totalorder %s29, 1
      %p178 = scmp.ne.s32.totalorder %s173, %s175
      %p179 = scmp.eq.s32.totalorder %s29, 0
      %p180 = por %p178, %p179
      %p181 = scmp.ne.s32.totalorder %s173, %s175
      %p182 = scmp.eq.s32.totalorder %s34, 1
      %p183 = por %p181, %p182
      %p184 = scmp.ne.s32.totalorder %s175, %s176
      %p185 = scmp.eq.s32.totalorder %s34, 0
      %p186 = por %p184, %p185
      %p187 = scmp.ne.s32.totalorder %s175, %s176
      %p188 = scmp.eq.s32.totalorder %s35, 1
      %p189 = por %p187, %p188
      %p191 = scmp.ne.s32.totalorder %s176, %s190
      %p192 = scmp.eq.s32.totalorder %s35, 0
      %p193 = por %p191, %p192
      %s195 = sadd.s32 %s194, 1
      %p198 = scmp.eq.s32.totalorder %s29, 1
      %p199 = scmp.ne.s32.totalorder %s194, %s196
      %p200 = scmp.eq.s32.totalorder %s29, 0
      %p201 = por %p199, %p200
      %p202 = scmp.ne.s32.totalorder %s194, %s196
      %p203 = scmp.eq.s32.totalorder %s34, 1
      %p204 = por %p202, %p203
      %p205 = scmp.ne.s32.totalorder %s196, %s197
      %p206 = scmp.eq.s32.totalorder %s34, 0
      %p207 = por %p205, %p206
      %p208 = scmp.ne.s32.totalorder %s196, %s197
      %p209 = scmp.eq.s32.totalorder %s35, 1
      %p210 = por %p208, %p209
      %p212 = scmp.ne.s32.totalorder %s197, %s211
      %p213 = scmp.eq.s32.totalorder %s35, 0
      %p214 = por %p212, %p213
      %s216 = sadd.s32 %s215, 1
      %p219 = scmp.eq.s32.totalorder %s29, 1
      %p220 = scmp.ne.s32.totalorder %s215, %s217
      %p221 = scmp.eq.s32.totalorder %s29, 0
      %p222 = por %p220, %p221
      %p223 = scmp.ne.s32.totalorder %s215, %s217
      %p224 = scmp.eq.s32.totalorder %s34, 1
      %p225 = por %p223, %p224
      %p226 = scmp.ne.s32.totalorder %s217, %s218
      %p227 = scmp.eq.s32.totalorder %s34, 0
      %p228 = por %p226, %p227
      %p229 = scmp.ne.s32.totalorder %s217, %s218
      %p230 = scmp.eq.s32.totalorder %s35, 1
      %p231 = por %p229, %p230
      %p233 = scmp.ne.s32.totalorder %s218, %s232
      %p234 = scmp.eq.s32.totalorder %s35, 0
      %p235 = por %p233, %p234
      %s237 = sadd.s32 %s236, 1
      %p240 = scmp.eq.s32.totalorder %s29, 1
      %p241 = scmp.ne.s32.totalorder %s236, %s238
      %p242 = scmp.eq.s32.totalorder %s29, 0
      %p243 = por %p241, %p242
      %p244 = scmp.ne.s32.totalorder %s236, %s238
      %p245 = scmp.eq.s32.totalorder %s34, 1
      %p246 = por %p244, %p245
      %p247 = scmp.ne.s32.totalorder %s238, %s239
      %p248 = scmp.eq.s32.totalorder %s34, 0
      %p249 = por %p247, %p248
      %p250 = scmp.ne.s32.totalorder %s238, %s239
      %p251 = scmp.eq.s32.totalorder %s35, 1
      %p252 = por %p250, %p251
      %p254 = scmp.ne.s32.totalorder %s239, %s253
      %p255 = scmp.eq.s32.totalorder %s35, 0
      %p256 = por %p254, %p255
      %s258 = sadd.s32 %s257, 1
      %p261 = scmp.eq.s32.totalorder %s29, 1
      %p262 = scmp.ne.s32.totalorder %s257, %s259
      %p263 = scmp.eq.s32.totalorder %s29, 0
      %p264 = por %p262, %p263
      %p265 = scmp.ne.s32.totalorder %s257, %s259
      %p266 = scmp.eq.s32.totalorder %s34, 1
      %p267 = por %p265, %p266
      %p268 = scmp.ne.s32.totalorder %s259, %s260
      %p269 = scmp.eq.s32.totalorder %s34, 0
      %p270 = por %p268, %p269
      %p271 = scmp.ne.s32.totalorder %s259, %s260
      %p272 = scmp.eq.s32.totalorder %s35, 1
      %p273 = por %p271, %p272
      %p275 = scmp.ne.s32.totalorder %s260, %s274
      %p276 = scmp.eq.s32.totalorder %s35, 0
      %p277 = por %p275, %p276
      %s279 = sadd.s32 %s278, 1
      %p282 = scmp.eq.s32.totalorder %s29, 1
      %p283 = scmp.ne.s32.totalorder %s278, %s280
      %p284 = scmp.eq.s32.totalorder %s29, 0
      %p285 = por %p283, %p284
      %p286 = scmp.ne.s32.totalorder %s278, %s280
      %p287 = scmp.eq.s32.totalorder %s34, 1
      %p288 = por %p286, %p287
      %p289 = scmp.ne.s32.totalorder %s280, %s281
      %p290 = scmp.eq.s32.totalorder %s34, 0
      %p291 = por %p289, %p290
      %p292 = scmp.ne.s32.totalorder %s280, %s281
      %p293 = scmp.eq.s32.totalorder %s35, 1
      %p294 = por %p292, %p293
      %p296 = scmp.ne.s32.totalorder %s281, %s295
      %p297 = scmp.eq.s32.totalorder %s35, 0
      %p298 = por %p296, %p297
      %s300 = sadd.s32 %s299, 1
      %p303 = scmp.eq.s32.totalorder %s29, 1
      %p304 = scmp.ne.s32.totalorder %s299, %s301
      %p305 = scmp.eq.s32.totalorder %s29, 0
      %p306 = por %p304, %p305
      %p307 = scmp.ne.s32.totalorder %s299, %s301
      %p308 = scmp.eq.s32.totalorder %s34, 1
      %p309 = por %p307, %p308
      %p310 = scmp.ne.s32.totalorder %s301, %s302
      %p311 = scmp.eq.s32.totalorder %s34, 0
      %p312 = por %p310, %p311
      %p313 = scmp.ne.s32.totalorder %s301, %s302
      %p314 = scmp.eq.s32.totalorder %s35, 1
      %p315 = por %p313, %p314
      %p317 = scmp.ne.s32.totalorder %s302, %s316
      %p318 = scmp.eq.s32.totalorder %s35, 0
      %p319 = por %p317, %p318
      %s321 = sadd.s32 %s320, 1
      %p324 = scmp.eq.s32.totalorder %s29, 1
      %p325 = scmp.ne.s32.totalorder %s320, %s322
      %p326 = scmp.eq.s32.totalorder %s29, 0
      %p327 = por %p325, %p326
      %p328 = scmp.ne.s32.totalorder %s320, %s322
      %p329 = scmp.eq.s32.totalorder %s34, 1
      %p330 = por %p328, %p329
      %p331 = scmp.ne.s32.totalorder %s322, %s323
      %p332 = scmp.eq.s32.totalorder %s34, 0
      %p333 = por %p331, %p332
      %p334 = scmp.ne.s32.totalorder %s322, %s323
      %p335 = scmp.eq.s32.totalorder %s35, 1
      %p336 = por %p334, %p335
      %p338 = scmp.ne.s32.totalorder %s323, %s337
      %p339 = scmp.eq.s32.totalorder %s35, 0
      %p340 = por %p338, %p339
      %s342 = sadd.s32 %s341, 1
      %p345 = scmp.eq.s32.totalorder %s29, 1
      %p346 = scmp.ne.s32.totalorder %s341, %s343
      %p347 = scmp.eq.s32.totalorder %s29, 0
      %p348 = por %p346, %p347
      %p349 = scmp.ne.s32.totalorder %s341, %s343
      %p350 = scmp.eq.s32.totalorder %s34, 1
      %p351 = por %p349, %p350
      %p352 = scmp.ne.s32.totalorder %s343, %s344
      %p353 = scmp.eq.s32.totalorder %s34, 0
      %p354 = por %p352, %p353
      %p355 = scmp.ne.s32.totalorder %s343, %s344
      %p356 = scmp.eq.s32.totalorder %s35, 1
      %p357 = por %p355, %p356
      %p359 = scmp.ne.s32.totalorder %s344, %s358
      %p360 = scmp.eq.s32.totalorder %s35, 0
      %p361 = por %p359, %p360
      %s363 = sadd.s32 %s362, 1
      %p366 = scmp.eq.s32.totalorder %s29, 1
      %p367 = scmp.ne.s32.totalorder %s362, %s364
      %p368 = scmp.eq.s32.totalorder %s29, 0
      %p369 = por %p367, %p368
      %p370 = scmp.ne.s32.totalorder %s362, %s364
      %p371 = scmp.eq.s32.totalorder %s34, 1
      %p372 = por %p370, %p371
      %p373 = scmp.ne.s32.totalorder %s364, %s365
      %p374 = scmp.eq.s32.totalorder %s34, 0
      %p375 = por %p373, %p374
      %p376 = scmp.ne.s32.totalorder %s364, %s365
      %p377 = scmp.eq.s32.totalorder %s35, 1
      %p378 = por %p376, %p377
      %p380 = scmp.ne.s32.totalorder %s365, %s379
      %p381 = scmp.eq.s32.totalorder %s35, 0
      %p382 = por %p380, %p381
      %s384 = sadd.s32 %s383, 1
      %p387 = scmp.eq.s32.totalorder %s29, 1
      %p388 = scmp.ne.s32.totalorder %s383, %s385
      %p389 = scmp.eq.s32.totalorder %s29, 0
      %p390 = por %p388, %p389
      %p391 = scmp.ne.s32.totalorder %s383, %s385
      %p392 = scmp.eq.s32.totalorder %s34, 1
      %p393 = por %p391, %p392
      %p394 = scmp.ne.s32.totalorder %s385, %s386
      %p395 = scmp.eq.s32.totalorder %s34, 0
      %p396 = por %p394, %p395
      %p397 = scmp.ne.s32.totalorder %s385, %s386
      %p398 = scmp.eq.s32.totalorder %s35, 1
      %p399 = por %p397, %p398
      %p401 = scmp.ne.s32.totalorder %s386, %s400
      %p402 = scmp.eq.s32.totalorder %s35, 0
      %p403 = por %p401, %p402
      %s405 = sadd.s32 %s404, 1
      %p408 = scmp.eq.s32.totalorder %s29, 1
      %p409 = scmp.ne.s32.totalorder %s404, %s406
      %p410 = scmp.eq.s32.totalorder %s29, 0
      %p411 = por %p409, %p410
      %p412 = scmp.ne.s32.totalorder %s404, %s406
      %p413 = scmp.eq.s32.totalorder %s34, 1
      %p414 = por %p412, %p413
      %p415 = scmp.ne.s32.totalorder %s406, %s407
      %p416 = scmp.eq.s32.totalorder %s34, 0
      %p417 = por %p415, %p416
      %p418 = scmp.ne.s32.totalorder %s406, %s407
      %p419 = scmp.eq.s32.totalorder %s35, 1
      %p420 = por %p418, %p419
      %p422 = scmp.ne.s32.totalorder %s407, %s421
      %p423 = scmp.eq.s32.totalorder %s35, 0
      %p424 = por %p422, %p423
      %s426 = sadd.s32 %s425, 1
      %p429 = scmp.eq.s32.totalorder %s29, 1
      %p430 = scmp.ne.s32.totalorder %s425, %s427
      %p431 = scmp.eq.s32.totalorder %s29, 0
      %p432 = por %p430, %p431
      %p433 = scmp.ne.s32.totalorder %s425, %s427
      %p434 = scmp.eq.s32.totalorder %s34, 1
      %p435 = por %p433, %p434
      %p436 = scmp.ne.s32.totalorder %s427, %s428
      %p437 = scmp.eq.s32.totalorder %s34, 0
      %p438 = por %p436, %p437
      %p439 = scmp.ne.s32.totalorder %s427, %s428
      %p440 = scmp.eq.s32.totalorder %s35, 1
      %p441 = por %p439, %p440
      %p443 = scmp.ne.s32.totalorder %s428, %s442
      %p444 = scmp.eq.s32.totalorder %s35, 0
      %p445 = por %p443, %p444
      %s447 = sadd.s32 %s446, 1
      %p450 = scmp.eq.s32.totalorder %s29, 1
      %p451 = scmp.ne.s32.totalorder %s446, %s448
      %p452 = scmp.eq.s32.totalorder %s29, 0
      %p453 = por %p451, %p452
      %p454 = scmp.ne.s32.totalorder %s446, %s448
      %p455 = scmp.eq.s32.totalorder %s34, 1
      %p456 = por %p454, %p455
      %p457 = scmp.ne.s32.totalorder %s448, %s449
      %p458 = scmp.eq.s32.totalorder %s34, 0
      %p459 = por %p457, %p458
      %p460 = scmp.ne.s32.totalorder %s448, %s449
      %p461 = scmp.eq.s32.totalorder %s35, 1
      %p462 = por %p460, %p461
      %p464 = scmp.ne.s32.totalorder %s449, %s463
      %p465 = scmp.eq.s32.totalorder %s35, 0
      %p466 = por %p464, %p465
      %s467 = ssub.s32 %s29, %s36
      %p468 = scmp.eq.s32.totalorder %s467, 0
      %s470 = sadd.s32 %s469, 1
      %s471 = scalar_select %p468, %s469, %s470
      %p474 = pneg %p468
      %p475 = scmp.eq.s32.totalorder %s29, 1
      %p476 = por %p474, %p475
      %p477 = scmp.ne.s32.totalorder %s469, %s472
      %p478 = scmp.eq.s32.totalorder %s29, 0
      %p479 = por %p477, %p478
      %p480 = scmp.ne.s32.totalorder %s469, %s472
      %p481 = scmp.eq.s32.totalorder %s34, 1
      %p482 = por %p480, %p481
      %p483 = scmp.ne.s32.totalorder %s472, %s473
      %p484 = scmp.eq.s32.totalorder %s34, 0
      %p485 = por %p483, %p484
      %p486 = scmp.ne.s32.totalorder %s472, %s473
      %p487 = scmp.eq.s32.totalorder %s35, 1
      %p488 = por %p486, %p487
      %p490 = scmp.ne.s32.totalorder %s473, %s489
      %p491 = scmp.eq.s32.totalorder %s35, 0
      %p492 = por %p490, %p491
      %p493 = scmp.le.s32.totalorder 1, %s29
      %p494 = scmp.lt.s32.totalorder %s29, 3
      %p495 = pnand %p493, %p494
      %p496 = pneg %p495
      // Predicated region
      $region9: #{dense_retriever_bert_forward.1} parent=5 // pred_check
        _
      $region10: #{dense_retriever_bert_forward.1} parent=5 // pred_check_branch
        %498 = sbr.rel (%p495) target = $region12
      $region11: #{dense_retriever_bert_forward.1} parent=5 // pred_region
        %s499 = ssub.s32 %s29, 1
        // Predicated region
        $region13: #{dense_retriever_bert_forward.1} parent=11 // pred_check
          %p500 = pneg %p102
        $region14: #{dense_retriever_bert_forward.1} parent=11 // pred_check_branch
          %502 = sbr.rel (%p500) target = $region16
        $region15: #{dense_retriever_bert_forward.1} parent=11 // pred_region
          _
        $region16: #{dense_retriever_bert_forward.1} parent=11 // pred_fallthru
          _
        // Predicated region
        $region17: #{dense_retriever_bert_forward.1} parent=11 // pred_check
          %p503 = pneg %p123
        $region18: #{dense_retriever_bert_forward.1} parent=11 // pred_check_branch
          %505 = sbr.rel (%p503) target = $region20
        $region19: #{dense_retriever_bert_forward.1} parent=11 // pred_region
          _
        $region20: #{dense_retriever_bert_forward.1} parent=11 // pred_fallthru
          _
        // Predicated region
        $region21: #{dense_retriever_bert_forward.1} parent=11 // pred_check
          %p506 = pneg %p144
        $region22: #{dense_retriever_bert_forward.1} parent=11 // pred_check_branch
          %508 = sbr.rel (%p506) target = $region24
        $region23: #{dense_retriever_bert_forward.1} parent=11 // pred_region
          _
        $region24: #{dense_retriever_bert_forward.1} parent=11 // pred_fallthru
          _
        // Predicated region
        $region25: #{dense_retriever_bert_forward.1} parent=11 // pred_check
          %p509 = pneg %p165
        $region26: #{dense_retriever_bert_forward.1} parent=11 // pred_check_branch
          %511 = sbr.rel (%p509) target = $region28
        $region27: #{dense_retriever_bert_forward.1} parent=11 // pred_region
          _
        $region28: #{dense_retriever_bert_forward.1} parent=11 // pred_fallthru
          _
        // Predicated region
        $region29: #{dense_retriever_bert_forward.1} parent=11 // pred_check
          %p512 = pneg %p186
        $region30: #{dense_retriever_bert_forward.1} parent=11 // pred_check_branch
          %514 = sbr.rel (%p512) target = $region32
        $region31: #{dense_retriever_bert_forward.1} parent=11 // pred_region
          _
        $region32: #{dense_retriever_bert_forward.1} parent=11 // pred_fallthru
          _
        // Predicated region
        $region33: #{dense_retriever_bert_forward.1} parent=11 // pred_check
          %p515 = pneg %p207
        $region34: #{dense_retriever_bert_forward.1} parent=11 // pred_check_branch
          %517 = sbr.rel (%p515) target = $region36
        $region35: #{dense_retriever_bert_forward.1} parent=11 // pred_region
          _
        $region36: #{dense_retriever_bert_forward.1} parent=11 // pred_fallthru
          _
        // Predicated region
        $region37: #{dense_retriever_bert_forward.1} parent=11 // pred_check
          %p518 = pneg %p228
        $region38: #{dense_retriever_bert_forward.1} parent=11 // pred_check_branch
          %520 = sbr.rel (%p518) target = $region40
        $region39: #{dense_retriever_bert_forward.1} parent=11 // pred_region
          _
        $region40: #{dense_retriever_bert_forward.1} parent=11 // pred_fallthru
          _
        // Predicated region
        $region41: #{dense_retriever_bert_forward.1} parent=11 // pred_check
          %p521 = pneg %p249
        $region42: #{dense_retriever_bert_forward.1} parent=11 // pred_check_branch
          %523 = sbr.rel (%p521) target = $region44
        $region43: #{dense_retriever_bert_forward.1} parent=11 // pred_region
          _
        $region44: #{dense_retriever_bert_forward.1} parent=11 // pred_fallthru
          _
        // Predicated region
        $region45: #{dense_retriever_bert_forward.1} parent=11 // pred_check
          %p524 = pneg %p270
        $region46: #{dense_retriever_bert_forward.1} parent=11 // pred_check_branch
          %526 = sbr.rel (%p524) target = $region48
        $region47: #{dense_retriever_bert_forward.1} parent=11 // pred_region
          _
        $region48: #{dense_retriever_bert_forward.1} parent=11 // pred_fallthru
          _
        // Predicated region
        $region49: #{dense_retriever_bert_forward.1} parent=11 // pred_check
          %p527 = pneg %p291
        $region50: #{dense_retriever_bert_forward.1} parent=11 // pred_check_branch
          %529 = sbr.rel (%p527) target = $region52
        $region51: #{dense_retriever_bert_forward.1} parent=11 // pred_region
          _
        $region52: #{dense_retriever_bert_forward.1} parent=11 // pred_fallthru
          _
        // Predicated region
        $region53: #{dense_retriever_bert_forward.1} parent=11 // pred_check
          %p530 = pneg %p312
        $region54: #{dense_retriever_bert_forward.1} parent=11 // pred_check_branch
          %532 = sbr.rel (%p530) target = $region56
        $region55: #{dense_retriever_bert_forward.1} parent=11 // pred_region
          _
        $region56: #{dense_retriever_bert_forward.1} parent=11 // pred_fallthru
          _
        // Predicated region
        $region57: #{dense_retriever_bert_forward.1} parent=11 // pred_check
          %p533 = pneg %p333
        $region58: #{dense_retriever_bert_forward.1} parent=11 // pred_check_branch
          %535 = sbr.rel (%p533) target = $region60
        $region59: #{dense_retriever_bert_forward.1} parent=11 // pred_region
          _
        $region60: #{dense_retriever_bert_forward.1} parent=11 // pred_fallthru
          _
        // Predicated region
        $region61: #{dense_retriever_bert_forward.1} parent=11 // pred_check
          %p536 = pneg %p354
        $region62: #{dense_retriever_bert_forward.1} parent=11 // pred_check_branch
          %538 = sbr.rel (%p536) target = $region64
        $region63: #{dense_retriever_bert_forward.1} parent=11 // pred_region
          _
        $region64: #{dense_retriever_bert_forward.1} parent=11 // pred_fallthru
          _
        // Predicated region
        $region65: #{dense_retriever_bert_forward.1} parent=11 // pred_check
          %p539 = pneg %p375
        $region66: #{dense_retriever_bert_forward.1} parent=11 // pred_check_branch
          %541 = sbr.rel (%p539) target = $region68
        $region67: #{dense_retriever_bert_forward.1} parent=11 // pred_region
          _
        $region68: #{dense_retriever_bert_forward.1} parent=11 // pred_fallthru
          _
        // Predicated region
        $region69: #{dense_retriever_bert_forward.1} parent=11 // pred_check
          %p542 = pneg %p396
        $region70: #{dense_retriever_bert_forward.1} parent=11 // pred_check_branch
          %544 = sbr.rel (%p542) target = $region72
        $region71: #{dense_retriever_bert_forward.1} parent=11 // pred_region
          _
        $region72: #{dense_retriever_bert_forward.1} parent=11 // pred_fallthru
          _
        // Predicated region
        $region73: #{dense_retriever_bert_forward.1} parent=11 // pred_check
          %p545 = pneg %p417
        $region74: #{dense_retriever_bert_forward.1} parent=11 // pred_check_branch
          %547 = sbr.rel (%p545) target = $region76
        $region75: #{dense_retriever_bert_forward.1} parent=11 // pred_region
          _
        $region76: #{dense_retriever_bert_forward.1} parent=11 // pred_fallthru
          _
        // Predicated region
        $region77: #{dense_retriever_bert_forward.1} parent=11 // pred_check
          %p548 = pneg %p438
        $region78: #{dense_retriever_bert_forward.1} parent=11 // pred_check_branch
          %550 = sbr.rel (%p548) target = $region80
        $region79: #{dense_retriever_bert_forward.1} parent=11 // pred_region
          _
        $region80: #{dense_retriever_bert_forward.1} parent=11 // pred_fallthru
          _
        // Predicated region
        $region81: #{dense_retriever_bert_forward.1} parent=11 // pred_check
          %p551 = pneg %p459
        $region82: #{dense_retriever_bert_forward.1} parent=11 // pred_check_branch
          %553 = sbr.rel (%p551) target = $region84
        $region83: #{dense_retriever_bert_forward.1} parent=11 // pred_region
          _
        $region84: #{dense_retriever_bert_forward.1} parent=11 // pred_fallthru
          _
      $region12: #{dense_retriever_bert_forward.1} parent=5 // pred_fallthru
        _
      %p554 = scmp.lt.s32.totalorder %s29, 2
      // Predicated region
      $region85: #{dense_retriever_bert_forward.1} parent=5 // pred_check
        %p555 = pneg %p554
      $region86: #{dense_retriever_bert_forward.1} parent=5 // pred_check_branch
        %557 = sbr.rel (%p555) target = $region88
      $region87: #{dense_retriever_bert_forward.1} parent=5 // pred_region
        // Predicated region
        $region89: #{dense_retriever_bert_forward.1} parent=87 // pred_check
          %p558 = pneg %p49
        $region90: #{dense_retriever_bert_forward.1} parent=87 // pred_check_branch
          %560 = sbr.rel (%p558) target = $region92
        $region91: #{dense_retriever_bert_forward.1} parent=87 // pred_region
          %p561 = scmp.lt.s32.totalorder %s29, 1
          %s562 = scalar_select %p561, %s29, 1
          %s563 = smul.addr %s562, 8
          %s564 = scalar_lea.vmem %s0, %s563
        $region92: #{dense_retriever_bert_forward.1} parent=87 // pred_fallthru
          _
        // Predicated region
        $region93: #{dense_retriever_bert_forward.1} parent=87 // pred_check
          %p565 = pneg %p75
        $region94: #{dense_retriever_bert_forward.1} parent=87 // pred_check_branch
          %567 = sbr.rel (%p565) target = $region96
        $region95: #{dense_retriever_bert_forward.1} parent=87 // pred_region
          %p568 = scmp.lt.s32.totalorder %s29, 1
          %s569 = scalar_select %p568, %s29, 1
          %s570 = scalar_lea.vmem %s1, %s569
        $region96: #{dense_retriever_bert_forward.1} parent=87 // pred_fallthru
          _
      $region88: #{dense_retriever_bert_forward.1} parent=5 // pred_fallthru
        _
      %p571 = scmp.le.s32.totalorder 1, %s29
      %p572 = scmp.lt.s32.totalorder %s29, 3
      %p573 = pnand %p571, %p572
      %p574 = pneg %p573
      // Predicated region
      $region97: #{dense_retriever_bert_forward.1} parent=5 // pred_check
        _
      $region98: #{dense_retriever_bert_forward.1} parent=5 // pred_check_branch
        %576 = sbr.rel (%p573) target = $region100
      $region99: #{dense_retriever_bert_forward.1} parent=5 // pred_region
        %s577 = ssub.s32 %s29, 1
        %p578 = scmp.lt.s32.totalorder %s34, 1
        %s579 = scalar_select %p578, %s34, 1
        %s580 = smul.addr %s579, 8
        %s581 = scalar_lea.vmem %s0, %s580
        %p582 = pneg %p55
        %p583 = pneg %p52
        %p584 = scmp.lt.s32.totalorder %s34, 1
        %s585 = scalar_select %p584, %s34, 1
        %s586 = scalar_lea.vmem %s1, %s585
        %p587 = pneg %p81
        %p588 = pneg %p78
        %p589 = pneg %p102
        %p590 = pneg %p99
        %p591 = pneg %p123
        %p592 = pneg %p120
        %p593 = pneg %p144
        %p594 = pneg %p141
        %p595 = pneg %p165
        %p596 = pneg %p162
        %p597 = pneg %p186
        %p598 = pneg %p183
        %p599 = pneg %p207
        %p600 = pneg %p204
        %p601 = pneg %p228
        %p602 = pneg %p225
        %p603 = pneg %p249
        %p604 = pneg %p246
        %p605 = pneg %p270
        %p606 = pneg %p267
        %p607 = pneg %p291
        %p608 = pneg %p288
        %p609 = pneg %p312
        %p610 = pneg %p309
        %p611 = pneg %p333
        %p612 = pneg %p330
        %p613 = pneg %p354
        %p614 = pneg %p351
        %p615 = pneg %p375
        %p616 = pneg %p372
        %p617 = pneg %p396
        %p618 = pneg %p393
        %p619 = pneg %p417
        %p620 = pneg %p414
        %p621 = pneg %p438
        %p622 = pneg %p435
        %p623 = pneg %p459
        %p624 = pneg %p456
        %p625 = pneg %p485
        %p626 = pneg %p482
        %s627 = sand.u32 %s472, 1
        %s628 = scalar_lea.sflag [#allocation4], %s627
        %s629 = sand.u32 %s472, 1
        %s630 = scalar_lea.vmem [#allocation3], %s629
        %p631 = scmp.lt.s32.totalorder %s34, 1
        %s632 = scalar_select %p631, %s34, 1
        %s633 = smul.addr %s632, 8
        %s634 = scalar_lea.vmem %s0, %s633
        %p635 = scmp.lt.s32.totalorder %s34, 1
        %s636 = scalar_select %p635, %s34, 1
        %s637 = scalar_lea.vmem %s1, %s636
        %v638 = vld [vmem:[%s637] sm:$0x1]
        %vm639 = vcmp.gt.f32.partialorder %v638, 0.5
        %v640 = vsel %vm639, 0.0, -1e+09
        %v641 = vld [vmem:[%s634] sm:$0xff]
        %v642 = vld [vmem:[%s2] sm:$0x1]
        %v643 = vld [vmem:[%s3] sm:$0x1]
        %vm644 = vcmask 261120
        %v645 = vsel %vm644, %v641, 0.0
        %646 = vadd.xlane.f32.xlu0 %v645
        %v647 = vpop.xlane.xlu0 %646
        %v648 = vrcp.pop 32.0
        %v649 = vmul.f32 %v647, %v648
        %v650 = vsub.f32 %v641, %v649
        %v651 = vmul.f32 %v650, %v650
        %v652 = vsel %vm644, %v651, 0.0
        %653 = vadd.xlane.f32.xlu0 %v652
        %v654 = vpop.xlane.xlu0 %653
        %v655 = vmul.f32 %v654, %v648
        %v656 = vadd.f32 %v655, 1e-12
        %v657 = vrsqrt.pop %v656
        %v658 = vmul.f32 %v650, %v657
        %v660 = vlaneseq
        %v661 = vshrl.u32 %v660, 7
        %v662 = vsub.s32 0, %v661
        %v663 = vrot.slane %v642, %v662
        %v665 = vmul.f32 %v658, %v663
        %v667 = vlaneseq
        %v668 = vshrl.u32 %v667, 7
        %v669 = vsub.s32 0, %v668
        %v670 = vrot.slane %v643, %v669
        %v672 = vadd.f32 %v665, %v670
        %v673 = vld [vmem:[%s4] sm:$0xff]
        %v674 = vld [vmem:[%s4 + $0x8] sm:$0xff]
        %v675 = vld [vmem:[%s4 + $0x10] sm:$0xff]
        %v676 = vld [vmem:[%s4 + $0x18] sm:$0xff]
        %v677 = vld [vmem:[%s5] sm:$0x1]
        %v679 = vlaneseq
        %v680 = vshrl.u32 %v679, 7
        %v681 = vsub.s32 0, %v680
        %v682 = vrot.slane %v677, %v681
        %v685 = vsel %vm644, %v672, 0
        %687 = vmatprep.subr.mxu0 0.0
        %688 = vmatpush1.msra.mxu0 0.0
        %689 = vmatprep.subr.mxu0 0.0
        %690 = vmatpush1.msra.mxu0 0.0
        %691 = vmatprep.subr.mxu0 0.0
        %692 = vmatpush1.msra.mxu0 0.0
        %693 = vmatprep.subr.mxu0 0.0
        %694 = vmatpush1.msra.mxu0 0.0
        %695 = vmatprep.subr.mxu0 0.0
        %696 = vmatpush1.msra.mxu0 0.0
        %697 = vmatprep.subr.mxu0 0.0
        %698 = vmatpush1.msra.mxu0 0.0
        %699 = vmatprep.subr.mxu0 0.0
        %700 = vmatpush1.msra.mxu0 0.0
        %701 = vmatprep.subr.mxu0 0.0
        %702 = vmatpush1.msra.mxu0 0.0
        %703 = vmatprep.subr.mxu0 0.0
        %704 = vmatpush1.msra.mxu0 0.0
        %705 = vmatprep.subr.mxu0 0.0
        %706 = vmatpush1.msra.mxu0 0.0
        %707 = vmatprep.subr.mxu0 0.0
        %708 = vmatpush1.msra.mxu0 0.0
        %709 = vmatprep.subr.mxu0 0.0
        %710 = vmatpush1.msra.mxu0 0.0
        %711 = vmatprep.subr.mxu0 0.0
        %712 = vmatpush1.msra.mxu0 %v676
        %713 = vmatprep.subr.mxu0 0.0
        %714 = vmatpush1.msra.mxu0 %v675
        %715 = vmatprep.subr.mxu0 0.0
        %716 = vmatpush1.msra.mxu0 %v674
        %717 = vmatprep.subr.mxu0 0.0
        %718 = vmatpush1.msra.mxu0 %v673
        %719 = vmatprep.subr.mxu0 0.0
        %720 = vmatpush2.msra.mxu0 0.0
        %721 = vmatprep.subr.mxu0 0.0
        %722 = vmatpush2.msra.mxu0 0.0
        %723 = vmatprep.subr.mxu0 0.0
        %724 = vmatpush2.msra.mxu0 0.0
        %725 = vmatprep.subr.mxu0 0.0
        %726 = vmatpush2.msra.mxu0 0.0
        %727 = vmatprep.subr.mxu0 0.0
        %728 = vmatpush2.msra.mxu0 0.0
        %729 = vmatprep.subr.mxu0 0.0
        %730 = vmatpush2.msra.mxu0 0.0
        %731 = vmatprep.subr.mxu0 0.0
        %732 = vmatpush2.msra.mxu0 0.0
        %733 = vmatprep.subr.mxu0 0.0
        %734 = vmatpush2.msra.mxu0 0.0
        %735 = vmatprep.subr.mxu0 0.0
        %736 = vmatpush2.msra.mxu0 0.0
        %737 = vmatprep.subr.mxu0 0.0
        %738 = vmatpush2.msra.mxu0 0.0
        %739 = vmatprep.subr.mxu0 0.0
        %740 = vmatpush2.msra.mxu0 0.0
        %741 = vmatprep.subr.mxu0 0.0
        %742 = vmatpush2.msra.mxu0 0.0
        %743 = vmatprep.subr.mxu0 0.0
        %744 = vmatpush2.msra.mxu0 0.0
        %745 = vmatprep.subr.mxu0 0.0
        %746 = vmatpush2.msra.mxu0 0.0
        %747 = vmatprep.subr.mxu0 0.0
        %748 = vmatpush2.msra.mxu0 0.0
        %749 = vmatprep.subr.mxu0 0.0
        %750 = vmatpush2.msra.mxu0 0.0
        %751 = vmatprep.mubr.f32.mxu0 0.0
        %752 = vmatmul.mubr.f32.gmra.mxu0 %v685
        %v753 = vpop.f32.mrf.mxu0
        %v754 = vadd.f32 %v682, %v753
        %v755 = vpop.f32.mrf.mxu0
        %756 = vdwg.mxu0
        %v757 = vld [vmem:[%s6] sm:$0xff]
        %v758 = vld [vmem:[%s6 + $0x8] sm:$0xff]
        %v759 = vld [vmem:[%s6 + $0x10] sm:$0xff]
        %v760 = vld [vmem:[%s6 + $0x18] sm:$0xff]
        %v761 = vld [vmem:[%s7] sm:$0x1]
        %v763 = vlaneseq
        %v764 = vshrl.u32 %v763, 7
        %v765 = vsub.s32 0, %v764
        %v766 = vrot.slane %v761, %v765
        %768 = vmatprep.subr.mxu0 0.0
        %769 = vmatpush1.msra.mxu0 0.0
        %770 = vmatprep.subr.mxu0 0.0
        %771 = vmatpush1.msra.mxu0 0.0
        %772 = vmatprep.subr.mxu0 0.0
        %773 = vmatpush1.msra.mxu0 0.0
        %774 = vmatprep.subr.mxu0 0.0
        %775 = vmatpush1.msra.mxu0 0.0
        %776 = vmatprep.subr.mxu0 0.0
        %777 = vmatpush1.msra.mxu0 0.0
        %778 = vmatprep.subr.mxu0 0.0
        %779 = vmatpush1.msra.mxu0 0.0
        %780 = vmatprep.subr.mxu0 0.0
        %781 = vmatpush1.msra.mxu0 0.0
        %782 = vmatprep.subr.mxu0 0.0
        %783 = vmatpush1.msra.mxu0 0.0
        %784 = vmatprep.subr.mxu0 0.0
        %785 = vmatpush1.msra.mxu0 0.0
        %786 = vmatprep.subr.mxu0 0.0
        %787 = vmatpush1.msra.mxu0 0.0
        %788 = vmatprep.subr.mxu0 0.0
        %789 = vmatpush1.msra.mxu0 0.0
        %790 = vmatprep.subr.mxu0 0.0
        %791 = vmatpush1.msra.mxu0 0.0
        %792 = vmatprep.subr.mxu0 0.0
        %793 = vmatpush1.msra.mxu0 %v760
        %794 = vmatprep.subr.mxu0 0.0
        %795 = vmatpush1.msra.mxu0 %v759
        %796 = vmatprep.subr.mxu0 0.0
        %797 = vmatpush1.msra.mxu0 %v758
        %798 = vmatprep.subr.mxu0 0.0
        %799 = vmatpush1.msra.mxu0 %v757
        %800 = vmatprep.subr.mxu0 0.0
        %801 = vmatpush2.msra.mxu0 0.0
        %802 = vmatprep.subr.mxu0 0.0
        %803 = vmatpush2.msra.mxu0 0.0
        %804 = vmatprep.subr.mxu0 0.0
        %805 = vmatpush2.msra.mxu0 0.0
        %806 = vmatprep.subr.mxu0 0.0
        %807 = vmatpush2.msra.mxu0 0.0
        %808 = vmatprep.subr.mxu0 0.0
        %809 = vmatpush2.msra.mxu0 0.0
        %810 = vmatprep.subr.mxu0 0.0
        %811 = vmatpush2.msra.mxu0 0.0
        %812 = vmatprep.subr.mxu0 0.0
        %813 = vmatpush2.msra.mxu0 0.0
        %814 = vmatprep.subr.mxu0 0.0
        %815 = vmatpush2.msra.mxu0 0.0
        %816 = vmatprep.subr.mxu0 0.0
        %817 = vmatpush2.msra.mxu0 0.0
        %818 = vmatprep.subr.mxu0 0.0
        %819 = vmatpush2.msra.mxu0 0.0
        %820 = vmatprep.subr.mxu0 0.0
        %821 = vmatpush2.msra.mxu0 0.0
        %822 = vmatprep.subr.mxu0 0.0
        %823 = vmatpush2.msra.mxu0 0.0
        %824 = vmatprep.subr.mxu0 0.0
        %825 = vmatpush2.msra.mxu0 0.0
        %826 = vmatprep.subr.mxu0 0.0
        %827 = vmatpush2.msra.mxu0 0.0
        %828 = vmatprep.subr.mxu0 0.0
        %829 = vmatpush2.msra.mxu0 0.0
        %830 = vmatprep.subr.mxu0 0.0
        %831 = vmatpush2.msra.mxu0 0.0
        %832 = vmatprep.mubr.f32.mxu0 0.0
        %833 = vmatmul.mubr.f32.gmra.mxu0 %v685
        %v834 = vpop.f32.mrf.mxu0
        %v835 = vadd.f32 %v766, %v834
        %v836 = vpop.f32.mrf.mxu0
        %837 = vdwg.mxu0
        %v838 = vld [vmem:[%s8] sm:$0xff]
        %v839 = vld [vmem:[%s8 + $0x8] sm:$0xff]
        %v840 = vld [vmem:[%s8 + $0x10] sm:$0xff]
        %v841 = vld [vmem:[%s8 + $0x18] sm:$0xff]
        %v842 = vld [vmem:[%s9] sm:$0x1]
        %v844 = vlaneseq
        %v845 = vshrl.u32 %v844, 7
        %v846 = vsub.s32 0, %v845
        %v847 = vrot.slane %v842, %v846
        %849 = vmatprep.subr.mxu0 0.0
        %850 = vmatpush1.msra.mxu0 0.0
        %851 = vmatprep.subr.mxu0 0.0
        %852 = vmatpush1.msra.mxu0 0.0
        %853 = vmatprep.subr.mxu0 0.0
        %854 = vmatpush1.msra.mxu0 0.0
        %855 = vmatprep.subr.mxu0 0.0
        %856 = vmatpush1.msra.mxu0 0.0
        %857 = vmatprep.subr.mxu0 0.0
        %858 = vmatpush1.msra.mxu0 0.0
        %859 = vmatprep.subr.mxu0 0.0
        %860 = vmatpush1.msra.mxu0 0.0
        %861 = vmatprep.subr.mxu0 0.0
        %862 = vmatpush1.msra.mxu0 0.0
        %863 = vmatprep.subr.mxu0 0.0
        %864 = vmatpush1.msra.mxu0 0.0
        %865 = vmatprep.subr.mxu0 0.0
        %866 = vmatpush1.msra.mxu0 0.0
        %867 = vmatprep.subr.mxu0 0.0
        %868 = vmatpush1.msra.mxu0 0.0
        %869 = vmatprep.subr.mxu0 0.0
        %870 = vmatpush1.msra.mxu0 0.0
        %871 = vmatprep.subr.mxu0 0.0
        %872 = vmatpush1.msra.mxu0 0.0
        %873 = vmatprep.subr.mxu0 0.0
        %874 = vmatpush1.msra.mxu0 %v841
        %875 = vmatprep.subr.mxu0 0.0
        %876 = vmatpush1.msra.mxu0 %v840
        %877 = vmatprep.subr.mxu0 0.0
        %878 = vmatpush1.msra.mxu0 %v839
        %879 = vmatprep.subr.mxu0 0.0
        %880 = vmatpush1.msra.mxu0 %v838
        %881 = vmatprep.subr.mxu0 0.0
        %882 = vmatpush2.msra.mxu0 0.0
        %883 = vmatprep.subr.mxu0 0.0
        %884 = vmatpush2.msra.mxu0 0.0
        %885 = vmatprep.subr.mxu0 0.0
        %886 = vmatpush2.msra.mxu0 0.0
        %887 = vmatprep.subr.mxu0 0.0
        %888 = vmatpush2.msra.mxu0 0.0
        %889 = vmatprep.subr.mxu0 0.0
        %890 = vmatpush2.msra.mxu0 0.0
        %891 = vmatprep.subr.mxu0 0.0
        %892 = vmatpush2.msra.mxu0 0.0
        %893 = vmatprep.subr.mxu0 0.0
        %894 = vmatpush2.msra.mxu0 0.0
        %895 = vmatprep.subr.mxu0 0.0
        %896 = vmatpush2.msra.mxu0 0.0
        %897 = vmatprep.subr.mxu0 0.0
        %898 = vmatpush2.msra.mxu0 0.0
        %899 = vmatprep.subr.mxu0 0.0
        %900 = vmatpush2.msra.mxu0 0.0
        %901 = vmatprep.subr.mxu0 0.0
        %902 = vmatpush2.msra.mxu0 0.0
        %903 = vmatprep.subr.mxu0 0.0
        %904 = vmatpush2.msra.mxu0 0.0
        %905 = vmatprep.subr.mxu0 0.0
        %906 = vmatpush2.msra.mxu0 0.0
        %907 = vmatprep.subr.mxu0 0.0
        %908 = vmatpush2.msra.mxu0 0.0
        %909 = vmatprep.subr.mxu0 0.0
        %910 = vmatpush2.msra.mxu0 0.0
        %911 = vmatprep.subr.mxu0 0.0
        %912 = vmatpush2.msra.mxu0 0.0
        %913 = vmatprep.mubr.f32.mxu0 0.0
        %914 = vmatmul.mubr.f32.gmra.mxu0 %v685
        %v915 = vpop.f32.mrf.mxu0
        %v916 = vadd.f32 %v847, %v915
        %v917 = vpop.f32.mrf.mxu0
        %918 = vdwg.mxu0
        %vm919 = vcmask 130048
        %v921 = vsel %vm919, %v754, 0
        %v924 = vsel %vm919, %v835, 0
        %926 = vmatprep.subr.mxu0 0.0
        %927 = vmatpush1.xpose.msra.mxu0 0.0
        %928 = vmatprep.subr.mxu0 0.0
        %929 = vmatpush1.xpose.msra.mxu0 0.0
        %930 = vmatprep.subr.mxu0 0.0
        %931 = vmatpush1.xpose.msra.mxu0 0.0
        %932 = vmatprep.subr.mxu0 0.0
        %933 = vmatpush1.xpose.msra.mxu0 0.0
        %934 = vmatprep.subr.mxu0 0.0
        %935 = vmatpush1.xpose.msra.mxu0 0.0
        %936 = vmatprep.subr.mxu0 0.0
        %937 = vmatpush1.xpose.msra.mxu0 0.0
        %938 = vmatprep.subr.mxu0 0.0
        %939 = vmatpush1.xpose.msra.mxu0 0.0
        %940 = vmatprep.subr.mxu0 0.0
        %941 = vmatpush1.xpose.msra.mxu0 0.0
        %942 = vmatprep.subr.mxu0 0.0
        %943 = vmatpush1.xpose.msra.mxu0 0.0
        %944 = vmatprep.subr.mxu0 0.0
        %945 = vmatpush1.xpose.msra.mxu0 0.0
        %946 = vmatprep.subr.mxu0 0.0
        %947 = vmatpush1.xpose.msra.mxu0 0.0
        %948 = vmatprep.subr.mxu0 0.0
        %949 = vmatpush1.xpose.msra.mxu0 0.0
        %950 = vmatprep.subr.mxu0 0.0
        %951 = vmatpush1.xpose.msra.mxu0 0.0
        %952 = vmatprep.subr.mxu0 0.0
        %953 = vmatpush1.xpose.msra.mxu0 0.0
        %954 = vmatprep.subr.mxu0 0.0
        %955 = vmatpush1.xpose.msra.mxu0 0.0
        %956 = vmatprep.subr.mxu0 0.0
        %957 = vmatpush1.xpose.msra.mxu0 %v924
        %958 = vmatprep.subr.mxu0 0.0
        %959 = vmatpush2.xpose.msra.mxu0 0.0
        %960 = vmatprep.subr.mxu0 0.0
        %961 = vmatpush2.xpose.msra.mxu0 0.0
        %962 = vmatprep.subr.mxu0 0.0
        %963 = vmatpush2.xpose.msra.mxu0 0.0
        %964 = vmatprep.subr.mxu0 0.0
        %965 = vmatpush2.xpose.msra.mxu0 0.0
        %966 = vmatprep.subr.mxu0 0.0
        %967 = vmatpush2.xpose.msra.mxu0 0.0
        %968 = vmatprep.subr.mxu0 0.0
        %969 = vmatpush2.xpose.msra.mxu0 0.0
        %970 = vmatprep.subr.mxu0 0.0
        %971 = vmatpush2.xpose.msra.mxu0 0.0
        %972 = vmatprep.subr.mxu0 0.0
        %973 = vmatpush2.xpose.msra.mxu0 0.0
        %974 = vmatprep.subr.mxu0 0.0
        %975 = vmatpush2.xpose.msra.mxu0 0.0
        %976 = vmatprep.subr.mxu0 0.0
        %977 = vmatpush2.xpose.msra.mxu0 0.0
        %978 = vmatprep.subr.mxu0 0.0
        %979 = vmatpush2.xpose.msra.mxu0 0.0
        %980 = vmatprep.subr.mxu0 0.0
        %981 = vmatpush2.xpose.msra.mxu0 0.0
        %982 = vmatprep.subr.mxu0 0.0
        %983 = vmatpush2.xpose.msra.mxu0 0.0
        %984 = vmatprep.subr.mxu0 0.0
        %985 = vmatpush2.xpose.msra.mxu0 0.0
        %986 = vmatprep.subr.mxu0 0.0
        %987 = vmatpush2.xpose.msra.mxu0 0.0
        %988 = vmatprep.subr.mxu0 0.0
        %989 = vmatpush2.xpose.msra.mxu0 0.0
        %990 = vmatprep.mubr.f32.mxu0 0.0
        %991 = vmatmul.mubr.f32.gmra.mxu0 %v921
        %v992 = vpop.f32.mrf.mxu0
        %v993 = vadd.f32 0.0, %v992
        %v994 = vpop.f32.mrf.mxu0
        %995 = vdwg.mxu0
        %v996 = vmul.f32 %v993, 0.25
        %v998 = vlaneseq
        %v999 = vshrl.u32 %v998, 7
        %v1000 = vsub.s32 0, %v999
        %v1001 = vrot.slane %v640, %v1000
        %v1003 = vadd.f32 %v996, %v1001
        %vm1004 = vcmask 64512
        %v1005 = vsel %vm1004, %v1003, -inf
        %1006 = vmax.xlane.f32.xlu0 %v1005
        %v1007 = vpop.xlane.xlu0 %1006
        %v1008 = vsub.f32 %v1003, %v1007
        %v1009 = vmul.f32 %v1008, 1.442695
        %v1010 = vpow.pop %v1009
        %v1011 = vsel %vm1004, %v1010, 0.0
        %1012 = vadd.xlane.f32.xlu0 %v1011
        %v1013 = vpop.xlane.xlu0 %1012
        %v1014 = vrcp.pop %v1013
        %v1015 = vmul.f32 %v1010, %v1014
        %v1017 = vsel %vm1004, %v1015, 0
        %1019 = vmatprep.subr.mxu0 0.0
        %1020 = vmatpush1.msra.mxu0 0.0
        %1021 = vmatprep.subr.mxu0 0.0
        %1022 = vmatpush1.msra.mxu0 0.0
        %1023 = vmatprep.subr.mxu0 0.0
        %1024 = vmatpush1.msra.mxu0 0.0
        %1025 = vmatprep.subr.mxu0 0.0
        %1026 = vmatpush1.msra.mxu0 0.0
        %1027 = vmatprep.subr.mxu0 0.0
        %1028 = vmatpush1.msra.mxu0 0.0
        %1029 = vmatprep.subr.mxu0 0.0
        %1030 = vmatpush1.msra.mxu0 0.0
        %1031 = vmatprep.subr.mxu0 0.0
        %1032 = vmatpush1.msra.mxu0 0.0
        %1033 = vmatprep.subr.mxu0 0.0
        %1034 = vmatpush1.msra.mxu0 0.0
        %1035 = vmatprep.subr.mxu0 0.0
        %1036 = vmatpush1.msra.mxu0 0.0
        %1037 = vmatprep.subr.mxu0 0.0
        %1038 = vmatpush1.msra.mxu0 0.0
        %1039 = vmatprep.subr.mxu0 0.0
        %1040 = vmatpush1.msra.mxu0 0.0
        %1041 = vmatprep.subr.mxu0 0.0
        %1042 = vmatpush1.msra.mxu0 0.0
        %1043 = vmatprep.subr.mxu0 0.0
        %1044 = vmatpush1.msra.mxu0 0.0
        %1045 = vmatprep.subr.mxu0 0.0
        %1046 = vmatpush1.msra.mxu0 0.0
        %1047 = vmatprep.subr.mxu0 0.0
        %1048 = vmatpush1.msra.mxu0 0.0
        %1049 = vmatprep.subr.mxu0 0.0
        %1050 = vmatpush1.msra.mxu0 %v916
        %1051 = vmatprep.subr.mxu0 0.0
        %1052 = vmatpush2.msra.mxu0 0.0
        %1053 = vmatprep.subr.mxu0 0.0
        %1054 = vmatpush2.msra.mxu0 0.0
        %1055 = vmatprep.subr.mxu0 0.0
        %1056 = vmatpush2.msra.mxu0 0.0
        %1057 = vmatprep.subr.mxu0 0.0
        %1058 = vmatpush2.msra.mxu0 0.0
        %1059 = vmatprep.subr.mxu0 0.0
        %1060 = vmatpush2.msra.mxu0 0.0
        %1061 = vmatprep.subr.mxu0 0.0
        %1062 = vmatpush2.msra.mxu0 0.0
        %1063 = vmatprep.subr.mxu0 0.0
        %1064 = vmatpush2.msra.mxu0 0.0
        %1065 = vmatprep.subr.mxu0 0.0
        %1066 = vmatpush2.msra.mxu0 0.0
        %1067 = vmatprep.subr.mxu0 0.0
        %1068 = vmatpush2.msra.mxu0 0.0
        %1069 = vmatprep.subr.mxu0 0.0
        %1070 = vmatpush2.msra.mxu0 0.0
        %1071 = vmatprep.subr.mxu0 0.0
        %1072 = vmatpush2.msra.mxu0 0.0
        %1073 = vmatprep.subr.mxu0 0.0
        %1074 = vmatpush2.msra.mxu0 0.0
        %1075 = vmatprep.subr.mxu0 0.0
        %1076 = vmatpush2.msra.mxu0 0.0
        %1077 = vmatprep.subr.mxu0 0.0
        %1078 = vmatpush2.msra.mxu0 0.0
        %1079 = vmatprep.subr.mxu0 0.0
        %1080 = vmatpush2.msra.mxu0 0.0
        %1081 = vmatprep.subr.mxu0 0.0
        %1082 = vmatpush2.msra.mxu0 0.0
        %1083 = vmatprep.mubr.f32.mxu0 0.0
        %1084 = vmatmul.mubr.f32.gmra.mxu0 %v1017
        %v1085 = vpop.f32.mrf.mxu0
        %v1086 = vadd.f32 0.0, %v1085
        %v1087 = vpop.f32.mrf.mxu0
        %1088 = vdwg.mxu0
        %1089 = vst.msk [vmem:[#allocation2] sm:$0xff] %vm919, %v1086
        %s1090 = scalar_lea.vmem %s4, 32
        %v1091 = vld [vmem:[%s1090] sm:$0xff]
        %v1092 = vld [vmem:[%s1090 + $0x8] sm:$0xff]
        %v1093 = vld [vmem:[%s1090 + $0x10] sm:$0xff]
        %v1094 = vld [vmem:[%s1090 + $0x18] sm:$0xff]
        %s1095 = scalar_lea.vmem %s5, 1
        %v1096 = vld [vmem:[%s1095] sm:$0x1]
        %v1098 = vlaneseq
        %v1099 = vshrl.u32 %v1098, 7
        %v1100 = vsub.s32 0, %v1099
        %v1101 = vrot.slane %v1096, %v1100
        %1103 = vmatprep.subr.mxu0 0.0
        %1104 = vmatpush1.msra.mxu0 0.0
        %1105 = vmatprep.subr.mxu0 0.0
        %1106 = vmatpush1.msra.mxu0 0.0
        %1107 = vmatprep.subr.mxu0 0.0
        %1108 = vmatpush1.msra.mxu0 0.0
        %1109 = vmatprep.subr.mxu0 0.0
        %1110 = vmatpush1.msra.mxu0 0.0
        %1111 = vmatprep.subr.mxu0 0.0
        %1112 = vmatpush1.msra.mxu0 0.0
        %1113 = vmatprep.subr.mxu0 0.0
        %1114 = vmatpush1.msra.mxu0 0.0
        %1115 = vmatprep.subr.mxu0 0.0
        %1116 = vmatpush1.msra.mxu0 0.0
        %1117 = vmatprep.subr.mxu0 0.0
        %1118 = vmatpush1.msra.mxu0 0.0
        %1119 = vmatprep.subr.mxu0 0.0
        %1120 = vmatpush1.msra.mxu0 0.0
        %1121 = vmatprep.subr.mxu0 0.0
        %1122 = vmatpush1.msra.mxu0 0.0
        %1123 = vmatprep.subr.mxu0 0.0
        %1124 = vmatpush1.msra.mxu0 0.0
        %1125 = vmatprep.subr.mxu0 0.0
        %1126 = vmatpush1.msra.mxu0 0.0
        %1127 = vmatprep.subr.mxu0 0.0
        %1128 = vmatpush1.msra.mxu0 %v1094
        %1129 = vmatprep.subr.mxu0 0.0
        %1130 = vmatpush1.msra.mxu0 %v1093
        %1131 = vmatprep.subr.mxu0 0.0
        %1132 = vmatpush1.msra.mxu0 %v1092
        %1133 = vmatprep.subr.mxu0 0.0
        %1134 = vmatpush1.msra.mxu0 %v1091
        %1135 = vmatprep.subr.mxu0 0.0
        %1136 = vmatpush2.msra.mxu0 0.0
        %1137 = vmatprep.subr.mxu0 0.0
        %1138 = vmatpush2.msra.mxu0 0.0
        %1139 = vmatprep.subr.mxu0 0.0
        %1140 = vmatpush2.msra.mxu0 0.0
        %1141 = vmatprep.subr.mxu0 0.0
        %1142 = vmatpush2.msra.mxu0 0.0
        %1143 = vmatprep.subr.mxu0 0.0
        %1144 = vmatpush2.msra.mxu0 0.0
        %1145 = vmatprep.subr.mxu0 0.0
        %1146 = vmatpush2.msra.mxu0 0.0
        %1147 = vmatprep.subr.mxu0 0.0
        %1148 = vmatpush2.msra.mxu0 0.0
        %1149 = vmatprep.subr.mxu0 0.0
        %1150 = vmatpush2.msra.mxu0 0.0
        %1151 = vmatprep.subr.mxu0 0.0
        %1152 = vmatpush2.msra.mxu0 0.0
        %1153 = vmatprep.subr.mxu0 0.0
        %1154 = vmatpush2.msra.mxu0 0.0
        %1155 = vmatprep.subr.mxu0 0.0
        %1156 = vmatpush2.msra.mxu0 0.0
        %1157 = vmatprep.subr.mxu0 0.0
        %1158 = vmatpush2.msra.mxu0 0.0
        %1159 = vmatprep.subr.mxu0 0.0
        %1160 = vmatpush2.msra.mxu0 0.0
        %1161 = vmatprep.subr.mxu0 0.0
        %1162 = vmatpush2.msra.mxu0 0.0
        %1163 = vmatprep.subr.mxu0 0.0
        %1164 = vmatpush2.msra.mxu0 0.0
        %1165 = vmatprep.subr.mxu0 0.0
        %1166 = vmatpush2.msra.mxu0 0.0
        %1167 = vmatprep.mubr.f32.mxu0 0.0
        %1168 = vmatmul.mubr.f32.gmra.mxu0 %v685
        %v1169 = vpop.f32.mrf.mxu0
        %v1170 = vadd.f32 %v1101, %v1169
        %v1171 = vpop.f32.mrf.mxu0
        %1172 = vdwg.mxu0
        %s1173 = scalar_lea.vmem %s6, 32
        %v1174 = vld [vmem:[%s1173] sm:$0xff]
        %v1175 = vld [vmem:[%s1173 + $0x8] sm:$0xff]
        %v1176 = vld [vmem:[%s1173 + $0x10] sm:$0xff]
        %v1177 = vld [vmem:[%s1173 + $0x18] sm:$0xff]
        %s1178 = scalar_lea.vmem %s7, 1
        %v1179 = vld [vmem:[%s1178] sm:$0x1]
        %v1181 = vlaneseq
        %v1182 = vshrl.u32 %v1181, 7
        %v1183 = vsub.s32 0, %v1182
        %v1184 = vrot.slane %v1179, %v1183
        %1186 = vmatprep.subr.mxu0 0.0
        %1187 = vmatpush1.msra.mxu0 0.0
        %1188 = vmatprep.subr.mxu0 0.0
        %1189 = vmatpush1.msra.mxu0 0.0
        %1190 = vmatprep.subr.mxu0 0.0
        %1191 = vmatpush1.msra.mxu0 0.0
        %1192 = vmatprep.subr.mxu0 0.0
        %1193 = vmatpush1.msra.mxu0 0.0
        %1194 = vmatprep.subr.mxu0 0.0
        %1195 = vmatpush1.msra.mxu0 0.0
        %1196 = vmatprep.subr.mxu0 0.0
        %1197 = vmatpush1.msra.mxu0 0.0
        %1198 = vmatprep.subr.mxu0 0.0
        %1199 = vmatpush1.msra.mxu0 0.0
        %1200 = vmatprep.subr.mxu0 0.0
        %1201 = vmatpush1.msra.mxu0 0.0
        %1202 = vmatprep.subr.mxu0 0.0
        %1203 = vmatpush1.msra.mxu0 0.0
        %1204 = vmatprep.subr.mxu0 0.0
        %1205 = vmatpush1.msra.mxu0 0.0
        %1206 = vmatprep.subr.mxu0 0.0
        %1207 = vmatpush1.msra.mxu0 0.0
        %1208 = vmatprep.subr.mxu0 0.0
        %1209 = vmatpush1.msra.mxu0 0.0
        %1210 = vmatprep.subr.mxu0 0.0
        %1211 = vmatpush1.msra.mxu0 %v1177
        %1212 = vmatprep.subr.mxu0 0.0
        %1213 = vmatpush1.msra.mxu0 %v1176
        %1214 = vmatprep.subr.mxu0 0.0
        %1215 = vmatpush1.msra.mxu0 %v1175
        %1216 = vmatprep.subr.mxu0 0.0
        %1217 = vmatpush1.msra.mxu0 %v1174
        %1218 = vmatprep.subr.mxu0 0.0
        %1219 = vmatpush2.msra.mxu0 0.0
        %1220 = vmatprep.subr.mxu0 0.0
        %1221 = vmatpush2.msra.mxu0 0.0
        %1222 = vmatprep.subr.mxu0 0.0
        %1223 = vmatpush2.msra.mxu0 0.0
        %1224 = vmatprep.subr.mxu0 0.0
        %1225 = vmatpush2.msra.mxu0 0.0
        %1226 = vmatprep.subr.mxu0 0.0
        %1227 = vmatpush2.msra.mxu0 0.0
        %1228 = vmatprep.subr.mxu0 0.0
        %1229 = vmatpush2.msra.mxu0 0.0
        %1230 = vmatprep.subr.mxu0 0.0
        %1231 = vmatpush2.msra.mxu0 0.0
        %1232 = vmatprep.subr.mxu0 0.0
        %1233 = vmatpush2.msra.mxu0 0.0
        %1234 = vmatprep.subr.mxu0 0.0
        %1235 = vmatpush2.msra.mxu0 0.0
        %1236 = vmatprep.subr.mxu0 0.0
        %1237 = vmatpush2.msra.mxu0 0.0
        %1238 = vmatprep.subr.mxu0 0.0
        %1239 = vmatpush2.msra.mxu0 0.0
        %1240 = vmatprep.subr.mxu0 0.0
        %1241 = vmatpush2.msra.mxu0 0.0
        %1242 = vmatprep.subr.mxu0 0.0
        %1243 = vmatpush2.msra.mxu0 0.0
        %1244 = vmatprep.subr.mxu0 0.0
        %1245 = vmatpush2.msra.mxu0 0.0
        %1246 = vmatprep.subr.mxu0 0.0
        %1247 = vmatpush2.msra.mxu0 0.0
        %1248 = vmatprep.subr.mxu0 0.0
        %1249 = vmatpush2.msra.mxu0 0.0
        %1250 = vmatprep.mubr.f32.mxu0 0.0
        %1251 = vmatmul.mubr.f32.gmra.mxu0 %v685
        %v1252 = vpop.f32.mrf.mxu0
        %v1253 = vadd.f32 %v1184, %v1252
        %v1254 = vpop.f32.mrf.mxu0
        %1255 = vdwg.mxu0
        %s1256 = scalar_lea.vmem %s8, 32
        %v1257 = vld [vmem:[%s1256] sm:$0xff]
        %v1258 = vld [vmem:[%s1256 + $0x8] sm:$0xff]
        %v1259 = vld [vmem:[%s1256 + $0x10] sm:$0xff]
        %v1260 = vld [vmem:[%s1256 + $0x18] sm:$0xff]
        %s1261 = scalar_lea.vmem %s9, 1
        %v1262 = vld [vmem:[%s1261] sm:$0x1]
        %v1264 = vlaneseq
        %v1265 = vshrl.u32 %v1264, 7
        %v1266 = vsub.s32 0, %v1265
        %v1267 = vrot.slane %v1262, %v1266
        %1269 = vmatprep.subr.mxu0 0.0
        %1270 = vmatpush1.msra.mxu0 0.0
        %1271 = vmatprep.subr.mxu0 0.0
        %1272 = vmatpush1.msra.mxu0 0.0
        %1273 = vmatprep.subr.mxu0 0.0
        %1274 = vmatpush1.msra.mxu0 0.0
        %1275 = vmatprep.subr.mxu0 0.0
        %1276 = vmatpush1.msra.mxu0 0.0
        %1277 = vmatprep.subr.mxu0 0.0
        %1278 = vmatpush1.msra.mxu0 0.0
        %1279 = vmatprep.subr.mxu0 0.0
        %1280 = vmatpush1.msra.mxu0 0.0
        %1281 = vmatprep.subr.mxu0 0.0
        %1282 = vmatpush1.msra.mxu0 0.0
        %1283 = vmatprep.subr.mxu0 0.0
        %1284 = vmatpush1.msra.mxu0 0.0
        %1285 = vmatprep.subr.mxu0 0.0
        %1286 = vmatpush1.msra.mxu0 0.0
        %1287 = vmatprep.subr.mxu0 0.0
        %1288 = vmatpush1.msra.mxu0 0.0
        %1289 = vmatprep.subr.mxu0 0.0
        %1290 = vmatpush1.msra.mxu0 0.0
        %1291 = vmatprep.subr.mxu0 0.0
        %1292 = vmatpush1.msra.mxu0 0.0
        %1293 = vmatprep.subr.mxu0 0.0
        %1294 = vmatpush1.msra.mxu0 %v1260
        %1295 = vmatprep.subr.mxu0 0.0
        %1296 = vmatpush1.msra.mxu0 %v1259
        %1297 = vmatprep.subr.mxu0 0.0
        %1298 = vmatpush1.msra.mxu0 %v1258
        %1299 = vmatprep.subr.mxu0 0.0
        %1300 = vmatpush1.msra.mxu0 %v1257
        %1301 = vmatprep.subr.mxu0 0.0
        %1302 = vmatpush2.msra.mxu0 0.0
        %1303 = vmatprep.subr.mxu0 0.0
        %1304 = vmatpush2.msra.mxu0 0.0
        %1305 = vmatprep.subr.mxu0 0.0
        %1306 = vmatpush2.msra.mxu0 0.0
        %1307 = vmatprep.subr.mxu0 0.0
        %1308 = vmatpush2.msra.mxu0 0.0
        %1309 = vmatprep.subr.mxu0 0.0
        %1310 = vmatpush2.msra.mxu0 0.0
        %1311 = vmatprep.subr.mxu0 0.0
        %1312 = vmatpush2.msra.mxu0 0.0
        %1313 = vmatprep.subr.mxu0 0.0
        %1314 = vmatpush2.msra.mxu0 0.0
        %1315 = vmatprep.subr.mxu0 0.0
        %1316 = vmatpush2.msra.mxu0 0.0
        %1317 = vmatprep.subr.mxu0 0.0
        %1318 = vmatpush2.msra.mxu0 0.0
        %1319 = vmatprep.subr.mxu0 0.0
        %1320 = vmatpush2.msra.mxu0 0.0
        %1321 = vmatprep.subr.mxu0 0.0
        %1322 = vmatpush2.msra.mxu0 0.0
        %1323 = vmatprep.subr.mxu0 0.0
        %1324 = vmatpush2.msra.mxu0 0.0
        %1325 = vmatprep.subr.mxu0 0.0
        %1326 = vmatpush2.msra.mxu0 0.0
        %1327 = vmatprep.subr.mxu0 0.0
        %1328 = vmatpush2.msra.mxu0 0.0
        %1329 = vmatprep.subr.mxu0 0.0
        %1330 = vmatpush2.msra.mxu0 0.0
        %1331 = vmatprep.subr.mxu0 0.0
        %1332 = vmatpush2.msra.mxu0 0.0
        %1333 = vmatprep.mubr.f32.mxu0 0.0
        %1334 = vmatmul.mubr.f32.gmra.mxu0 %v685
        %v1335 = vpop.f32.mrf.mxu0
        %v1336 = vadd.f32 %v1267, %v1335
        %v1337 = vpop.f32.mrf.mxu0
        %1338 = vdwg.mxu0
        %v1340 = vsel %vm919, %v1170, 0
        %v1343 = vsel %vm919, %v1253, 0
        %1345 = vmatprep.subr.mxu0 0.0
        %1346 = vmatpush1.xpose.msra.mxu0 0.0
        %1347 = vmatprep.subr.mxu0 0.0
        %1348 = vmatpush1.xpose.msra.mxu0 0.0
        %1349 = vmatprep.subr.mxu0 0.0
        %1350 = vmatpush1.xpose.msra.mxu0 0.0
        %1351 = vmatprep.subr.mxu0 0.0
        %1352 = vmatpush1.xpose.msra.mxu0 0.0
        %1353 = vmatprep.subr.mxu0 0.0
        %1354 = vmatpush1.xpose.msra.mxu0 0.0
        %1355 = vmatprep.subr.mxu0 0.0
        %1356 = vmatpush1.xpose.msra.mxu0 0.0
        %1357 = vmatprep.subr.mxu0 0.0
        %1358 = vmatpush1.xpose.msra.mxu0 0.0
        %1359 = vmatprep.subr.mxu0 0.0
        %1360 = vmatpush1.xpose.msra.mxu0 0.0
        %1361 = vmatprep.subr.mxu0 0.0
        %1362 = vmatpush1.xpose.msra.mxu0 0.0
        %1363 = vmatprep.subr.mxu0 0.0
        %1364 = vmatpush1.xpose.msra.mxu0 0.0
        %1365 = vmatprep.subr.mxu0 0.0
        %1366 = vmatpush1.xpose.msra.mxu0 0.0
        %1367 = vmatprep.subr.mxu0 0.0
        %1368 = vmatpush1.xpose.msra.mxu0 0.0
        %1369 = vmatprep.subr.mxu0 0.0
        %1370 = vmatpush1.xpose.msra.mxu0 0.0
        %1371 = vmatprep.subr.mxu0 0.0
        %1372 = vmatpush1.xpose.msra.mxu0 0.0
        %1373 = vmatprep.subr.mxu0 0.0
        %1374 = vmatpush1.xpose.msra.mxu0 0.0
        %1375 = vmatprep.subr.mxu0 0.0
        %1376 = vmatpush1.xpose.msra.mxu0 %v1343
        %1377 = vmatprep.subr.mxu0 0.0
        %1378 = vmatpush2.xpose.msra.mxu0 0.0
        %1379 = vmatprep.subr.mxu0 0.0
        %1380 = vmatpush2.xpose.msra.mxu0 0.0
        %1381 = vmatprep.subr.mxu0 0.0
        %1382 = vmatpush2.xpose.msra.mxu0 0.0
        %1383 = vmatprep.subr.mxu0 0.0
        %1384 = vmatpush2.xpose.msra.mxu0 0.0
        %1385 = vmatprep.subr.mxu0 0.0
        %1386 = vmatpush2.xpose.msra.mxu0 0.0
        %1387 = vmatprep.subr.mxu0 0.0
        %1388 = vmatpush2.xpose.msra.mxu0 0.0
        %1389 = vmatprep.subr.mxu0 0.0
        %1390 = vmatpush2.xpose.msra.mxu0 0.0
        %1391 = vmatprep.subr.mxu0 0.0
        %1392 = vmatpush2.xpose.msra.mxu0 0.0
        %1393 = vmatprep.subr.mxu0 0.0
        %1394 = vmatpush2.xpose.msra.mxu0 0.0
        %1395 = vmatprep.subr.mxu0 0.0
        %1396 = vmatpush2.xpose.msra.mxu0 0.0
        %1397 = vmatprep.subr.mxu0 0.0
        %1398 = vmatpush2.xpose.msra.mxu0 0.0
        %1399 = vmatprep.subr.mxu0 0.0
        %1400 = vmatpush2.xpose.msra.mxu0 0.0
        %1401 = vmatprep.subr.mxu0 0.0
        %1402 = vmatpush2.xpose.msra.mxu0 0.0
        %1403 = vmatprep.subr.mxu0 0.0
        %1404 = vmatpush2.xpose.msra.mxu0 0.0
        %1405 = vmatprep.subr.mxu0 0.0
        %1406 = vmatpush2.xpose.msra.mxu0 0.0
        %1407 = vmatprep.subr.mxu0 0.0
        %1408 = vmatpush2.xpose.msra.mxu0 0.0
        %1409 = vmatprep.mubr.f32.mxu0 0.0
        %1410 = vmatmul.mubr.f32.gmra.mxu0 %v1340
        %v1411 = vpop.f32.mrf.mxu0
        %v1412 = vadd.f32 0.0, %v1411
        %v1413 = vpop.f32.mrf.mxu0
        %1414 = vdwg.mxu0
        %v1415 = vmul.f32 %v1412, 0.25
        %v1416 = vadd.f32 %v1415, %v1001
        %v1417 = vsel %vm1004, %v1416, -inf
        %1418 = vmax.xlane.f32.xlu0 %v1417
        %v1419 = vpop.xlane.xlu0 %1418
        %v1420 = vsub.f32 %v1416, %v1419
        %v1421 = vmul.f32 %v1420, 1.442695
        %v1422 = vpow.pop %v1421
        %v1423 = vsel %vm1004, %v1422, 0.0
        %1424 = vadd.xlane.f32.xlu0 %v1423
        %v1425 = vpop.xlane.xlu0 %1424
        %v1426 = vrcp.pop %v1425
        %v1427 = vmul.f32 %v1422, %v1426
        %v1429 = vsel %vm1004, %v1427, 0
        %1431 = vmatprep.subr.mxu0 0.0
        %1432 = vmatpush1.msra.mxu0 0.0
        %1433 = vmatprep.subr.mxu0 0.0
        %1434 = vmatpush1.msra.mxu0 0.0
        %1435 = vmatprep.subr.mxu0 0.0
        %1436 = vmatpush1.msra.mxu0 0.0
        %1437 = vmatprep.subr.mxu0 0.0
        %1438 = vmatpush1.msra.mxu0 0.0
        %1439 = vmatprep.subr.mxu0 0.0
        %1440 = vmatpush1.msra.mxu0 0.0
        %1441 = vmatprep.subr.mxu0 0.0
        %1442 = vmatpush1.msra.mxu0 0.0
        %1443 = vmatprep.subr.mxu0 0.0
        %1444 = vmatpush1.msra.mxu0 0.0
        %1445 = vmatprep.subr.mxu0 0.0
        %1446 = vmatpush1.msra.mxu0 0.0
        %1447 = vmatprep.subr.mxu0 0.0
        %1448 = vmatpush1.msra.mxu0 0.0
        %1449 = vmatprep.subr.mxu0 0.0
        %1450 = vmatpush1.msra.mxu0 0.0
        %1451 = vmatprep.subr.mxu0 0.0
        %1452 = vmatpush1.msra.mxu0 0.0
        %1453 = vmatprep.subr.mxu0 0.0
        %1454 = vmatpush1.msra.mxu0 0.0
        %1455 = vmatprep.subr.mxu0 0.0
        %1456 = vmatpush1.msra.mxu0 0.0
        %1457 = vmatprep.subr.mxu0 0.0
        %1458 = vmatpush1.msra.mxu0 0.0
        %1459 = vmatprep.subr.mxu0 0.0
        %1460 = vmatpush1.msra.mxu0 0.0
        %1461 = vmatprep.subr.mxu0 0.0
        %1462 = vmatpush1.msra.mxu0 %v1336
        %1463 = vmatprep.subr.mxu0 0.0
        %1464 = vmatpush2.msra.mxu0 0.0
        %1465 = vmatprep.subr.mxu0 0.0
        %1466 = vmatpush2.msra.mxu0 0.0
        %1467 = vmatprep.subr.mxu0 0.0
        %1468 = vmatpush2.msra.mxu0 0.0
        %1469 = vmatprep.subr.mxu0 0.0
        %1470 = vmatpush2.msra.mxu0 0.0
        %1471 = vmatprep.subr.mxu0 0.0
        %1472 = vmatpush2.msra.mxu0 0.0
        %1473 = vmatprep.subr.mxu0 0.0
        %1474 = vmatpush2.msra.mxu0 0.0
        %1475 = vmatprep.subr.mxu0 0.0
        %1476 = vmatpush2.msra.mxu0 0.0
        %1477 = vmatprep.subr.mxu0 0.0
        %1478 = vmatpush2.msra.mxu0 0.0
        %1479 = vmatprep.subr.mxu0 0.0
        %1480 = vmatpush2.msra.mxu0 0.0
        %1481 = vmatprep.subr.mxu0 0.0
        %1482 = vmatpush2.msra.mxu0 0.0
        %1483 = vmatprep.subr.mxu0 0.0
        %1484 = vmatpush2.msra.mxu0 0.0
        %1485 = vmatprep.subr.mxu0 0.0
        %1486 = vmatpush2.msra.mxu0 0.0
        %1487 = vmatprep.subr.mxu0 0.0
        %1488 = vmatpush2.msra.mxu0 0.0
        %1489 = vmatprep.subr.mxu0 0.0
        %1490 = vmatpush2.msra.mxu0 0.0
        %1491 = vmatprep.subr.mxu0 0.0
        %1492 = vmatpush2.msra.mxu0 0.0
        %1493 = vmatprep.subr.mxu0 0.0
        %1494 = vmatpush2.msra.mxu0 0.0
        %1495 = vmatprep.mubr.f32.mxu0 0.0
        %1496 = vmatmul.mubr.f32.gmra.mxu0 %v1429
        %v1497 = vpop.f32.mrf.mxu0
        %v1498 = vadd.f32 0.0, %v1497
        %v1499 = vpop.f32.mrf.mxu0
        %1500 = vdwg.mxu0
        %1502 = vrot.lane.b32.xlu0 %v1498, 16
        %v1503 = vpop.permute.xlu0 %1502
        %vm1505 = vcmask 261248
        %1506 = vst.msk [vmem:[#allocation2] sm:$0xff] %vm1505, %v1503
        %v1507 = vld [vmem:[#allocation2] sm:$0xff]
        %v1508 = vld [vmem:[%s10] sm:$0xff]
        %v1509 = vld [vmem:[%s10 + $0x8] sm:$0xff]
        %v1510 = vld [vmem:[%s10 + $0x10] sm:$0xff]
        %v1511 = vld [vmem:[%s10 + $0x18] sm:$0xff]
        %v1512 = vld [vmem:[%s11] sm:$0x1]
        %v1514 = vlaneseq
        %v1515 = vshrl.u32 %v1514, 7
        %v1516 = vsub.s32 0, %v1515
        %v1517 = vrot.slane %v1512, %v1516
        %v1520 = vsel %vm644, %v1507, 0
        %1522 = vmatprep.subr.mxu0 0.0
        %1523 = vmatpush1.msra.mxu0 0.0
        %1524 = vmatprep.subr.mxu0 0.0
        %1525 = vmatpush1.msra.mxu0 0.0
        %1526 = vmatprep.subr.mxu0 0.0
        %1527 = vmatpush1.msra.mxu0 0.0
        %1528 = vmatprep.subr.mxu0 0.0
        %1529 = vmatpush1.msra.mxu0 0.0
        %1530 = vmatprep.subr.mxu0 0.0
        %1531 = vmatpush1.msra.mxu0 0.0
        %1532 = vmatprep.subr.mxu0 0.0
        %1533 = vmatpush1.msra.mxu0 0.0
        %1534 = vmatprep.subr.mxu0 0.0
        %1535 = vmatpush1.msra.mxu0 0.0
        %1536 = vmatprep.subr.mxu0 0.0
        %1537 = vmatpush1.msra.mxu0 0.0
        %1538 = vmatprep.subr.mxu0 0.0
        %1539 = vmatpush1.msra.mxu0 0.0
        %1540 = vmatprep.subr.mxu0 0.0
        %1541 = vmatpush1.msra.mxu0 0.0
        %1542 = vmatprep.subr.mxu0 0.0
        %1543 = vmatpush1.msra.mxu0 0.0
        %1544 = vmatprep.subr.mxu0 0.0
        %1545 = vmatpush1.msra.mxu0 0.0
        %1546 = vmatprep.subr.mxu0 0.0
        %1547 = vmatpush1.msra.mxu0 %v1511
        %1548 = vmatprep.subr.mxu0 0.0
        %1549 = vmatpush1.msra.mxu0 %v1510
        %1550 = vmatprep.subr.mxu0 0.0
        %1551 = vmatpush1.msra.mxu0 %v1509
        %1552 = vmatprep.subr.mxu0 0.0
        %1553 = vmatpush1.msra.mxu0 %v1508
        %1554 = vmatprep.subr.mxu0 0.0
        %1555 = vmatpush2.msra.mxu0 0.0
        %1556 = vmatprep.subr.mxu0 0.0
        %1557 = vmatpush2.msra.mxu0 0.0
        %1558 = vmatprep.subr.mxu0 0.0
        %1559 = vmatpush2.msra.mxu0 0.0
        %1560 = vmatprep.subr.mxu0 0.0
        %1561 = vmatpush2.msra.mxu0 0.0
        %1562 = vmatprep.subr.mxu0 0.0
        %1563 = vmatpush2.msra.mxu0 0.0
        %1564 = vmatprep.subr.mxu0 0.0
        %1565 = vmatpush2.msra.mxu0 0.0
        %1566 = vmatprep.subr.mxu0 0.0
        %1567 = vmatpush2.msra.mxu0 0.0
        %1568 = vmatprep.subr.mxu0 0.0
        %1569 = vmatpush2.msra.mxu0 0.0
        %1570 = vmatprep.subr.mxu0 0.0
        %1571 = vmatpush2.msra.mxu0 0.0
        %1572 = vmatprep.subr.mxu0 0.0
        %1573 = vmatpush2.msra.mxu0 0.0
        %1574 = vmatprep.subr.mxu0 0.0
        %1575 = vmatpush2.msra.mxu0 0.0
        %1576 = vmatprep.subr.mxu0 0.0
        %1577 = vmatpush2.msra.mxu0 0.0
        %1578 = vmatprep.subr.mxu0 0.0
        %1579 = vmatpush2.msra.mxu0 0.0
        %1580 = vmatprep.subr.mxu0 0.0
        %1581 = vmatpush2.msra.mxu0 0.0
        %1582 = vmatprep.subr.mxu0 0.0
        %1583 = vmatpush2.msra.mxu0 0.0
        %1584 = vmatprep.subr.mxu0 0.0
        %1585 = vmatpush2.msra.mxu0 0.0
        %1586 = vmatprep.mubr.f32.mxu0 0.0
        %1587 = vmatmul.mubr.f32.gmra.mxu0 %v1520
        %v1588 = vpop.f32.mrf.mxu0
        %v1589 = vadd.f32 %v1517, %v1588
        %v1590 = vpop.f32.mrf.mxu0
        %1591 = vdwg.mxu0
        %v1592 = vadd.f32 %v1589, %v672
        %v1593 = vld [vmem:[%s12] sm:$0x1]
        %v1594 = vld [vmem:[%s13] sm:$0x1]
        %v1595 = vsel %vm644, %v1592, 0.0
        %1596 = vadd.xlane.f32.xlu0 %v1595
        %v1597 = vpop.xlane.xlu0 %1596
        %v1598 = vmul.f32 %v1597, %v648
        %v1599 = vsub.f32 %v1592, %v1598
        %v1600 = vmul.f32 %v1599, %v1599
        %v1601 = vsel %vm644, %v1600, 0.0
        %1602 = vadd.xlane.f32.xlu0 %v1601
        %v1603 = vpop.xlane.xlu0 %1602
        %v1604 = vmul.f32 %v1603, %v648
        %v1605 = vadd.f32 %v1604, 1e-12
        %v1606 = vrsqrt.pop %v1605
        %v1607 = vmul.f32 %v1599, %v1606
        %v1609 = vlaneseq
        %v1610 = vshrl.u32 %v1609, 7
        %v1611 = vsub.s32 0, %v1610
        %v1612 = vrot.slane %v1593, %v1611
        %v1614 = vmul.f32 %v1607, %v1612
        %v1616 = vlaneseq
        %v1617 = vshrl.u32 %v1616, 7
        %v1618 = vsub.s32 0, %v1617
        %v1619 = vrot.slane %v1594, %v1618
        %v1621 = vadd.f32 %v1614, %v1619
        %v1622 = vld [vmem:[%s14] sm:$0xff]
        %v1623 = vld [vmem:[%s14 + $0x8] sm:$0xff]
        %v1624 = vld [vmem:[%s14 + $0x10] sm:$0xff]
        %v1625 = vld [vmem:[%s14 + $0x18] sm:$0xff]
        %v1626 = vld [vmem:[%s15] sm:$0x1]
        %v1628 = vlaneseq
        %v1629 = vshrl.u32 %v1628, 7
        %v1630 = vsub.s32 0, %v1629
        %v1631 = vrot.slane %v1626, %v1630
        %v1634 = vsel %vm644, %v1621, 0
        %1636 = vmatprep.subr.mxu0 0.0
        %1637 = vmatpush1.msra.mxu0 0.0
        %1638 = vmatprep.subr.mxu0 0.0
        %1639 = vmatpush1.msra.mxu0 0.0
        %1640 = vmatprep.subr.mxu0 0.0
        %1641 = vmatpush1.msra.mxu0 0.0
        %1642 = vmatprep.subr.mxu0 0.0
        %1643 = vmatpush1.msra.mxu0 0.0
        %1644 = vmatprep.subr.mxu0 0.0
        %1645 = vmatpush1.msra.mxu0 0.0
        %1646 = vmatprep.subr.mxu0 0.0
        %1647 = vmatpush1.msra.mxu0 0.0
        %1648 = vmatprep.subr.mxu0 0.0
        %1649 = vmatpush1.msra.mxu0 0.0
        %1650 = vmatprep.subr.mxu0 0.0
        %1651 = vmatpush1.msra.mxu0 0.0
        %1652 = vmatprep.subr.mxu0 0.0
        %1653 = vmatpush1.msra.mxu0 0.0
        %1654 = vmatprep.subr.mxu0 0.0
        %1655 = vmatpush1.msra.mxu0 0.0
        %1656 = vmatprep.subr.mxu0 0.0
        %1657 = vmatpush1.msra.mxu0 0.0
        %1658 = vmatprep.subr.mxu0 0.0
        %1659 = vmatpush1.msra.mxu0 0.0
        %1660 = vmatprep.subr.mxu0 0.0
        %1661 = vmatpush1.msra.mxu0 %v1625
        %1662 = vmatprep.subr.mxu0 0.0
        %1663 = vmatpush1.msra.mxu0 %v1624
        %1664 = vmatprep.subr.mxu0 0.0
        %1665 = vmatpush1.msra.mxu0 %v1623
        %1666 = vmatprep.subr.mxu0 0.0
        %1667 = vmatpush1.msra.mxu0 %v1622
        %1668 = vmatprep.subr.mxu0 0.0
        %1669 = vmatpush2.msra.mxu0 0.0
        %1670 = vmatprep.subr.mxu0 0.0
        %1671 = vmatpush2.msra.mxu0 0.0
        %1672 = vmatprep.subr.mxu0 0.0
        %1673 = vmatpush2.msra.mxu0 0.0
        %1674 = vmatprep.subr.mxu0 0.0
        %1675 = vmatpush2.msra.mxu0 0.0
        %1676 = vmatprep.subr.mxu0 0.0
        %1677 = vmatpush2.msra.mxu0 0.0
        %1678 = vmatprep.subr.mxu0 0.0
        %1679 = vmatpush2.msra.mxu0 0.0
        %1680 = vmatprep.subr.mxu0 0.0
        %1681 = vmatpush2.msra.mxu0 0.0
        %1682 = vmatprep.subr.mxu0 0.0
        %1683 = vmatpush2.msra.mxu0 0.0
        %1684 = vmatprep.subr.mxu0 0.0
        %1685 = vmatpush2.msra.mxu0 0.0
        %1686 = vmatprep.subr.mxu0 0.0
        %1687 = vmatpush2.msra.mxu0 0.0
        %1688 = vmatprep.subr.mxu0 0.0
        %1689 = vmatpush2.msra.mxu0 0.0
        %1690 = vmatprep.subr.mxu0 0.0
        %1691 = vmatpush2.msra.mxu0 0.0
        %1692 = vmatprep.subr.mxu0 0.0
        %1693 = vmatpush2.msra.mxu0 0.0
        %1694 = vmatprep.subr.mxu0 0.0
        %1695 = vmatpush2.msra.mxu0 0.0
        %1696 = vmatprep.subr.mxu0 0.0
        %1697 = vmatpush2.msra.mxu0 0.0
        %1698 = vmatprep.subr.mxu0 0.0
        %1699 = vmatpush2.msra.mxu0 0.0
        %1700 = vmatprep.mubr.f32.mxu0 0.0
        %1701 = vmatmul.mubr.f32.gmra.mxu0 %v1634
        %v1702 = vpop.f32.mrf.mxu0
        %v1703 = vadd.f32 %v1631, %v1702
        %v1704 = vpop.f32.mrf.mxu0
        %1705 = vdwg.mxu0
        %v1706 = vmul.f32 %v1703, 0.5
        %v1707 = vmul.f32 %v1703, 0.70710677
        %v1708 = verf.f32.pop %v1707
        %v1709 = vadd.f32 %v1708, 1.0
        %v1710 = vmul.f32 %v1706, %v1709
        %v1711 = vld [vmem:[%s16] sm:$0xff]
        %v1712 = vld [vmem:[%s16 + $0x8] sm:$0xff]
        %v1713 = vld [vmem:[%s16 + $0x10] sm:$0xff]
        %v1714 = vld [vmem:[%s16 + $0x18] sm:$0xff]
        %v1715 = vld [vmem:[%s16 + $0x20] sm:$0xff]
        %v1716 = vld [vmem:[%s16 + $0x28] sm:$0xff]
        %v1717 = vld [vmem:[%s16 + $0x30] sm:$0xff]
        %v1718 = vld [vmem:[%s16 + $0x38] sm:$0xff]
        %v1719 = vld [vmem:[%s17] sm:$0x1]
        %v1721 = vlaneseq
        %v1722 = vshrl.u32 %v1721, 7
        %v1723 = vsub.s32 0, %v1722
        %v1724 = vrot.slane %v1719, %v1723
        %vm1726 = vcmask 523264
        %v1728 = vsel %vm1726, %v1710, 0
        %1730 = vmatprep.subr.mxu0 0.0
        %1731 = vmatpush1.msra.mxu0 0.0
        %1732 = vmatprep.subr.mxu0 0.0
        %1733 = vmatpush1.msra.mxu0 0.0
        %1734 = vmatprep.subr.mxu0 0.0
        %1735 = vmatpush1.msra.mxu0 0.0
        %1736 = vmatprep.subr.mxu0 0.0
        %1737 = vmatpush1.msra.mxu0 0.0
        %1738 = vmatprep.subr.mxu0 0.0
        %1739 = vmatpush1.msra.mxu0 0.0
        %1740 = vmatprep.subr.mxu0 0.0
        %1741 = vmatpush1.msra.mxu0 0.0
        %1742 = vmatprep.subr.mxu0 0.0
        %1743 = vmatpush1.msra.mxu0 0.0
        %1744 = vmatprep.subr.mxu0 0.0
        %1745 = vmatpush1.msra.mxu0 0.0
        %1746 = vmatprep.subr.mxu0 0.0
        %1747 = vmatpush1.msra.mxu0 %v1718
        %1748 = vmatprep.subr.mxu0 0.0
        %1749 = vmatpush1.msra.mxu0 %v1717
        %1750 = vmatprep.subr.mxu0 0.0
        %1751 = vmatpush1.msra.mxu0 %v1716
        %1752 = vmatprep.subr.mxu0 0.0
        %1753 = vmatpush1.msra.mxu0 %v1715
        %1754 = vmatprep.subr.mxu0 0.0
        %1755 = vmatpush1.msra.mxu0 %v1714
        %1756 = vmatprep.subr.mxu0 0.0
        %1757 = vmatpush1.msra.mxu0 %v1713
        %1758 = vmatprep.subr.mxu0 0.0
        %1759 = vmatpush1.msra.mxu0 %v1712
        %1760 = vmatprep.subr.mxu0 0.0
        %1761 = vmatpush1.msra.mxu0 %v1711
        %1762 = vmatprep.subr.mxu0 0.0
        %1763 = vmatpush2.msra.mxu0 0.0
        %1764 = vmatprep.subr.mxu0 0.0
        %1765 = vmatpush2.msra.mxu0 0.0
        %1766 = vmatprep.subr.mxu0 0.0
        %1767 = vmatpush2.msra.mxu0 0.0
        %1768 = vmatprep.subr.mxu0 0.0
        %1769 = vmatpush2.msra.mxu0 0.0
        %1770 = vmatprep.subr.mxu0 0.0
        %1771 = vmatpush2.msra.mxu0 0.0
        %1772 = vmatprep.subr.mxu0 0.0
        %1773 = vmatpush2.msra.mxu0 0.0
        %1774 = vmatprep.subr.mxu0 0.0
        %1775 = vmatpush2.msra.mxu0 0.0
        %1776 = vmatprep.subr.mxu0 0.0
        %1777 = vmatpush2.msra.mxu0 0.0
        %1778 = vmatprep.subr.mxu0 0.0
        %1779 = vmatpush2.msra.mxu0 0.0
        %1780 = vmatprep.subr.mxu0 0.0
        %1781 = vmatpush2.msra.mxu0 0.0
        %1782 = vmatprep.subr.mxu0 0.0
        %1783 = vmatpush2.msra.mxu0 0.0
        %1784 = vmatprep.subr.mxu0 0.0
        %1785 = vmatpush2.msra.mxu0 0.0
        %1786 = vmatprep.subr.mxu0 0.0
        %1787 = vmatpush2.msra.mxu0 0.0
        %1788 = vmatprep.subr.mxu0 0.0
        %1789 = vmatpush2.msra.mxu0 0.0
        %1790 = vmatprep.subr.mxu0 0.0
        %1791 = vmatpush2.msra.mxu0 0.0
        %1792 = vmatprep.subr.mxu0 0.0
        %1793 = vmatpush2.msra.mxu0 0.0
        %1794 = vmatprep.mubr.f32.mxu0 0.0
        %1795 = vmatmul.mubr.f32.gmra.mxu0 %v1728
        %v1796 = vpop.f32.mrf.mxu0
        %v1797 = vadd.f32 %v1724, %v1796
        %v1798 = vpop.f32.mrf.mxu0
        %1799 = vdwg.mxu0
        %v1800 = vadd.f32 %v1797, %v1621
        %v1801 = vld [vmem:[%s18] sm:$0x1]
        %v1802 = vld [vmem:[%s19] sm:$0x1]
        %v1803 = vsel %vm644, %v1800, 0.0
        %1804 = vadd.xlane.f32.xlu0 %v1803
        %v1805 = vpop.xlane.xlu0 %1804
        %v1806 = vmul.f32 %v1805, %v648
        %v1807 = vsub.f32 %v1800, %v1806
        %v1808 = vmul.f32 %v1807, %v1807
        %v1809 = vsel %vm644, %v1808, 0.0
        %1810 = vadd.xlane.f32.xlu0 %v1809
        %v1811 = vpop.xlane.xlu0 %1810
        %v1812 = vmul.f32 %v1811, %v648
        %v1813 = vadd.f32 %v1812, 1e-12
        %v1814 = vrsqrt.pop %v1813
        %v1815 = vmul.f32 %v1807, %v1814
        %v1817 = vlaneseq
        %v1818 = vshrl.u32 %v1817, 7
        %v1819 = vsub.s32 0, %v1818
        %v1820 = vrot.slane %v1801, %v1819
        %v1822 = vmul.f32 %v1815, %v1820
        %v1824 = vlaneseq
        %v1825 = vshrl.u32 %v1824, 7
        %v1826 = vsub.s32 0, %v1825
        %v1827 = vrot.slane %v1802, %v1826
        %v1829 = vadd.f32 %v1822, %v1827
        %s1830 = scalar_lea.vmem %s4, 64
        %v1831 = vld [vmem:[%s1830] sm:$0xff]
        %v1832 = vld [vmem:[%s1830 + $0x8] sm:$0xff]
        %v1833 = vld [vmem:[%s1830 + $0x10] sm:$0xff]
        %v1834 = vld [vmem:[%s1830 + $0x18] sm:$0xff]
        %s1835 = scalar_lea.vmem %s5, 2
        %v1836 = vld [vmem:[%s1835] sm:$0x1]
        %v1838 = vlaneseq
        %v1839 = vshrl.u32 %v1838, 7
        %v1840 = vsub.s32 0, %v1839
        %v1841 = vrot.slane %v1836, %v1840
        %v1844 = vsel %vm644, %v1829, 0
        %1846 = vmatprep.subr.mxu0 0.0
        %1847 = vmatpush1.msra.mxu0 0.0
        %1848 = vmatprep.subr.mxu0 0.0
        %1849 = vmatpush1.msra.mxu0 0.0
        %1850 = vmatprep.subr.mxu0 0.0
        %1851 = vmatpush1.msra.mxu0 0.0
        %1852 = vmatprep.subr.mxu0 0.0
        %1853 = vmatpush1.msra.mxu0 0.0
        %1854 = vmatprep.subr.mxu0 0.0
        %1855 = vmatpush1.msra.mxu0 0.0
        %1856 = vmatprep.subr.mxu0 0.0
        %1857 = vmatpush1.msra.mxu0 0.0
        %1858 = vmatprep.subr.mxu0 0.0
        %1859 = vmatpush1.msra.mxu0 0.0
        %1860 = vmatprep.subr.mxu0 0.0
        %1861 = vmatpush1.msra.mxu0 0.0
        %1862 = vmatprep.subr.mxu0 0.0
        %1863 = vmatpush1.msra.mxu0 0.0
        %1864 = vmatprep.subr.mxu0 0.0
        %1865 = vmatpush1.msra.mxu0 0.0
        %1866 = vmatprep.subr.mxu0 0.0
        %1867 = vmatpush1.msra.mxu0 0.0
        %1868 = vmatprep.subr.mxu0 0.0
        %1869 = vmatpush1.msra.mxu0 0.0
        %1870 = vmatprep.subr.mxu0 0.0
        %1871 = vmatpush1.msra.mxu0 %v1834
        %1872 = vmatprep.subr.mxu0 0.0
        %1873 = vmatpush1.msra.mxu0 %v1833
        %1874 = vmatprep.subr.mxu0 0.0
        %1875 = vmatpush1.msra.mxu0 %v1832
        %1876 = vmatprep.subr.mxu0 0.0
        %1877 = vmatpush1.msra.mxu0 %v1831
        %1878 = vmatprep.subr.mxu0 0.0
        %1879 = vmatpush2.msra.mxu0 0.0
        %1880 = vmatprep.subr.mxu0 0.0
        %1881 = vmatpush2.msra.mxu0 0.0
        %1882 = vmatprep.subr.mxu0 0.0
        %1883 = vmatpush2.msra.mxu0 0.0
        %1884 = vmatprep.subr.mxu0 0.0
        %1885 = vmatpush2.msra.mxu0 0.0
        %1886 = vmatprep.subr.mxu0 0.0
        %1887 = vmatpush2.msra.mxu0 0.0
        %1888 = vmatprep.subr.mxu0 0.0
        %1889 = vmatpush2.msra.mxu0 0.0
        %1890 = vmatprep.subr.mxu0 0.0
        %1891 = vmatpush2.msra.mxu0 0.0
        %1892 = vmatprep.subr.mxu0 0.0
        %1893 = vmatpush2.msra.mxu0 0.0
        %1894 = vmatprep.subr.mxu0 0.0
        %1895 = vmatpush2.msra.mxu0 0.0
        %1896 = vmatprep.subr.mxu0 0.0
        %1897 = vmatpush2.msra.mxu0 0.0
        %1898 = vmatprep.subr.mxu0 0.0
        %1899 = vmatpush2.msra.mxu0 0.0
        %1900 = vmatprep.subr.mxu0 0.0
        %1901 = vmatpush2.msra.mxu0 0.0
        %1902 = vmatprep.subr.mxu0 0.0
        %1903 = vmatpush2.msra.mxu0 0.0
        %1904 = vmatprep.subr.mxu0 0.0
        %1905 = vmatpush2.msra.mxu0 0.0
        %1906 = vmatprep.subr.mxu0 0.0
        %1907 = vmatpush2.msra.mxu0 0.0
        %1908 = vmatprep.subr.mxu0 0.0
        %1909 = vmatpush2.msra.mxu0 0.0
        %1910 = vmatprep.mubr.f32.mxu0 0.0
        %1911 = vmatmul.mubr.f32.gmra.mxu0 %v1844
        %v1912 = vpop.f32.mrf.mxu0
        %v1913 = vadd.f32 %v1841, %v1912
        %v1914 = vpop.f32.mrf.mxu0
        %1915 = vdwg.mxu0
        %s1916 = scalar_lea.vmem %s6, 64
        %v1917 = vld [vmem:[%s1916] sm:$0xff]
        %v1918 = vld [vmem:[%s1916 + $0x8] sm:$0xff]
        %v1919 = vld [vmem:[%s1916 + $0x10] sm:$0xff]
        %v1920 = vld [vmem:[%s1916 + $0x18] sm:$0xff]
        %s1921 = scalar_lea.vmem %s7, 2
        %v1922 = vld [vmem:[%s1921] sm:$0x1]
        %v1924 = vlaneseq
        %v1925 = vshrl.u32 %v1924, 7
        %v1926 = vsub.s32 0, %v1925
        %v1927 = vrot.slane %v1922, %v1926
        %1929 = vmatprep.subr.mxu0 0.0
        %1930 = vmatpush1.msra.mxu0 0.0
        %1931 = vmatprep.subr.mxu0 0.0
        %1932 = vmatpush1.msra.mxu0 0.0
        %1933 = vmatprep.subr.mxu0 0.0
        %1934 = vmatpush1.msra.mxu0 0.0
        %1935 = vmatprep.subr.mxu0 0.0
        %1936 = vmatpush1.msra.mxu0 0.0
        %1937 = vmatprep.subr.mxu0 0.0
        %1938 = vmatpush1.msra.mxu0 0.0
        %1939 = vmatprep.subr.mxu0 0.0
        %1940 = vmatpush1.msra.mxu0 0.0
        %1941 = vmatprep.subr.mxu0 0.0
        %1942 = vmatpush1.msra.mxu0 0.0
        %1943 = vmatprep.subr.mxu0 0.0
        %1944 = vmatpush1.msra.mxu0 0.0
        %1945 = vmatprep.subr.mxu0 0.0
        %1946 = vmatpush1.msra.mxu0 0.0
        %1947 = vmatprep.subr.mxu0 0.0
        %1948 = vmatpush1.msra.mxu0 0.0
        %1949 = vmatprep.subr.mxu0 0.0
        %1950 = vmatpush1.msra.mxu0 0.0
        %1951 = vmatprep.subr.mxu0 0.0
        %1952 = vmatpush1.msra.mxu0 0.0
        %1953 = vmatprep.subr.mxu0 0.0
        %1954 = vmatpush1.msra.mxu0 %v1920
        %1955 = vmatprep.subr.mxu0 0.0
        %1956 = vmatpush1.msra.mxu0 %v1919
        %1957 = vmatprep.subr.mxu0 0.0
        %1958 = vmatpush1.msra.mxu0 %v1918
        %1959 = vmatprep.subr.mxu0 0.0
        %1960 = vmatpush1.msra.mxu0 %v1917
        %1961 = vmatprep.subr.mxu0 0.0
        %1962 = vmatpush2.msra.mxu0 0.0
        %1963 = vmatprep.subr.mxu0 0.0
        %1964 = vmatpush2.msra.mxu0 0.0
        %1965 = vmatprep.subr.mxu0 0.0
        %1966 = vmatpush2.msra.mxu0 0.0
        %1967 = vmatprep.subr.mxu0 0.0
        %1968 = vmatpush2.msra.mxu0 0.0
        %1969 = vmatprep.subr.mxu0 0.0
        %1970 = vmatpush2.msra.mxu0 0.0
        %1971 = vmatprep.subr.mxu0 0.0
        %1972 = vmatpush2.msra.mxu0 0.0
        %1973 = vmatprep.subr.mxu0 0.0
        %1974 = vmatpush2.msra.mxu0 0.0
        %1975 = vmatprep.subr.mxu0 0.0
        %1976 = vmatpush2.msra.mxu0 0.0
        %1977 = vmatprep.subr.mxu0 0.0
        %1978 = vmatpush2.msra.mxu0 0.0
        %1979 = vmatprep.subr.mxu0 0.0
        %1980 = vmatpush2.msra.mxu0 0.0
        %1981 = vmatprep.subr.mxu0 0.0
        %1982 = vmatpush2.msra.mxu0 0.0
        %1983 = vmatprep.subr.mxu0 0.0
        %1984 = vmatpush2.msra.mxu0 0.0
        %1985 = vmatprep.subr.mxu0 0.0
        %1986 = vmatpush2.msra.mxu0 0.0
        %1987 = vmatprep.subr.mxu0 0.0
        %1988 = vmatpush2.msra.mxu0 0.0
        %1989 = vmatprep.subr.mxu0 0.0
        %1990 = vmatpush2.msra.mxu0 0.0
        %1991 = vmatprep.subr.mxu0 0.0
        %1992 = vmatpush2.msra.mxu0 0.0
        %1993 = vmatprep.mubr.f32.mxu0 0.0
        %1994 = vmatmul.mubr.f32.gmra.mxu0 %v1844
        %v1995 = vpop.f32.mrf.mxu0
        %v1996 = vadd.f32 %v1927, %v1995
        %v1997 = vpop.f32.mrf.mxu0
        %1998 = vdwg.mxu0
        %s1999 = scalar_lea.vmem %s8, 64
        %v2000 = vld [vmem:[%s1999] sm:$0xff]
        %v2001 = vld [vmem:[%s1999 + $0x8] sm:$0xff]
        %v2002 = vld [vmem:[%s1999 + $0x10] sm:$0xff]
        %v2003 = vld [vmem:[%s1999 + $0x18] sm:$0xff]
        %s2004 = scalar_lea.vmem %s9, 2
        %v2005 = vld [vmem:[%s2004] sm:$0x1]
        %v2007 = vlaneseq
        %v2008 = vshrl.u32 %v2007, 7
        %v2009 = vsub.s32 0, %v2008
        %v2010 = vrot.slane %v2005, %v2009
        %2012 = vmatprep.subr.mxu0 0.0
        %2013 = vmatpush1.msra.mxu0 0.0
        %2014 = vmatprep.subr.mxu0 0.0
        %2015 = vmatpush1.msra.mxu0 0.0
        %2016 = vmatprep.subr.mxu0 0.0
        %2017 = vmatpush1.msra.mxu0 0.0
        %2018 = vmatprep.subr.mxu0 0.0
        %2019 = vmatpush1.msra.mxu0 0.0
        %2020 = vmatprep.subr.mxu0 0.0
        %2021 = vmatpush1.msra.mxu0 0.0
        %2022 = vmatprep.subr.mxu0 0.0
        %2023 = vmatpush1.msra.mxu0 0.0
        %2024 = vmatprep.subr.mxu0 0.0
        %2025 = vmatpush1.msra.mxu0 0.0
        %2026 = vmatprep.subr.mxu0 0.0
        %2027 = vmatpush1.msra.mxu0 0.0
        %2028 = vmatprep.subr.mxu0 0.0
        %2029 = vmatpush1.msra.mxu0 0.0
        %2030 = vmatprep.subr.mxu0 0.0
        %2031 = vmatpush1.msra.mxu0 0.0
        %2032 = vmatprep.subr.mxu0 0.0
        %2033 = vmatpush1.msra.mxu0 0.0
        %2034 = vmatprep.subr.mxu0 0.0
        %2035 = vmatpush1.msra.mxu0 0.0
        %2036 = vmatprep.subr.mxu0 0.0
        %2037 = vmatpush1.msra.mxu0 %v2003
        %2038 = vmatprep.subr.mxu0 0.0
        %2039 = vmatpush1.msra.mxu0 %v2002
        %2040 = vmatprep.subr.mxu0 0.0
        %2041 = vmatpush1.msra.mxu0 %v2001
        %2042 = vmatprep.subr.mxu0 0.0
        %2043 = vmatpush1.msra.mxu0 %v2000
        %2044 = vmatprep.subr.mxu0 0.0
        %2045 = vmatpush2.msra.mxu0 0.0
        %2046 = vmatprep.subr.mxu0 0.0
        %2047 = vmatpush2.msra.mxu0 0.0
        %2048 = vmatprep.subr.mxu0 0.0
        %2049 = vmatpush2.msra.mxu0 0.0
        %2050 = vmatprep.subr.mxu0 0.0
        %2051 = vmatpush2.msra.mxu0 0.0
        %2052 = vmatprep.subr.mxu0 0.0
        %2053 = vmatpush2.msra.mxu0 0.0
        %2054 = vmatprep.subr.mxu0 0.0
        %2055 = vmatpush2.msra.mxu0 0.0
        %2056 = vmatprep.subr.mxu0 0.0
        %2057 = vmatpush2.msra.mxu0 0.0
        %2058 = vmatprep.subr.mxu0 0.0
        %2059 = vmatpush2.msra.mxu0 0.0
        %2060 = vmatprep.subr.mxu0 0.0
        %2061 = vmatpush2.msra.mxu0 0.0
        %2062 = vmatprep.subr.mxu0 0.0
        %2063 = vmatpush2.msra.mxu0 0.0
        %2064 = vmatprep.subr.mxu0 0.0
        %2065 = vmatpush2.msra.mxu0 0.0
        %2066 = vmatprep.subr.mxu0 0.0
        %2067 = vmatpush2.msra.mxu0 0.0
        %2068 = vmatprep.subr.mxu0 0.0
        %2069 = vmatpush2.msra.mxu0 0.0
        %2070 = vmatprep.subr.mxu0 0.0
        %2071 = vmatpush2.msra.mxu0 0.0
        %2072 = vmatprep.subr.mxu0 0.0
        %2073 = vmatpush2.msra.mxu0 0.0
        %2074 = vmatprep.subr.mxu0 0.0
        %2075 = vmatpush2.msra.mxu0 0.0
        %2076 = vmatprep.mubr.f32.mxu0 0.0
        %2077 = vmatmul.mubr.f32.gmra.mxu0 %v1844
        %v2078 = vpop.f32.mrf.mxu0
        %v2079 = vadd.f32 %v2010, %v2078
        %v2080 = vpop.f32.mrf.mxu0
        %2081 = vdwg.mxu0
        %v2083 = vsel %vm919, %v1913, 0
        %v2086 = vsel %vm919, %v1996, 0
        %2088 = vmatprep.subr.mxu0 0.0
        %2089 = vmatpush1.xpose.msra.mxu0 0.0
        %2090 = vmatprep.subr.mxu0 0.0
        %2091 = vmatpush1.xpose.msra.mxu0 0.0
        %2092 = vmatprep.subr.mxu0 0.0
        %2093 = vmatpush1.xpose.msra.mxu0 0.0
        %2094 = vmatprep.subr.mxu0 0.0
        %2095 = vmatpush1.xpose.msra.mxu0 0.0
        %2096 = vmatprep.subr.mxu0 0.0
        %2097 = vmatpush1.xpose.msra.mxu0 0.0
        %2098 = vmatprep.subr.mxu0 0.0
        %2099 = vmatpush1.xpose.msra.mxu0 0.0
        %2100 = vmatprep.subr.mxu0 0.0
        %2101 = vmatpush1.xpose.msra.mxu0 0.0
        %2102 = vmatprep.subr.mxu0 0.0
        %2103 = vmatpush1.xpose.msra.mxu0 0.0
        %2104 = vmatprep.subr.mxu0 0.0
        %2105 = vmatpush1.xpose.msra.mxu0 0.0
        %2106 = vmatprep.subr.mxu0 0.0
        %2107 = vmatpush1.xpose.msra.mxu0 0.0
        %2108 = vmatprep.subr.mxu0 0.0
        %2109 = vmatpush1.xpose.msra.mxu0 0.0
        %2110 = vmatprep.subr.mxu0 0.0
        %2111 = vmatpush1.xpose.msra.mxu0 0.0
        %2112 = vmatprep.subr.mxu0 0.0
        %2113 = vmatpush1.xpose.msra.mxu0 0.0
        %2114 = vmatprep.subr.mxu0 0.0
        %2115 = vmatpush1.xpose.msra.mxu0 0.0
        %2116 = vmatprep.subr.mxu0 0.0
        %2117 = vmatpush1.xpose.msra.mxu0 0.0
        %2118 = vmatprep.subr.mxu0 0.0
        %2119 = vmatpush1.xpose.msra.mxu0 %v2086
        %2120 = vmatprep.subr.mxu0 0.0
        %2121 = vmatpush2.xpose.msra.mxu0 0.0
        %2122 = vmatprep.subr.mxu0 0.0
        %2123 = vmatpush2.xpose.msra.mxu0 0.0
        %2124 = vmatprep.subr.mxu0 0.0
        %2125 = vmatpush2.xpose.msra.mxu0 0.0
        %2126 = vmatprep.subr.mxu0 0.0
        %2127 = vmatpush2.xpose.msra.mxu0 0.0
        %2128 = vmatprep.subr.mxu0 0.0
        %2129 = vmatpush2.xpose.msra.mxu0 0.0
        %2130 = vmatprep.subr.mxu0 0.0
        %2131 = vmatpush2.xpose.msra.mxu0 0.0
        %2132 = vmatprep.subr.mxu0 0.0
        %2133 = vmatpush2.xpose.msra.mxu0 0.0
        %2134 = vmatprep.subr.mxu0 0.0
        %2135 = vmatpush2.xpose.msra.mxu0 0.0
        %2136 = vmatprep.subr.mxu0 0.0
        %2137 = vmatpush2.xpose.msra.mxu0 0.0
        %2138 = vmatprep.subr.mxu0 0.0
        %2139 = vmatpush2.xpose.msra.mxu0 0.0
        %2140 = vmatprep.subr.mxu0 0.0
        %2141 = vmatpush2.xpose.msra.mxu0 0.0
        %2142 = vmatprep.subr.mxu0 0.0
        %2143 = vmatpush2.xpose.msra.mxu0 0.0
        %2144 = vmatprep.subr.mxu0 0.0
        %2145 = vmatpush2.xpose.msra.mxu0 0.0
        %2146 = vmatprep.subr.mxu0 0.0
        %2147 = vmatpush2.xpose.msra.mxu0 0.0
        %2148 = vmatprep.subr.mxu0 0.0
        %2149 = vmatpush2.xpose.msra.mxu0 0.0
        %2150 = vmatprep.subr.mxu0 0.0
        %2151 = vmatpush2.xpose.msra.mxu0 0.0
        %2152 = vmatprep.mubr.f32.mxu0 0.0
        %2153 = vmatmul.mubr.f32.gmra.mxu0 %v2083
        %v2154 = vpop.f32.mrf.mxu0
        %v2155 = vadd.f32 0.0, %v2154
        %v2156 = vpop.f32.mrf.mxu0
        %2157 = vdwg.mxu0
        %v2158 = vmul.f32 %v2155, 0.25
        %v2159 = vadd.f32 %v2158, %v1001
        %v2160 = vsel %vm1004, %v2159, -inf
        %2161 = vmax.xlane.f32.xlu0 %v2160
        %v2162 = vpop.xlane.xlu0 %2161
        %v2163 = vsub.f32 %v2159, %v2162
        %v2164 = vmul.f32 %v2163, 1.442695
        %v2165 = vpow.pop %v2164
        %v2166 = vsel %vm1004, %v2165, 0.0
        %2167 = vadd.xlane.f32.xlu0 %v2166
        %v2168 = vpop.xlane.xlu0 %2167
        %v2169 = vrcp.pop %v2168
        %v2170 = vmul.f32 %v2165, %v2169
        %v2172 = vsel %vm1004, %v2170, 0
        %2174 = vmatprep.subr.mxu0 0.0
        %2175 = vmatpush1.msra.mxu0 0.0
        %2176 = vmatprep.subr.mxu0 0.0
        %2177 = vmatpush1.msra.mxu0 0.0
        %2178 = vmatprep.subr.mxu0 0.0
        %2179 = vmatpush1.msra.mxu0 0.0
        %2180 = vmatprep.subr.mxu0 0.0
        %2181 = vmatpush1.msra.mxu0 0.0
        %2182 = vmatprep.subr.mxu0 0.0
        %2183 = vmatpush1.msra.mxu0 0.0
        %2184 = vmatprep.subr.mxu0 0.0
        %2185 = vmatpush1.msra.mxu0 0.0
        %2186 = vmatprep.subr.mxu0 0.0
        %2187 = vmatpush1.msra.mxu0 0.0
        %2188 = vmatprep.subr.mxu0 0.0
        %2189 = vmatpush1.msra.mxu0 0.0
        %2190 = vmatprep.subr.mxu0 0.0
        %2191 = vmatpush1.msra.mxu0 0.0
        %2192 = vmatprep.subr.mxu0 0.0
        %2193 = vmatpush1.msra.mxu0 0.0
        %2194 = vmatprep.subr.mxu0 0.0
        %2195 = vmatpush1.msra.mxu0 0.0
        %2196 = vmatprep.subr.mxu0 0.0
        %2197 = vmatpush1.msra.mxu0 0.0
        %2198 = vmatprep.subr.mxu0 0.0
        %2199 = vmatpush1.msra.mxu0 0.0
        %2200 = vmatprep.subr.mxu0 0.0
        %2201 = vmatpush1.msra.mxu0 0.0
        %2202 = vmatprep.subr.mxu0 0.0
        %2203 = vmatpush1.msra.mxu0 0.0
        %2204 = vmatprep.subr.mxu0 0.0
        %2205 = vmatpush1.msra.mxu0 %v2079
        %2206 = vmatprep.subr.mxu0 0.0
        %2207 = vmatpush2.msra.mxu0 0.0
        %2208 = vmatprep.subr.mxu0 0.0
        %2209 = vmatpush2.msra.mxu0 0.0
        %2210 = vmatprep.subr.mxu0 0.0
        %2211 = vmatpush2.msra.mxu0 0.0
        %2212 = vmatprep.subr.mxu0 0.0
        %2213 = vmatpush2.msra.mxu0 0.0
        %2214 = vmatprep.subr.mxu0 0.0
        %2215 = vmatpush2.msra.mxu0 0.0
        %2216 = vmatprep.subr.mxu0 0.0
        %2217 = vmatpush2.msra.mxu0 0.0
        %2218 = vmatprep.subr.mxu0 0.0
        %2219 = vmatpush2.msra.mxu0 0.0
        %2220 = vmatprep.subr.mxu0 0.0
        %2221 = vmatpush2.msra.mxu0 0.0
        %2222 = vmatprep.subr.mxu0 0.0
        %2223 = vmatpush2.msra.mxu0 0.0
        %2224 = vmatprep.subr.mxu0 0.0
        %2225 = vmatpush2.msra.mxu0 0.0
        %2226 = vmatprep.subr.mxu0 0.0
        %2227 = vmatpush2.msra.mxu0 0.0
        %2228 = vmatprep.subr.mxu0 0.0
        %2229 = vmatpush2.msra.mxu0 0.0
        %2230 = vmatprep.subr.mxu0 0.0
        %2231 = vmatpush2.msra.mxu0 0.0
        %2232 = vmatprep.subr.mxu0 0.0
        %2233 = vmatpush2.msra.mxu0 0.0
        %2234 = vmatprep.subr.mxu0 0.0
        %2235 = vmatpush2.msra.mxu0 0.0
        %2236 = vmatprep.subr.mxu0 0.0
        %2237 = vmatpush2.msra.mxu0 0.0
        %2238 = vmatprep.mubr.f32.mxu0 0.0
        %2239 = vmatmul.mubr.f32.gmra.mxu0 %v2172
        %v2240 = vpop.f32.mrf.mxu0
        %v2241 = vadd.f32 0.0, %v2240
        %v2242 = vpop.f32.mrf.mxu0
        %2243 = vdwg.mxu0
        %2244 = vst.msk [vmem:[#allocation2] sm:$0xff] %vm919, %v2241
        %s2245 = scalar_lea.vmem %s4, 96
        %v2246 = vld [vmem:[%s2245] sm:$0xff]
        %v2247 = vld [vmem:[%s2245 + $0x8] sm:$0xff]
        %v2248 = vld [vmem:[%s2245 + $0x10] sm:$0xff]
        %v2249 = vld [vmem:[%s2245 + $0x18] sm:$0xff]
        %s2250 = scalar_lea.vmem %s5, 3
        %v2251 = vld [vmem:[%s2250] sm:$0x1]
        %v2253 = vlaneseq
        %v2254 = vshrl.u32 %v2253, 7
        %v2255 = vsub.s32 0, %v2254
        %v2256 = vrot.slane %v2251, %v2255
        %2258 = vmatprep.subr.mxu0 0.0
        %2259 = vmatpush1.msra.mxu0 0.0
        %2260 = vmatprep.subr.mxu0 0.0
        %2261 = vmatpush1.msra.mxu0 0.0
        %2262 = vmatprep.subr.mxu0 0.0
        %2263 = vmatpush1.msra.mxu0 0.0
        %2264 = vmatprep.subr.mxu0 0.0
        %2265 = vmatpush1.msra.mxu0 0.0
        %2266 = vmatprep.subr.mxu0 0.0
        %2267 = vmatpush1.msra.mxu0 0.0
        %2268 = vmatprep.subr.mxu0 0.0
        %2269 = vmatpush1.msra.mxu0 0.0
        %2270 = vmatprep.subr.mxu0 0.0
        %2271 = vmatpush1.msra.mxu0 0.0
        %2272 = vmatprep.subr.mxu0 0.0
        %2273 = vmatpush1.msra.mxu0 0.0
        %2274 = vmatprep.subr.mxu0 0.0
        %2275 = vmatpush1.msra.mxu0 0.0
        %2276 = vmatprep.subr.mxu0 0.0
        %2277 = vmatpush1.msra.mxu0 0.0
        %2278 = vmatprep.subr.mxu0 0.0
        %2279 = vmatpush1.msra.mxu0 0.0
        %2280 = vmatprep.subr.mxu0 0.0
        %2281 = vmatpush1.msra.mxu0 0.0
        %2282 = vmatprep.subr.mxu0 0.0
        %2283 = vmatpush1.msra.mxu0 %v2249
        %2284 = vmatprep.subr.mxu0 0.0
        %2285 = vmatpush1.msra.mxu0 %v2248
        %2286 = vmatprep.subr.mxu0 0.0
        %2287 = vmatpush1.msra.mxu0 %v2247
        %2288 = vmatprep.subr.mxu0 0.0
        %2289 = vmatpush1.msra.mxu0 %v2246
        %2290 = vmatprep.subr.mxu0 0.0
        %2291 = vmatpush2.msra.mxu0 0.0
        %2292 = vmatprep.subr.mxu0 0.0
        %2293 = vmatpush2.msra.mxu0 0.0
        %2294 = vmatprep.subr.mxu0 0.0
        %2295 = vmatpush2.msra.mxu0 0.0
        %2296 = vmatprep.subr.mxu0 0.0
        %2297 = vmatpush2.msra.mxu0 0.0
        %2298 = vmatprep.subr.mxu0 0.0
        %2299 = vmatpush2.msra.mxu0 0.0
        %2300 = vmatprep.subr.mxu0 0.0
        %2301 = vmatpush2.msra.mxu0 0.0
        %2302 = vmatprep.subr.mxu0 0.0
        %2303 = vmatpush2.msra.mxu0 0.0
        %2304 = vmatprep.subr.mxu0 0.0
        %2305 = vmatpush2.msra.mxu0 0.0
        %2306 = vmatprep.subr.mxu0 0.0
        %2307 = vmatpush2.msra.mxu0 0.0
        %2308 = vmatprep.subr.mxu0 0.0
        %2309 = vmatpush2.msra.mxu0 0.0
        %2310 = vmatprep.subr.mxu0 0.0
        %2311 = vmatpush2.msra.mxu0 0.0
        %2312 = vmatprep.subr.mxu0 0.0
        %2313 = vmatpush2.msra.mxu0 0.0
        %2314 = vmatprep.subr.mxu0 0.0
        %2315 = vmatpush2.msra.mxu0 0.0
        %2316 = vmatprep.subr.mxu0 0.0
        %2317 = vmatpush2.msra.mxu0 0.0
        %2318 = vmatprep.subr.mxu0 0.0
        %2319 = vmatpush2.msra.mxu0 0.0
        %2320 = vmatprep.subr.mxu0 0.0
        %2321 = vmatpush2.msra.mxu0 0.0
        %2322 = vmatprep.mubr.f32.mxu0 0.0
        %2323 = vmatmul.mubr.f32.gmra.mxu0 %v1844
        %v2324 = vpop.f32.mrf.mxu0
        %v2325 = vadd.f32 %v2256, %v2324
        %v2326 = vpop.f32.mrf.mxu0
        %2327 = vdwg.mxu0
        %s2328 = scalar_lea.vmem %s6, 96
        %v2329 = vld [vmem:[%s2328] sm:$0xff]
        %v2330 = vld [vmem:[%s2328 + $0x8] sm:$0xff]
        %v2331 = vld [vmem:[%s2328 + $0x10] sm:$0xff]
        %v2332 = vld [vmem:[%s2328 + $0x18] sm:$0xff]
        %s2333 = scalar_lea.vmem %s7, 3
        %v2334 = vld [vmem:[%s2333] sm:$0x1]
        %v2336 = vlaneseq
        %v2337 = vshrl.u32 %v2336, 7
        %v2338 = vsub.s32 0, %v2337
        %v2339 = vrot.slane %v2334, %v2338
        %2341 = vmatprep.subr.mxu0 0.0
        %2342 = vmatpush1.msra.mxu0 0.0
        %2343 = vmatprep.subr.mxu0 0.0
        %2344 = vmatpush1.msra.mxu0 0.0
        %2345 = vmatprep.subr.mxu0 0.0
        %2346 = vmatpush1.msra.mxu0 0.0
        %2347 = vmatprep.subr.mxu0 0.0
        %2348 = vmatpush1.msra.mxu0 0.0
        %2349 = vmatprep.subr.mxu0 0.0
        %2350 = vmatpush1.msra.mxu0 0.0
        %2351 = vmatprep.subr.mxu0 0.0
        %2352 = vmatpush1.msra.mxu0 0.0
        %2353 = vmatprep.subr.mxu0 0.0
        %2354 = vmatpush1.msra.mxu0 0.0
        %2355 = vmatprep.subr.mxu0 0.0
        %2356 = vmatpush1.msra.mxu0 0.0
        %2357 = vmatprep.subr.mxu0 0.0
        %2358 = vmatpush1.msra.mxu0 0.0
        %2359 = vmatprep.subr.mxu0 0.0
        %2360 = vmatpush1.msra.mxu0 0.0
        %2361 = vmatprep.subr.mxu0 0.0
        %2362 = vmatpush1.msra.mxu0 0.0
        %2363 = vmatprep.subr.mxu0 0.0
        %2364 = vmatpush1.msra.mxu0 0.0
        %2365 = vmatprep.subr.mxu0 0.0
        %2366 = vmatpush1.msra.mxu0 %v2332
        %2367 = vmatprep.subr.mxu0 0.0
        %2368 = vmatpush1.msra.mxu0 %v2331
        %2369 = vmatprep.subr.mxu0 0.0
        %2370 = vmatpush1.msra.mxu0 %v2330
        %2371 = vmatprep.subr.mxu0 0.0
        %2372 = vmatpush1.msra.mxu0 %v2329
        %2373 = vmatprep.subr.mxu0 0.0
        %2374 = vmatpush2.msra.mxu0 0.0
        %2375 = vmatprep.subr.mxu0 0.0
        %2376 = vmatpush2.msra.mxu0 0.0
        %2377 = vmatprep.subr.mxu0 0.0
        %2378 = vmatpush2.msra.mxu0 0.0
        %2379 = vmatprep.subr.mxu0 0.0
        %2380 = vmatpush2.msra.mxu0 0.0
        %2381 = vmatprep.subr.mxu0 0.0
        %2382 = vmatpush2.msra.mxu0 0.0
        %2383 = vmatprep.subr.mxu0 0.0
        %2384 = vmatpush2.msra.mxu0 0.0
        %2385 = vmatprep.subr.mxu0 0.0
        %2386 = vmatpush2.msra.mxu0 0.0
        %2387 = vmatprep.subr.mxu0 0.0
        %2388 = vmatpush2.msra.mxu0 0.0
        %2389 = vmatprep.subr.mxu0 0.0
        %2390 = vmatpush2.msra.mxu0 0.0
        %2391 = vmatprep.subr.mxu0 0.0
        %2392 = vmatpush2.msra.mxu0 0.0
        %2393 = vmatprep.subr.mxu0 0.0
        %2394 = vmatpush2.msra.mxu0 0.0
        %2395 = vmatprep.subr.mxu0 0.0
        %2396 = vmatpush2.msra.mxu0 0.0
        %2397 = vmatprep.subr.mxu0 0.0
        %2398 = vmatpush2.msra.mxu0 0.0
        %2399 = vmatprep.subr.mxu0 0.0
        %2400 = vmatpush2.msra.mxu0 0.0
        %2401 = vmatprep.subr.mxu0 0.0
        %2402 = vmatpush2.msra.mxu0 0.0
        %2403 = vmatprep.subr.mxu0 0.0
        %2404 = vmatpush2.msra.mxu0 0.0
        %2405 = vmatprep.mubr.f32.mxu0 0.0
        %2406 = vmatmul.mubr.f32.gmra.mxu0 %v1844
        %v2407 = vpop.f32.mrf.mxu0
        %v2408 = vadd.f32 %v2339, %v2407
        %v2409 = vpop.f32.mrf.mxu0
        %2410 = vdwg.mxu0
        %s2411 = scalar_lea.vmem %s8, 96
        %v2412 = vld [vmem:[%s2411] sm:$0xff]
        %v2413 = vld [vmem:[%s2411 + $0x8] sm:$0xff]
        %v2414 = vld [vmem:[%s2411 + $0x10] sm:$0xff]
        %v2415 = vld [vmem:[%s2411 + $0x18] sm:$0xff]
        %s2416 = scalar_lea.vmem %s9, 3
        %v2417 = vld [vmem:[%s2416] sm:$0x1]
        %v2419 = vlaneseq
        %v2420 = vshrl.u32 %v2419, 7
        %v2421 = vsub.s32 0, %v2420
        %v2422 = vrot.slane %v2417, %v2421
        %2424 = vmatprep.subr.mxu0 0.0
        %2425 = vmatpush1.msra.mxu0 0.0
        %2426 = vmatprep.subr.mxu0 0.0
        %2427 = vmatpush1.msra.mxu0 0.0
        %2428 = vmatprep.subr.mxu0 0.0
        %2429 = vmatpush1.msra.mxu0 0.0
        %2430 = vmatprep.subr.mxu0 0.0
        %2431 = vmatpush1.msra.mxu0 0.0
        %2432 = vmatprep.subr.mxu0 0.0
        %2433 = vmatpush1.msra.mxu0 0.0
        %2434 = vmatprep.subr.mxu0 0.0
        %2435 = vmatpush1.msra.mxu0 0.0
        %2436 = vmatprep.subr.mxu0 0.0
        %2437 = vmatpush1.msra.mxu0 0.0
        %2438 = vmatprep.subr.mxu0 0.0
        %2439 = vmatpush1.msra.mxu0 0.0
        %2440 = vmatprep.subr.mxu0 0.0
        %2441 = vmatpush1.msra.mxu0 0.0
        %2442 = vmatprep.subr.mxu0 0.0
        %2443 = vmatpush1.msra.mxu0 0.0
        %2444 = vmatprep.subr.mxu0 0.0
        %2445 = vmatpush1.msra.mxu0 0.0
        %2446 = vmatprep.subr.mxu0 0.0
        %2447 = vmatpush1.msra.mxu0 0.0
        %2448 = vmatprep.subr.mxu0 0.0
        %2449 = vmatpush1.msra.mxu0 %v2415
        %2450 = vmatprep.subr.mxu0 0.0
        %2451 = vmatpush1.msra.mxu0 %v2414
        %2452 = vmatprep.subr.mxu0 0.0
        %2453 = vmatpush1.msra.mxu0 %v2413
        %2454 = vmatprep.subr.mxu0 0.0
        %2455 = vmatpush1.msra.mxu0 %v2412
        %2456 = vmatprep.subr.mxu0 0.0
        %2457 = vmatpush2.msra.mxu0 0.0
        %2458 = vmatprep.subr.mxu0 0.0
        %2459 = vmatpush2.msra.mxu0 0.0
        %2460 = vmatprep.subr.mxu0 0.0
        %2461 = vmatpush2.msra.mxu0 0.0
        %2462 = vmatprep.subr.mxu0 0.0
        %2463 = vmatpush2.msra.mxu0 0.0
        %2464 = vmatprep.subr.mxu0 0.0
        %2465 = vmatpush2.msra.mxu0 0.0
        %2466 = vmatprep.subr.mxu0 0.0
        %2467 = vmatpush2.msra.mxu0 0.0
        %2468 = vmatprep.subr.mxu0 0.0
        %2469 = vmatpush2.msra.mxu0 0.0
        %2470 = vmatprep.subr.mxu0 0.0
        %2471 = vmatpush2.msra.mxu0 0.0
        %2472 = vmatprep.subr.mxu0 0.0
        %2473 = vmatpush2.msra.mxu0 0.0
        %2474 = vmatprep.subr.mxu0 0.0
        %2475 = vmatpush2.msra.mxu0 0.0
        %2476 = vmatprep.subr.mxu0 0.0
        %2477 = vmatpush2.msra.mxu0 0.0
        %2478 = vmatprep.subr.mxu0 0.0
        %2479 = vmatpush2.msra.mxu0 0.0
        %2480 = vmatprep.subr.mxu0 0.0
        %2481 = vmatpush2.msra.mxu0 0.0
        %2482 = vmatprep.subr.mxu0 0.0
        %2483 = vmatpush2.msra.mxu0 0.0
        %2484 = vmatprep.subr.mxu0 0.0
        %2485 = vmatpush2.msra.mxu0 0.0
        %2486 = vmatprep.subr.mxu0 0.0
        %2487 = vmatpush2.msra.mxu0 0.0
        %2488 = vmatprep.mubr.f32.mxu0 0.0
        %2489 = vmatmul.mubr.f32.gmra.mxu0 %v1844
        %v2490 = vpop.f32.mrf.mxu0
        %v2491 = vadd.f32 %v2422, %v2490
        %v2492 = vpop.f32.mrf.mxu0
        %2493 = vdwg.mxu0
        %v2495 = vsel %vm919, %v2325, 0
        %v2498 = vsel %vm919, %v2408, 0
        %2500 = vmatprep.subr.mxu0 0.0
        %2501 = vmatpush1.xpose.msra.mxu0 0.0
        %2502 = vmatprep.subr.mxu0 0.0
        %2503 = vmatpush1.xpose.msra.mxu0 0.0
        %2504 = vmatprep.subr.mxu0 0.0
        %2505 = vmatpush1.xpose.msra.mxu0 0.0
        %2506 = vmatprep.subr.mxu0 0.0
        %2507 = vmatpush1.xpose.msra.mxu0 0.0
        %2508 = vmatprep.subr.mxu0 0.0
        %2509 = vmatpush1.xpose.msra.mxu0 0.0
        %2510 = vmatprep.subr.mxu0 0.0
        %2511 = vmatpush1.xpose.msra.mxu0 0.0
        %2512 = vmatprep.subr.mxu0 0.0
        %2513 = vmatpush1.xpose.msra.mxu0 0.0
        %2514 = vmatprep.subr.mxu0 0.0
        %2515 = vmatpush1.xpose.msra.mxu0 0.0
        %2516 = vmatprep.subr.mxu0 0.0
        %2517 = vmatpush1.xpose.msra.mxu0 0.0
        %2518 = vmatprep.subr.mxu0 0.0
        %2519 = vmatpush1.xpose.msra.mxu0 0.0
        %2520 = vmatprep.subr.mxu0 0.0
        %2521 = vmatpush1.xpose.msra.mxu0 0.0
        %2522 = vmatprep.subr.mxu0 0.0
        %2523 = vmatpush1.xpose.msra.mxu0 0.0
        %2524 = vmatprep.subr.mxu0 0.0
        %2525 = vmatpush1.xpose.msra.mxu0 0.0
        %2526 = vmatprep.subr.mxu0 0.0
        %2527 = vmatpush1.xpose.msra.mxu0 0.0
        %2528 = vmatprep.subr.mxu0 0.0
        %2529 = vmatpush1.xpose.msra.mxu0 0.0
        %2530 = vmatprep.subr.mxu0 0.0
        %2531 = vmatpush1.xpose.msra.mxu0 %v2498
        %2532 = vmatprep.subr.mxu0 0.0
        %2533 = vmatpush2.xpose.msra.mxu0 0.0
        %2534 = vmatprep.subr.mxu0 0.0
        %2535 = vmatpush2.xpose.msra.mxu0 0.0
        %2536 = vmatprep.subr.mxu0 0.0
        %2537 = vmatpush2.xpose.msra.mxu0 0.0
        %2538 = vmatprep.subr.mxu0 0.0
        %2539 = vmatpush2.xpose.msra.mxu0 0.0
        %2540 = vmatprep.subr.mxu0 0.0
        %2541 = vmatpush2.xpose.msra.mxu0 0.0
        %2542 = vmatprep.subr.mxu0 0.0
        %2543 = vmatpush2.xpose.msra.mxu0 0.0
        %2544 = vmatprep.subr.mxu0 0.0
        %2545 = vmatpush2.xpose.msra.mxu0 0.0
        %2546 = vmatprep.subr.mxu0 0.0
        %2547 = vmatpush2.xpose.msra.mxu0 0.0
        %2548 = vmatprep.subr.mxu0 0.0
        %2549 = vmatpush2.xpose.msra.mxu0 0.0
        %2550 = vmatprep.subr.mxu0 0.0
        %2551 = vmatpush2.xpose.msra.mxu0 0.0
        %2552 = vmatprep.subr.mxu0 0.0
        %2553 = vmatpush2.xpose.msra.mxu0 0.0
        %2554 = vmatprep.subr.mxu0 0.0
        %2555 = vmatpush2.xpose.msra.mxu0 0.0
        %2556 = vmatprep.subr.mxu0 0.0
        %2557 = vmatpush2.xpose.msra.mxu0 0.0
        %2558 = vmatprep.subr.mxu0 0.0
        %2559 = vmatpush2.xpose.msra.mxu0 0.0
        %2560 = vmatprep.subr.mxu0 0.0
        %2561 = vmatpush2.xpose.msra.mxu0 0.0
        %2562 = vmatprep.subr.mxu0 0.0
        %2563 = vmatpush2.xpose.msra.mxu0 0.0
        %2564 = vmatprep.mubr.f32.mxu0 0.0
        %2565 = vmatmul.mubr.f32.gmra.mxu0 %v2495
        %v2566 = vpop.f32.mrf.mxu0
        %v2567 = vadd.f32 0.0, %v2566
        %v2568 = vpop.f32.mrf.mxu0
        %2569 = vdwg.mxu0
        %v2570 = vmul.f32 %v2567, 0.25
        %v2571 = vadd.f32 %v2570, %v1001
        %v2572 = vsel %vm1004, %v2571, -inf
        %2573 = vmax.xlane.f32.xlu0 %v2572
        %v2574 = vpop.xlane.xlu0 %2573
        %v2575 = vsub.f32 %v2571, %v2574
        %v2576 = vmul.f32 %v2575, 1.442695
        %v2577 = vpow.pop %v2576
        %v2578 = vsel %vm1004, %v2577, 0.0
        %2579 = vadd.xlane.f32.xlu0 %v2578
        %v2580 = vpop.xlane.xlu0 %2579
        %v2581 = vrcp.pop %v2580
        %v2582 = vmul.f32 %v2577, %v2581
        %v2584 = vsel %vm1004, %v2582, 0
        %2586 = vmatprep.subr.mxu0 0.0
        %2587 = vmatpush1.msra.mxu0 0.0
        %2588 = vmatprep.subr.mxu0 0.0
        %2589 = vmatpush1.msra.mxu0 0.0
        %2590 = vmatprep.subr.mxu0 0.0
        %2591 = vmatpush1.msra.mxu0 0.0
        %2592 = vmatprep.subr.mxu0 0.0
        %2593 = vmatpush1.msra.mxu0 0.0
        %2594 = vmatprep.subr.mxu0 0.0
        %2595 = vmatpush1.msra.mxu0 0.0
        %2596 = vmatprep.subr.mxu0 0.0
        %2597 = vmatpush1.msra.mxu0 0.0
        %2598 = vmatprep.subr.mxu0 0.0
        %2599 = vmatpush1.msra.mxu0 0.0
        %2600 = vmatprep.subr.mxu0 0.0
        %2601 = vmatpush1.msra.mxu0 0.0
        %2602 = vmatprep.subr.mxu0 0.0
        %2603 = vmatpush1.msra.mxu0 0.0
        %2604 = vmatprep.subr.mxu0 0.0
        %2605 = vmatpush1.msra.mxu0 0.0
        %2606 = vmatprep.subr.mxu0 0.0
        %2607 = vmatpush1.msra.mxu0 0.0
        %2608 = vmatprep.subr.mxu0 0.0
        %2609 = vmatpush1.msra.mxu0 0.0
        %2610 = vmatprep.subr.mxu0 0.0
        %2611 = vmatpush1.msra.mxu0 0.0
        %2612 = vmatprep.subr.mxu0 0.0
        %2613 = vmatpush1.msra.mxu0 0.0
        %2614 = vmatprep.subr.mxu0 0.0
        %2615 = vmatpush1.msra.mxu0 0.0
        %2616 = vmatprep.subr.mxu0 0.0
        %2617 = vmatpush1.msra.mxu0 %v2491
        %2618 = vmatprep.subr.mxu0 0.0
        %2619 = vmatpush2.msra.mxu0 0.0
        %2620 = vmatprep.subr.mxu0 0.0
        %2621 = vmatpush2.msra.mxu0 0.0
        %2622 = vmatprep.subr.mxu0 0.0
        %2623 = vmatpush2.msra.mxu0 0.0
        %2624 = vmatprep.subr.mxu0 0.0
        %2625 = vmatpush2.msra.mxu0 0.0
        %2626 = vmatprep.subr.mxu0 0.0
        %2627 = vmatpush2.msra.mxu0 0.0
        %2628 = vmatprep.subr.mxu0 0.0
        %2629 = vmatpush2.msra.mxu0 0.0
        %2630 = vmatprep.subr.mxu0 0.0
        %2631 = vmatpush2.msra.mxu0 0.0
        %2632 = vmatprep.subr.mxu0 0.0
        %2633 = vmatpush2.msra.mxu0 0.0
        %2634 = vmatprep.subr.mxu0 0.0
        %2635 = vmatpush2.msra.mxu0 0.0
        %2636 = vmatprep.subr.mxu0 0.0
        %2637 = vmatpush2.msra.mxu0 0.0
        %2638 = vmatprep.subr.mxu0 0.0
        %2639 = vmatpush2.msra.mxu0 0.0
        %2640 = vmatprep.subr.mxu0 0.0
        %2641 = vmatpush2.msra.mxu0 0.0
        %2642 = vmatprep.subr.mxu0 0.0
        %2643 = vmatpush2.msra.mxu0 0.0
        %2644 = vmatprep.subr.mxu0 0.0
        %2645 = vmatpush2.msra.mxu0 0.0
        %2646 = vmatprep.subr.mxu0 0.0
        %2647 = vmatpush2.msra.mxu0 0.0
        %2648 = vmatprep.subr.mxu0 0.0
        %2649 = vmatpush2.msra.mxu0 0.0
        %2650 = vmatprep.mubr.f32.mxu0 0.0
        %2651 = vmatmul.mubr.f32.gmra.mxu0 %v2584
        %v2652 = vpop.f32.mrf.mxu0
        %v2653 = vadd.f32 0.0, %v2652
        %v2654 = vpop.f32.mrf.mxu0
        %2655 = vdwg.mxu0
        %2657 = vrot.lane.b32.xlu0 %v2653, 16
        %v2658 = vpop.permute.xlu0 %2657
        %2660 = vst.msk [vmem:[#allocation2] sm:$0xff] %vm1505, %v2658
        %v2661 = vld [vmem:[#allocation2] sm:$0xff]
        %s2662 = scalar_lea.vmem %s10, 32
        %v2663 = vld [vmem:[%s2662] sm:$0xff]
        %v2664 = vld [vmem:[%s2662 + $0x8] sm:$0xff]
        %v2665 = vld [vmem:[%s2662 + $0x10] sm:$0xff]
        %v2666 = vld [vmem:[%s2662 + $0x18] sm:$0xff]
        %s2667 = scalar_lea.vmem %s11, 1
        %v2668 = vld [vmem:[%s2667] sm:$0x1]
        %v2670 = vlaneseq
        %v2671 = vshrl.u32 %v2670, 7
        %v2672 = vsub.s32 0, %v2671
        %v2673 = vrot.slane %v2668, %v2672
        %v2676 = vsel %vm644, %v2661, 0
        %2678 = vmatprep.subr.mxu0 0.0
        %2679 = vmatpush1.msra.mxu0 0.0
        %2680 = vmatprep.subr.mxu0 0.0
        %2681 = vmatpush1.msra.mxu0 0.0
        %2682 = vmatprep.subr.mxu0 0.0
        %2683 = vmatpush1.msra.mxu0 0.0
        %2684 = vmatprep.subr.mxu0 0.0
        %2685 = vmatpush1.msra.mxu0 0.0
        %2686 = vmatprep.subr.mxu0 0.0
        %2687 = vmatpush1.msra.mxu0 0.0
        %2688 = vmatprep.subr.mxu0 0.0
        %2689 = vmatpush1.msra.mxu0 0.0
        %2690 = vmatprep.subr.mxu0 0.0
        %2691 = vmatpush1.msra.mxu0 0.0
        %2692 = vmatprep.subr.mxu0 0.0
        %2693 = vmatpush1.msra.mxu0 0.0
        %2694 = vmatprep.subr.mxu0 0.0
        %2695 = vmatpush1.msra.mxu0 0.0
        %2696 = vmatprep.subr.mxu0 0.0
        %2697 = vmatpush1.msra.mxu0 0.0
        %2698 = vmatprep.subr.mxu0 0.0
        %2699 = vmatpush1.msra.mxu0 0.0
        %2700 = vmatprep.subr.mxu0 0.0
        %2701 = vmatpush1.msra.mxu0 0.0
        %2702 = vmatprep.subr.mxu0 0.0
        %2703 = vmatpush1.msra.mxu0 %v2666
        %2704 = vmatprep.subr.mxu0 0.0
        %2705 = vmatpush1.msra.mxu0 %v2665
        %2706 = vmatprep.subr.mxu0 0.0
        %2707 = vmatpush1.msra.mxu0 %v2664
        %2708 = vmatprep.subr.mxu0 0.0
        %2709 = vmatpush1.msra.mxu0 %v2663
        %2710 = vmatprep.subr.mxu0 0.0
        %2711 = vmatpush2.msra.mxu0 0.0
        %2712 = vmatprep.subr.mxu0 0.0
        %2713 = vmatpush2.msra.mxu0 0.0
        %2714 = vmatprep.subr.mxu0 0.0
        %2715 = vmatpush2.msra.mxu0 0.0
        %2716 = vmatprep.subr.mxu0 0.0
        %2717 = vmatpush2.msra.mxu0 0.0
        %2718 = vmatprep.subr.mxu0 0.0
        %2719 = vmatpush2.msra.mxu0 0.0
        %2720 = vmatprep.subr.mxu0 0.0
        %2721 = vmatpush2.msra.mxu0 0.0
        %2722 = vmatprep.subr.mxu0 0.0
        %2723 = vmatpush2.msra.mxu0 0.0
        %2724 = vmatprep.subr.mxu0 0.0
        %2725 = vmatpush2.msra.mxu0 0.0
        %2726 = vmatprep.subr.mxu0 0.0
        %2727 = vmatpush2.msra.mxu0 0.0
        %2728 = vmatprep.subr.mxu0 0.0
        %2729 = vmatpush2.msra.mxu0 0.0
        %2730 = vmatprep.subr.mxu0 0.0
        %2731 = vmatpush2.msra.mxu0 0.0
        %2732 = vmatprep.subr.mxu0 0.0
        %2733 = vmatpush2.msra.mxu0 0.0
        %2734 = vmatprep.subr.mxu0 0.0
        %2735 = vmatpush2.msra.mxu0 0.0
        %2736 = vmatprep.subr.mxu0 0.0
        %2737 = vmatpush2.msra.mxu0 0.0
        %2738 = vmatprep.subr.mxu0 0.0
        %2739 = vmatpush2.msra.mxu0 0.0
        %2740 = vmatprep.subr.mxu0 0.0
        %2741 = vmatpush2.msra.mxu0 0.0
        %2742 = vmatprep.mubr.f32.mxu0 0.0
        %2743 = vmatmul.mubr.f32.gmra.mxu0 %v2676
        %v2744 = vpop.f32.mrf.mxu0
        %v2745 = vadd.f32 %v2673, %v2744
        %v2746 = vpop.f32.mrf.mxu0
        %2747 = vdwg.mxu0
        %v2748 = vadd.f32 %v2745, %v1829
        %s2749 = scalar_lea.vmem %s12, 1
        %v2750 = vld [vmem:[%s2749] sm:$0x1]
        %s2751 = scalar_lea.vmem %s13, 1
        %v2752 = vld [vmem:[%s2751] sm:$0x1]
        %v2753 = vsel %vm644, %v2748, 0.0
        %2754 = vadd.xlane.f32.xlu0 %v2753
        %v2755 = vpop.xlane.xlu0 %2754
        %v2756 = vmul.f32 %v2755, %v648
        %v2757 = vsub.f32 %v2748, %v2756
        %v2758 = vmul.f32 %v2757, %v2757
        %v2759 = vsel %vm644, %v2758, 0.0
        %2760 = vadd.xlane.f32.xlu0 %v2759
        %v2761 = vpop.xlane.xlu0 %2760
        %v2762 = vmul.f32 %v2761, %v648
        %v2763 = vadd.f32 %v2762, 1e-12
        %v2764 = vrsqrt.pop %v2763
        %v2765 = vmul.f32 %v2757, %v2764
        %v2767 = vlaneseq
        %v2768 = vshrl.u32 %v2767, 7
        %v2769 = vsub.s32 0, %v2768
        %v2770 = vrot.slane %v2750, %v2769
        %v2772 = vmul.f32 %v2765, %v2770
        %v2774 = vlaneseq
        %v2775 = vshrl.u32 %v2774, 7
        %v2776 = vsub.s32 0, %v2775
        %v2777 = vrot.slane %v2752, %v2776
        %v2779 = vadd.f32 %v2772, %v2777
        %s2780 = scalar_lea.vmem %s14, 32
        %v2781 = vld [vmem:[%s2780] sm:$0xff]
        %v2782 = vld [vmem:[%s2780 + $0x8] sm:$0xff]
        %v2783 = vld [vmem:[%s2780 + $0x10] sm:$0xff]
        %v2784 = vld [vmem:[%s2780 + $0x18] sm:$0xff]
        %s2785 = scalar_lea.vmem %s15, 1
        %v2786 = vld [vmem:[%s2785] sm:$0x1]
        %v2788 = vlaneseq
        %v2789 = vshrl.u32 %v2788, 7
        %v2790 = vsub.s32 0, %v2789
        %v2791 = vrot.slane %v2786, %v2790
        %v2794 = vsel %vm644, %v2779, 0
        %2796 = vmatprep.subr.mxu0 0.0
        %2797 = vmatpush1.msra.mxu0 0.0
        %2798 = vmatprep.subr.mxu0 0.0
        %2799 = vmatpush1.msra.mxu0 0.0
        %2800 = vmatprep.subr.mxu0 0.0
        %2801 = vmatpush1.msra.mxu0 0.0
        %2802 = vmatprep.subr.mxu0 0.0
        %2803 = vmatpush1.msra.mxu0 0.0
        %2804 = vmatprep.subr.mxu0 0.0
        %2805 = vmatpush1.msra.mxu0 0.0
        %2806 = vmatprep.subr.mxu0 0.0
        %2807 = vmatpush1.msra.mxu0 0.0
        %2808 = vmatprep.subr.mxu0 0.0
        %2809 = vmatpush1.msra.mxu0 0.0
        %2810 = vmatprep.subr.mxu0 0.0
        %2811 = vmatpush1.msra.mxu0 0.0
        %2812 = vmatprep.subr.mxu0 0.0
        %2813 = vmatpush1.msra.mxu0 0.0
        %2814 = vmatprep.subr.mxu0 0.0
        %2815 = vmatpush1.msra.mxu0 0.0
        %2816 = vmatprep.subr.mxu0 0.0
        %2817 = vmatpush1.msra.mxu0 0.0
        %2818 = vmatprep.subr.mxu0 0.0
        %2819 = vmatpush1.msra.mxu0 0.0
        %2820 = vmatprep.subr.mxu0 0.0
        %2821 = vmatpush1.msra.mxu0 %v2784
        %2822 = vmatprep.subr.mxu0 0.0
        %2823 = vmatpush1.msra.mxu0 %v2783
        %2824 = vmatprep.subr.mxu0 0.0
        %2825 = vmatpush1.msra.mxu0 %v2782
        %2826 = vmatprep.subr.mxu0 0.0
        %2827 = vmatpush1.msra.mxu0 %v2781
        %2828 = vmatprep.subr.mxu0 0.0
        %2829 = vmatpush2.msra.mxu0 0.0
        %2830 = vmatprep.subr.mxu0 0.0
        %2831 = vmatpush2.msra.mxu0 0.0
        %2832 = vmatprep.subr.mxu0 0.0
        %2833 = vmatpush2.msra.mxu0 0.0
        %2834 = vmatprep.subr.mxu0 0.0
        %2835 = vmatpush2.msra.mxu0 0.0
        %2836 = vmatprep.subr.mxu0 0.0
        %2837 = vmatpush2.msra.mxu0 0.0
        %2838 = vmatprep.subr.mxu0 0.0
        %2839 = vmatpush2.msra.mxu0 0.0
        %2840 = vmatprep.subr.mxu0 0.0
        %2841 = vmatpush2.msra.mxu0 0.0
        %2842 = vmatprep.subr.mxu0 0.0
        %2843 = vmatpush2.msra.mxu0 0.0
        %2844 = vmatprep.subr.mxu0 0.0
        %2845 = vmatpush2.msra.mxu0 0.0
        %2846 = vmatprep.subr.mxu0 0.0
        %2847 = vmatpush2.msra.mxu0 0.0
        %2848 = vmatprep.subr.mxu0 0.0
        %2849 = vmatpush2.msra.mxu0 0.0
        %2850 = vmatprep.subr.mxu0 0.0
        %2851 = vmatpush2.msra.mxu0 0.0
        %2852 = vmatprep.subr.mxu0 0.0
        %2853 = vmatpush2.msra.mxu0 0.0
        %2854 = vmatprep.subr.mxu0 0.0
        %2855 = vmatpush2.msra.mxu0 0.0
        %2856 = vmatprep.subr.mxu0 0.0
        %2857 = vmatpush2.msra.mxu0 0.0
        %2858 = vmatprep.subr.mxu0 0.0
        %2859 = vmatpush2.msra.mxu0 0.0
        %2860 = vmatprep.mubr.f32.mxu0 0.0
        %2861 = vmatmul.mubr.f32.gmra.mxu0 %v2794
        %v2862 = vpop.f32.mrf.mxu0
        %v2863 = vadd.f32 %v2791, %v2862
        %v2864 = vpop.f32.mrf.mxu0
        %2865 = vdwg.mxu0
        %v2866 = vmul.f32 %v2863, 0.5
        %v2867 = vmul.f32 %v2863, 0.70710677
        %v2868 = verf.f32.pop %v2867
        %v2869 = vadd.f32 %v2868, 1.0
        %v2870 = vmul.f32 %v2866, %v2869
        %s2871 = scalar_lea.vmem %s16, 64
        %v2872 = vld [vmem:[%s2871] sm:$0xff]
        %v2873 = vld [vmem:[%s2871 + $0x8] sm:$0xff]
        %v2874 = vld [vmem:[%s2871 + $0x10] sm:$0xff]
        %v2875 = vld [vmem:[%s2871 + $0x18] sm:$0xff]
        %v2876 = vld [vmem:[%s2871 + $0x20] sm:$0xff]
        %v2877 = vld [vmem:[%s2871 + $0x28] sm:$0xff]
        %v2878 = vld [vmem:[%s2871 + $0x30] sm:$0xff]
        %v2879 = vld [vmem:[%s2871 + $0x38] sm:$0xff]
        %s2880 = scalar_lea.vmem %s17, 1
        %v2881 = vld [vmem:[%s2880] sm:$0x1]
        %v2883 = vlaneseq
        %v2884 = vshrl.u32 %v2883, 7
        %v2885 = vsub.s32 0, %v2884
        %v2886 = vrot.slane %v2881, %v2885
        %v2889 = vsel %vm1726, %v2870, 0
        %2891 = vmatprep.subr.mxu0 0.0
        %2892 = vmatpush1.msra.mxu0 0.0
        %2893 = vmatprep.subr.mxu0 0.0
        %2894 = vmatpush1.msra.mxu0 0.0
        %2895 = vmatprep.subr.mxu0 0.0
        %2896 = vmatpush1.msra.mxu0 0.0
        %2897 = vmatprep.subr.mxu0 0.0
        %2898 = vmatpush1.msra.mxu0 0.0
        %2899 = vmatprep.subr.mxu0 0.0
        %2900 = vmatpush1.msra.mxu0 0.0
        %2901 = vmatprep.subr.mxu0 0.0
        %2902 = vmatpush1.msra.mxu0 0.0
        %2903 = vmatprep.subr.mxu0 0.0
        %2904 = vmatpush1.msra.mxu0 0.0
        %2905 = vmatprep.subr.mxu0 0.0
        %2906 = vmatpush1.msra.mxu0 0.0
        %2907 = vmatprep.subr.mxu0 0.0
        %2908 = vmatpush1.msra.mxu0 %v2879
        %2909 = vmatprep.subr.mxu0 0.0
        %2910 = vmatpush1.msra.mxu0 %v2878
        %2911 = vmatprep.subr.mxu0 0.0
        %2912 = vmatpush1.msra.mxu0 %v2877
        %2913 = vmatprep.subr.mxu0 0.0
        %2914 = vmatpush1.msra.mxu0 %v2876
        %2915 = vmatprep.subr.mxu0 0.0
        %2916 = vmatpush1.msra.mxu0 %v2875
        %2917 = vmatprep.subr.mxu0 0.0
        %2918 = vmatpush1.msra.mxu0 %v2874
        %2919 = vmatprep.subr.mxu0 0.0
        %2920 = vmatpush1.msra.mxu0 %v2873
        %2921 = vmatprep.subr.mxu0 0.0
        %2922 = vmatpush1.msra.mxu0 %v2872
        %2923 = vmatprep.subr.mxu0 0.0
        %2924 = vmatpush2.msra.mxu0 0.0
        %2925 = vmatprep.subr.mxu0 0.0
        %2926 = vmatpush2.msra.mxu0 0.0
        %2927 = vmatprep.subr.mxu0 0.0
        %2928 = vmatpush2.msra.mxu0 0.0
        %2929 = vmatprep.subr.mxu0 0.0
        %2930 = vmatpush2.msra.mxu0 0.0
        %2931 = vmatprep.subr.mxu0 0.0
        %2932 = vmatpush2.msra.mxu0 0.0
        %2933 = vmatprep.subr.mxu0 0.0
        %2934 = vmatpush2.msra.mxu0 0.0
        %2935 = vmatprep.subr.mxu0 0.0
        %2936 = vmatpush2.msra.mxu0 0.0
        %2937 = vmatprep.subr.mxu0 0.0
        %2938 = vmatpush2.msra.mxu0 0.0
        %2939 = vmatprep.subr.mxu0 0.0
        %2940 = vmatpush2.msra.mxu0 0.0
        %2941 = vmatprep.subr.mxu0 0.0
        %2942 = vmatpush2.msra.mxu0 0.0
        %2943 = vmatprep.subr.mxu0 0.0
        %2944 = vmatpush2.msra.mxu0 0.0
        %2945 = vmatprep.subr.mxu0 0.0
        %2946 = vmatpush2.msra.mxu0 0.0
        %2947 = vmatprep.subr.mxu0 0.0
        %2948 = vmatpush2.msra.mxu0 0.0
        %2949 = vmatprep.subr.mxu0 0.0
        %2950 = vmatpush2.msra.mxu0 0.0
        %2951 = vmatprep.subr.mxu0 0.0
        %2952 = vmatpush2.msra.mxu0 0.0
        %2953 = vmatprep.subr.mxu0 0.0
        %2954 = vmatpush2.msra.mxu0 0.0
        %2955 = vmatprep.mubr.f32.mxu0 0.0
        %2956 = vmatmul.mubr.f32.gmra.mxu0 %v2889
        %v2957 = vpop.f32.mrf.mxu0
        %v2958 = vadd.f32 %v2886, %v2957
        %v2959 = vpop.f32.mrf.mxu0
        %2960 = vdwg.mxu0
        %v2961 = vadd.f32 %v2958, %v2779
        %s2962 = scalar_lea.vmem %s18, 1
        %v2963 = vld [vmem:[%s2962] sm:$0x1]
        %s2964 = scalar_lea.vmem %s19, 1
        %v2965 = vld [vmem:[%s2964] sm:$0x1]
        %v2966 = vsel %vm644, %v2961, 0.0
        %2967 = vadd.xlane.f32.xlu0 %v2966
        %v2968 = vpop.xlane.xlu0 %2967
        %v2969 = vmul.f32 %v2968, %v648
        %v2970 = vsub.f32 %v2961, %v2969
        %v2971 = vmul.f32 %v2970, %v2970
        %v2972 = vsel %vm644, %v2971, 0.0
        %2973 = vadd.xlane.f32.xlu0 %v2972
        %v2974 = vpop.xlane.xlu0 %2973
        %v2975 = vmul.f32 %v2974, %v648
        %v2976 = vadd.f32 %v2975, 1e-12
        %v2977 = vrsqrt.pop %v2976
        %v2978 = vmul.f32 %v2970, %v2977
        %v2980 = vlaneseq
        %v2981 = vshrl.u32 %v2980, 7
        %v2982 = vsub.s32 0, %v2981
        %v2983 = vrot.slane %v2963, %v2982
        %v2985 = vmul.f32 %v2978, %v2983
        %v2987 = vlaneseq
        %v2988 = vshrl.u32 %v2987, 7
        %v2989 = vsub.s32 0, %v2988
        %v2990 = vrot.slane %v2965, %v2989
        %v2992 = vadd.f32 %v2985, %v2990
        %v2994 = vsel %vm1004, %v638, 0
        %2996 = vmatprep.subr.mxu0 0.0
        %2997 = vmatpush1.msra.mxu0 0.0
        %2998 = vmatprep.subr.mxu0 0.0
        %2999 = vmatpush1.msra.mxu0 0.0
        %3000 = vmatprep.subr.mxu0 0.0
        %3001 = vmatpush1.msra.mxu0 0.0
        %3002 = vmatprep.subr.mxu0 0.0
        %3003 = vmatpush1.msra.mxu0 0.0
        %3004 = vmatprep.subr.mxu0 0.0
        %3005 = vmatpush1.msra.mxu0 0.0
        %3006 = vmatprep.subr.mxu0 0.0
        %3007 = vmatpush1.msra.mxu0 0.0
        %3008 = vmatprep.subr.mxu0 0.0
        %3009 = vmatpush1.msra.mxu0 0.0
        %3010 = vmatprep.subr.mxu0 0.0
        %3011 = vmatpush1.msra.mxu0 0.0
        %3012 = vmatprep.subr.mxu0 0.0
        %3013 = vmatpush1.msra.mxu0 0.0
        %3014 = vmatprep.subr.mxu0 0.0
        %3015 = vmatpush1.msra.mxu0 0.0
        %3016 = vmatprep.subr.mxu0 0.0
        %3017 = vmatpush1.msra.mxu0 0.0
        %3018 = vmatprep.subr.mxu0 0.0
        %3019 = vmatpush1.msra.mxu0 0.0
        %3020 = vmatprep.subr.mxu0 0.0
        %3021 = vmatpush1.msra.mxu0 0.0
        %3022 = vmatprep.subr.mxu0 0.0
        %3023 = vmatpush1.msra.mxu0 0.0
        %3024 = vmatprep.subr.mxu0 0.0
        %3025 = vmatpush1.msra.mxu0 0.0
        %3026 = vmatprep.subr.mxu0 0.0
        %3027 = vmatpush1.msra.mxu0 %v2992
        %3028 = vmatprep.subr.mxu0 0.0
        %3029 = vmatpush2.msra.mxu0 0.0
        %3030 = vmatprep.subr.mxu0 0.0
        %3031 = vmatpush2.msra.mxu0 0.0
        %3032 = vmatprep.subr.mxu0 0.0
        %3033 = vmatpush2.msra.mxu0 0.0
        %3034 = vmatprep.subr.mxu0 0.0
        %3035 = vmatpush2.msra.mxu0 0.0
        %3036 = vmatprep.subr.mxu0 0.0
        %3037 = vmatpush2.msra.mxu0 0.0
        %3038 = vmatprep.subr.mxu0 0.0
        %3039 = vmatpush2.msra.mxu0 0.0
        %3040 = vmatprep.subr.mxu0 0.0
        %3041 = vmatpush2.msra.mxu0 0.0
        %3042 = vmatprep.subr.mxu0 0.0
        %3043 = vmatpush2.msra.mxu0 0.0
        %3044 = vmatprep.subr.mxu0 0.0
        %3045 = vmatpush2.msra.mxu0 0.0
        %3046 = vmatprep.subr.mxu0 0.0
        %3047 = vmatpush2.msra.mxu0 0.0
        %3048 = vmatprep.subr.mxu0 0.0
        %3049 = vmatpush2.msra.mxu0 0.0
        %3050 = vmatprep.subr.mxu0 0.0
        %3051 = vmatpush2.msra.mxu0 0.0
        %3052 = vmatprep.subr.mxu0 0.0
        %3053 = vmatpush2.msra.mxu0 0.0
        %3054 = vmatprep.subr.mxu0 0.0
        %3055 = vmatpush2.msra.mxu0 0.0
        %3056 = vmatprep.subr.mxu0 0.0
        %3057 = vmatpush2.msra.mxu0 0.0
        %3058 = vmatprep.subr.mxu0 0.0
        %3059 = vmatpush2.msra.mxu0 0.0
        %3060 = vmatprep.mubr.f32.mxu0 0.0
        %3061 = vmatmul.mubr.f32.gmra.mxu0 %v2994
        %v3062 = vpop.f32.mrf.mxu0
        %v3063 = vadd.f32 0.0, %v3062
        %v3064 = vpop.f32.mrf.mxu0
        %3065 = vdwg.mxu0
        %vm3066 = vcmask 57344
        %v3067 = vsel %vm3066, %v638, 0.0
        %3068 = vadd.xlane.f32.xlu0 %v3067
        %v3069 = vpop.xlane.xlu0 %3068
        %v3070 = vmax.f32 %v3069, 1e-09
        %v3071 = vrcp.pop %v3070
        %v3072 = vmul.f32 %v3063, %v3071
        %v3073 = vmul.f32 %v3072, %v3072
        %vm3074 = vcmask 253952
        %v3075 = vsel %vm3074, %v3073, 0.0
        %3076 = vadd.xlane.f32.xlu0 %v3075
        %v3077 = vpop.xlane.xlu0 %3076
        %v3078 = vrsqrt.pop %v3077
        %v3079 = vmul.f32 %v3077, %v3078
        %vm3080 = vcmp.eq.f32.partialorder %v3077, inf
        %v3081 = vsel %vm3080, %v3077, %v3079
        %vm3082 = vcmp.eq.f32.partialorder %v3077, 0.0
        %v3083 = vand.u32 %v3077, 2147483648
        %v3084 = vsel %vm3082, %v3083, %v3081
        %v3085 = vmax.f32 %v3084, 1e-12
        %v3086 = vrcp.pop %v3085
        %v3087 = vmul.f32 %v3072, %v3086
        %3088 = vst.msk [vmem:[%s630] sm:$0x1] %vm3074, %v3087
        %s3089 = sand.u32 %s472, 1
        %s3090 = scalar_lea.sflag [#allocation4], %s3089
        %s3091 = sand.u32 %s472, 1
        %s3092 = scalar_lea.vmem [#allocation3], %s3091
        // Predicated region
        $region101: #{dense_retriever_bert_forward.1} parent=99 // pred_check
          %p3093 = pneg %p482
        $region102: #{dense_retriever_bert_forward.1} parent=99 // pred_check_branch
          %3095 = sbr.rel (%p3093) target = $region104
        $region103: #{dense_retriever_bert_forward.1} parent=99 // pred_region
          %s3097 = ssub.s32 16, 16
          %3098 = vsyncadd %s3090, %s3097
          %s3099 = smul.addr %s34, 16
          %s3100 = scalar_lea.hbm %s20, %s3099
          %s3102 = sshll.u32 %s3092, 4
          %s3103 = int_to_ptr.vmem [resolvable:$true] %s3102
          %3105 = dma.vmem_to_hbm [thread:$0]  %s3103, 16, %s3100, %s3090
        $region104: #{dense_retriever_bert_forward.1} parent=99 // pred_fallthru
          _
      $region100: #{dense_retriever_bert_forward.1} parent=5 // pred_fallthru
        _
      %p3106 = scmp.le.s32.totalorder 2, %s29
      // Predicated region
      $region105: #{dense_retriever_bert_forward.1} parent=5 // pred_check
        %p3107 = pneg %p3106
      $region106: #{dense_retriever_bert_forward.1} parent=5 // pred_check_branch
        %3109 = sbr.rel (%p3107) target = $region108
      $region107: #{dense_retriever_bert_forward.1} parent=5 // pred_region
        %s3110 = ssub.s32 %s29, 2
        // Predicated region
        $region109: #{dense_retriever_bert_forward.1} parent=107 // pred_check
          %p3111 = pneg %p488
        $region110: #{dense_retriever_bert_forward.1} parent=107 // pred_check_branch
          %3113 = sbr.rel (%p3111) target = $region112
        $region111: #{dense_retriever_bert_forward.1} parent=107 // pred_region
          %s3114 = sand.u32 %s473, 1
          %s3115 = scalar_lea.sflag [#allocation4], %s3114
          %s3116 = sand.u32 %s473, 1
          %s3117 = scalar_lea.vmem [#allocation3], %s3116
          %3118 = dma.done %s3115, 16
        $region112: #{dense_retriever_bert_forward.1} parent=107 // pred_fallthru
          _
      $region108: #{dense_retriever_bert_forward.1} parent=5 // pred_fallthru
        _
    $region6: #{dense_retriever_bert_forward.1} parent=1 // loop_footer
      %s33 = sadd.s32 1, %s29
    $region7: #{dense_retriever_bert_forward.1} parent=1 // loop_footer_branch
      %28 = sbr.rel target = $region3
    $region8: #{dense_retriever_bert_forward.1} parent=1 // loop_exit
      _
    %3119 = vsyncpa [#allocation4], 1
    %s3120 = scalar_lea.sflag [#allocation4], 1
    %3121 = vsyncpa %s3120, 1

</llo_original>
